<compile_context>
chip_gen: v6e
topology: v6e:2x2x1
jax: 0.10.0
libtpu: 0.0.40
codegen_flags: <defaults>
</compile_context>

<pallas_src>
import numpy as np
import jax
import jax.numpy as jnp
from jax.experimental import pallas as pl

# ----- config consistent with the module -----
LATENT_DIM = 8
N_CLASSES = 4
CODE_DIM = 2
PATCH_LEN = 16
NUM_CHANNELS = 3
BATCH = 2

INPUT_DIM = LATENT_DIM + N_CLASSES + CODE_DIM   # 14
INIT_LEN = PATCH_LEN // 4                       # 4
L1 = 2 * INIT_LEN                               # 8   (after first upsample)
L2 = 2 * L1                                     # 16  (after second upsample)
N1 = 128 * L1                                   # 1024 flat width after layer 1
N2 = 64 * L2                                    # 1024 flat width after layer 2
N3 = NUM_CHANNELS * L2                          # 48   flat output width
NB = max(N1, N2, N3)                            # packed-bias row width


def _upsample_matrix(length: int) -> np.ndarray:
    """U with x @ U == nn.Upsample(scale_factor=2, mode='linear',
    align_corners=False)(x) along the last axis of x (..., length)."""
    out_len = 2 * length
    U = np.zeros((length, out_len), dtype=np.float64)
    for j in range(out_len):
        src = (j + 0.5) * 0.5 - 0.5
        src = max(src, 0.0)
        i0 = int(np.floor(src))
        lam = src - i0
        i1 = min(i0 + 1, length - 1)
        U[i0, j] += 1.0 - lam
        U[i1, j] += lam
    return U


def _shift_matrices(length: int) -> np.ndarray:
    """S[k] with (x @ S[k])[:, l] == x[:, l + k - 1] (zero padding): the tap-k
    operand of a kernel-3, padding-1 Conv1d."""
    S = np.zeros((3, length, length), dtype=np.float64)
    for k in range(3):
        for l in range(length):
            j = l + k - 1
            if 0 <= j < length:
                S[k, j, l] = 1.0
    return S


# -------------------- single fused Pallas kernel --------------------

def _generator_kernel(x_ref, wa_ref, m2_ref, m3_ref, b_ref, o_ref):
    gi = x_ref[...]                                              # (B, 14)
    b = b_ref[...]                                               # (3, NB) bias rows

    # Linear + (Upsample + Conv1d(128->128) ) folded into one matmul.
    h1 = jnp.dot(gi, wa_ref[...], preferred_element_type=jnp.float32) + b[0:1, :N1]
    h1 = jnp.where(h1 > 0, h1, 0.2 * h1)                         # LeakyReLU(0.2)

    # Upsample + Conv1d(128->64) folded.
    h2 = jnp.dot(h1, m2_ref[...], preferred_element_type=jnp.float32) + b[1:2, :N2]
    h2 = jnp.where(h2 > 0, h2, 0.2 * h2)                         # LeakyReLU(0.2)

    # Conv1d(64->NUM_CHANNELS) folded; lane-dense flat output (B, 48).
    y = jnp.dot(h2, m3_ref[...], preferred_element_type=jnp.float32) + b[2:3, :N3]
    o_ref[...] = y.astype(o_ref.dtype)


# -------------------- wrapper --------------------

def generator_forward(params, noise, labels, code):
    gen_input = jnp.concatenate([noise, labels, code], axis=-1)   # (B, 14)
    out_flat = pl.pallas_call(
        _generator_kernel,
        out_shape=jax.ShapeDtypeStruct((BATCH, N3), jnp.float32),
    )(gen_input, params["w_a"], params["m2"], params["m3"], params["b_pack"])
    # free logical view back to PyTorch NCL layout
    return out_flat.reshape(BATCH, NUM_CHANNELS, PATCH_LEN)


# -------------------- deterministic parameter init + folding --------------------

def init_params(key):
    ks = jax.random.split(key, 8)
    s = 0.1
    # Raw (PyTorch-equivalent) parameters.
    # Linear: PyTorch weight is (out, in); stored transposed (in, out).
    w_l1 = s * jax.random.normal(ks[0], (INPUT_DIM, 128 * INIT_LEN), jnp.float32)
    b_l1 = s * jax.random.normal(ks[1], (1, 128 * INIT_LEN), jnp.float32)
    # Conv1d weights: PyTorch (out, in, k) -> stored tap-major (k, out, in).
    w_c1 = s * jax.random.normal(ks[2], (3, 128, 128), jnp.float32)
    b_c1 = s * jax.random.normal(ks[3], (128,), jnp.float32)
    w_c2 = s * jax.random.normal(ks[4], (3, 64, 128), jnp.float32)
    b_c2 = s * jax.random.normal(ks[5], (64,), jnp.float32)
    w_c3 = s * jax.random.normal(ks[6], (3, NUM_CHANNELS, 64), jnp.float32)
    b_c3 = s * jax.random.normal(ks[7], (NUM_CHANNELS,), jnp.float32)

    # Length-axis operators: upsample + tap shifts, composed per layer.
    U1 = _upsample_matrix(INIT_LEN)                       # (4, 8)
    U2 = _upsample_matrix(L1)                             # (8, 16)
    S8 = _shift_matrices(L1)                              # (3, 8, 8)
    S16 = _shift_matrices(L2)                             # (3, 16, 16)
    T1 = np.einsum("ij,kjl->kil", U1, S8)                 # (3, 4, 8)
    T2 = np.einsum("ij,kjl->kil", U2, S16)                # (3, 8, 16)
    T3 = S16                                              # (3, 16, 16)

    def fold(W, T):
        # W: (3, O, C), T: (3, Lin, Lout) -> M[(c*Lin+l), (o*Lout+m)]
        W = np.asarray(W, np.float64)
        M = np.einsum("koc,klm->clom", W, T)
        C, Lin, O, Lout = M.shape
        return M.reshape(C * Lin, O * Lout)

    M1 = fold(w_c1, T1)                                   # (512, 1024)
    M2 = fold(w_c2, T2)                                   # (1024, 1024)
    M3 = fold(w_c3, T3)                                   # (1024, 48)

    b1_flat = np.repeat(np.asarray(b_c1, np.float64), L1)   # (1024,)
    b2_flat = np.repeat(np.asarray(b_c2, np.float64), L2)   # (1024,)
    b3_flat = np.repeat(np.asarray(b_c3, np.float64), L2)   # (48,)

    # Compose the Linear layer with layer-1's folded operator (both linear).
    W_A = np.asarray(w_l1, np.float64) @ M1                  # (14, 1024)
    b_A = np.asarray(b_l1, np.float64)[0] @ M1 + b1_flat     # (1024,)

    # Biases as lane-dense rows, packed into one array (one DMA).
    b_pack = np.zeros((3, NB), np.float32)
    b_pack[0, :N1] = b_A
    b_pack[1, :N2] = b2_flat
    b_pack[2, :N3] = b3_flat

    kernel_params = dict(
        w_a=jnp.asarray(W_A, jnp.float32),
        m2=jnp.asarray(M2, jnp.float32),
        m3=jnp.asarray(M3, jnp.float32),
        b_pack=jnp.asarray(b_pack),
    )
    raw_params = dict(
        w_l1=w_l1, b_l1=b_l1,
        w_c1=w_c1, b_c1=b_c1, t1=jnp.asarray(T1, jnp.float32),
        w_c2=w_c2, b_c2=b_c2, t2=jnp.asarray(T2, jnp.float32),
        w_c3=w_c3, b_c3=b_c3, t3=jnp.asarray(T3, jnp.float32),
    )
    return kernel_params, raw_params


# -------------------- plain-JAX reference (unfused, sanity check) --------------------

def reference_forward(raw, noise, labels, code):
    gi = jnp.concatenate([noise, labels, code], axis=-1)
    h = gi @ raw["w_l1"] + raw["b_l1"]
    x = h.reshape(BATCH, 128, INIT_LEN)

    def conv(xx, w, b, t):
        y = jnp.einsum("koc,bcl,klm->bom", w, xx, t, precision="highest")
        return y + b[None, :, None]

    a1 = conv(x, raw["w_c1"], raw["b_c1"], raw["t1"])
    a1 = jnp.where(a1 > 0, a1, 0.2 * a1)
    a2 = conv(a1, raw["w_c2"], raw["b_c2"], raw["t2"])
    a2 = jnp.where(a2 > 0, a2, 0.2 * a2)
    return conv(a2, raw["w_c3"], raw["b_c3"], raw["t3"])


if __name__ == "__main__":
    key = jax.random.PRNGKey(0)
    kp, kz, kl, kc = jax.random.split(key, 4)
    params, raw = init_params(kp)

    noise = jax.random.normal(kz, (BATCH, LATENT_DIM), jnp.float32)
    label_ids = jax.random.randint(kl, (BATCH,), 0, N_CLASSES)
    labels = jax.nn.one_hot(label_ids, N_CLASSES, dtype=jnp.float32)
    code = jax.random.uniform(kc, (BATCH, CODE_DIM), jnp.float32, -1.0, 1.0)

    out = generator_forward(params, noise, labels, code)
    out = jax.block_until_ready(out)
    assert out.shape == (BATCH, NUM_CHANNELS, PATCH_LEN), out.shape

    ref = reference_forward(raw, noise, labels, code)
    err = float(jnp.max(jnp.abs(out - ref)))
    assert jnp.allclose(out, ref, rtol=2e-2, atol=2e-2), err

    print("KERNEL_OK")
</pallas_src>

<mosaic_0001>
module attributes {stable_mosaic.version = 11 : i64} {
  func.func @_generator_kernel(%arg0: memref<2x14xf32, #tpu.memory_space<vmem>>, %arg1: memref<14x1024xf32, #tpu.memory_space<vmem>>, %arg2: memref<1024x1024xf32, #tpu.memory_space<vmem>>, %arg3: memref<1024x48xf32, #tpu.memory_space<vmem>>, %arg4: memref<3x1024xf32, #tpu.memory_space<vmem>>, %arg5: memref<2x48xf32, #tpu.memory_space<vmem>>) attributes {dimension_semantics = [], scalar_prefetch = 0 : i64, scratch_operands = 0 : i64, tpu.core_type = #tpu.core_type<tc>} {
    %c0 = arith.constant 0 : index
    %c0_0 = arith.constant 0 : index
    %0 = vector.load %arg0[%c0, %c0_0] : memref<2x14xf32, #tpu.memory_space<vmem>>, vector<2x14xf32>
    %c0_1 = arith.constant 0 : index
    %c0_2 = arith.constant 0 : index
    %1 = vector.load %arg4[%c0_1, %c0_2] : memref<3x1024xf32, #tpu.memory_space<vmem>>, vector<3x1024xf32>
    %c0_3 = arith.constant 0 : index
    %c0_4 = arith.constant 0 : index
    %2 = vector.load %arg1[%c0_3, %c0_4] : memref<14x1024xf32, #tpu.memory_space<vmem>>, vector<14x1024xf32>
    %cst = arith.constant dense<0.000000e+00> : vector<2x1024xf32>
    %3 = tpu.matmul %0, %2, %cst {dimension_numbers = #tpu.dot_dimension_numbers<[1], [0], [0], [1], [0, 0, 1, 1], [], []>} : vector<2x14xf32>, vector<14x1024xf32>, vector<2x1024xf32> -> vector<2x1024xf32>
    %4 = vector.extract_strided_slice %1 {offsets = [0, 0], sizes = [1, 1024], strides = [1, 1]} : vector<3x1024xf32> to vector<1x1024xf32>
    %5 = vector.broadcast %4 : vector<1x1024xf32> to vector<2x1024xf32>
    %6 = arith.addf %3, %5 : vector<2x1024xf32>
    %cst_5 = arith.constant 0.000000e+00 : f32
    %7 = vector.broadcast %cst_5 : f32 to vector<2x1024xf32>
    %8 = arith.cmpf ogt, %6, %7 : vector<2x1024xf32>
    %cst_6 = arith.constant 2.000000e-01 : f32
    %9 = vector.broadcast %cst_6 : f32 to vector<2x1024xf32>
    %10 = arith.mulf %9, %6 : vector<2x1024xf32>
    %11 = arith.select %8, %6, %10 : vector<2x1024xi1>, vector<2x1024xf32>
    %c0_7 = arith.constant 0 : index
    %c0_8 = arith.constant 0 : index
    %12 = vector.load %arg2[%c0_7, %c0_8] : memref<1024x1024xf32, #tpu.memory_space<vmem>>, vector<1024x1024xf32>
    %cst_9 = arith.constant dense<0.000000e+00> : vector<2x1024xf32>
    %13 = tpu.matmul %11, %12, %cst_9 {dimension_numbers = #tpu.dot_dimension_numbers<[1], [0], [0], [1], [0, 0, 1, 1], [], []>} : vector<2x1024xf32>, vector<1024x1024xf32>, vector<2x1024xf32> -> vector<2x1024xf32>
    %14 = vector.extract_strided_slice %1 {offsets = [1, 0], sizes = [1, 1024], strides = [1, 1]} : vector<3x1024xf32> to vector<1x1024xf32>
    %15 = vector.broadcast %14 : vector<1x1024xf32> to vector<2x1024xf32>
    %16 = arith.addf %13, %15 : vector<2x1024xf32>
    %cst_10 = arith.constant 0.000000e+00 : f32
    %17 = vector.broadcast %cst_10 : f32 to vector<2x1024xf32>
    %18 = arith.cmpf ogt, %16, %17 : vector<2x1024xf32>
    %cst_11 = arith.constant 2.000000e-01 : f32
    %19 = vector.broadcast %cst_11 : f32 to vector<2x1024xf32>
    %20 = arith.mulf %19, %16 : vector<2x1024xf32>
    %21 = arith.select %18, %16, %20 : vector<2x1024xi1>, vector<2x1024xf32>
    %c0_12 = arith.constant 0 : index
    %c0_13 = arith.constant 0 : index
    %22 = vector.load %arg3[%c0_12, %c0_13] : memref<1024x48xf32, #tpu.memory_space<vmem>>, vector<1024x48xf32>
    %cst_14 = arith.constant dense<0.000000e+00> : vector<2x48xf32>
    %23 = tpu.matmul %21, %22, %cst_14 {dimension_numbers = #tpu.dot_dimension_numbers<[1], [0], [0], [1], [0, 0, 1, 1], [], []>} : vector<2x1024xf32>, vector<1024x48xf32>, vector<2x48xf32> -> vector<2x48xf32>
    %24 = vector.extract_strided_slice %1 {offsets = [2, 0], sizes = [1, 48], strides = [1, 1]} : vector<3x1024xf32> to vector<1x48xf32>
    %25 = vector.broadcast %24 : vector<1x48xf32> to vector<2x48xf32>
    %26 = arith.addf %23, %25 : vector<2x48xf32>
    %c0_15 = arith.constant 0 : index
    %c0_16 = arith.constant 0 : index
    %27 = vector.load %arg5[%c0_15, %c0_16] : memref<2x48xf32, #tpu.memory_space<vmem>>, vector<2x48xf32>
    tpu.vector_store %arg5[%c0_15, %c0_16], %26 {strides = array<i32>} : memref<2x48xf32, #tpu.memory_space<vmem>>, vector<2x48xf32>,
    return
  }
}

</mosaic_0001>

<llo_original>
// kernel: tpu_custom_call.1
$region0: #{tpu_custom_call.1}
  #allocation0 [shape = 'u32[]', space=smem, size = 0x4, offset = 0x4, fixed_abs, tag = 'smem constant byte address 0x4 - core index']
  #allocation1 [shape = 'u32[144,128]{1,0:T(1,128)}', space=vmem, size = 0x12000, scoped, tag = 'internal scratch']
  %s0 = inlined_call_operand.hbm [shape: f32[2,14], index: 0, kind: input, shape index: {}]
  %s1 = inlined_call_operand.hbm [shape: f32[14,1024], index: 1, kind: input, shape index: {}]
  %s2 = inlined_call_operand.hbm [shape: f32[1024,1024], index: 2, kind: input, shape index: {}]
  %s3 = inlined_call_operand.vmem [shape: f32[1024,48], index: 3, kind: input, shape index: {}]
  %s4 = inlined_call_operand.hbm [shape: f32[3,1024], index: 4, kind: input, shape index: {}]
  %s5 = inlined_call_operand.hbm [shape: f32[2,48], index: 5, kind: output, shape index: {}]
  %s6 = sld [smem:[#allocation0]]
  $region46: #{tpu_custom_call.1} parent=0
    _
  %s8 = ssub.s32 1, %s6
  %s9 = scalar_select 0, %s8, %s6
  $region1: #{tpu_custom_call.1} parent=0
    #allocation2 [shape = 'u8[1024]{0}', space=vmem, size = 0x400, scoped, tag = 'input window, operand 0, single buffered']
    #allocation3 [shape = 's32[1]{0}', space=sflag, size = 0x4, scoped, tag = 'scoped memory for tpu_custom_call.1']
    #allocation4 [shape = 's32[1]{0}', space=sflag, size = 0x4, scoped, tag = 'scoped memory for tpu_custom_call.1']
    #allocation5 [shape = 'u8[65536]{0}', space=vmem, size = 0x10000, scoped, tag = 'input window, operand 1, single buffered']
    #allocation6 [shape = 's32[1]{0}', space=sflag, size = 0x4, scoped, tag = 'scoped memory for tpu_custom_call.1']
    #allocation7 [shape = 'u8[4194304]{0}', space=vmem, size = 0x400000, scoped, tag = 'input window, operand 2, single buffered']
    #allocation8 [shape = 'u8[16384]{0}', space=vmem, size = 0x4000, scoped, tag = 'input window, operand 4, single buffered']
    #allocation9 [shape = 's32[1]{0}', space=sflag, size = 0x4, scoped, tag = 'scoped memory for tpu_custom_call.1']
    #allocation10 [shape = 'u8[1024]{0}', space=vmem, size = 0x400, scoped, tag = 'output window, operand 0, single buffered']
    %10 = vsyncpa [#allocation3], 0
    %11 = vsyncpa [#allocation6], 0
    %12 = vsyncpa [#allocation9], 0
    %13 = vsyncpa [#allocation4], 0
    // Predicated region
    $region2: #{tpu_custom_call.1} parent=1 // pred_check
      _
    $region3: #{tpu_custom_call.1} parent=1 // pred_check_branch
      %15 = sbr.rel (0) target = $region5
    $region4: #{tpu_custom_call.1} parent=1 // pred_region
      %s17 = ssub.s32 32, 32
      %18 = vsyncadd [#allocation3], %s17
      %s20 = sshll.u32 [#allocation2], 4
      %s21 = int_to_ptr.vmem [resolvable:$true] %s20
      %23 = dma.hbm_to_vmem [thread:$0]  %s0, 32, %s21, [#allocation3]
    $region5: #{tpu_custom_call.1} parent=1 // pred_fallthru
      _
    // Predicated region
    $region6: #{tpu_custom_call.1} parent=1 // pred_check
      _
    $region7: #{tpu_custom_call.1} parent=1 // pred_check_branch
      %25 = sbr.rel (0) target = $region9
    $region8: #{tpu_custom_call.1} parent=1 // pred_region
      %s27 = ssub.s32 2048, 2048
      %28 = vsyncadd [#allocation6], %s27
      %s29 = sshll.u32 [#allocation5], 4
      %s30 = int_to_ptr.vmem [resolvable:$true] %s29
      %35 = dma.hbm_to_vmem [thread:$0]  %s1, 2048, %s30, [#allocation6], 1024, 1024, 64
    $region9: #{tpu_custom_call.1} parent=1 // pred_fallthru
      _
    // Predicated region
    $region10: #{tpu_custom_call.1} parent=1 // pred_check
      _
    $region11: #{tpu_custom_call.1} parent=1 // pred_check_branch
      %37 = sbr.rel (0) target = $region13
    $region12: #{tpu_custom_call.1} parent=1 // pred_region
      %s39 = ssub.s32 131072, 131072
      %40 = vsyncadd [#allocation6], %s39
      %s41 = sshll.u32 [#allocation7], 4
      %s42 = int_to_ptr.vmem [resolvable:$true] %s41
      %47 = dma.hbm_to_vmem [thread:$0]  %s2, 131072, %s42, [#allocation6], 1024, 1024, 64
    $region13: #{tpu_custom_call.1} parent=1 // pred_fallthru
      _
    // Predicated region
    $region14: #{tpu_custom_call.1} parent=1 // pred_check
      _
    $region15: #{tpu_custom_call.1} parent=1 // pred_check_branch
      %49 = sbr.rel (0) target = $region17
    $region16: #{tpu_custom_call.1} parent=1 // pred_region
      _
    $region17: #{tpu_custom_call.1} parent=1 // pred_fallthru
      _
    // Predicated region
    $region18: #{tpu_custom_call.1} parent=1 // pred_check
      _
    $region19: #{tpu_custom_call.1} parent=1 // pred_check_branch
      %51 = sbr.rel (0) target = $region21
    $region20: #{tpu_custom_call.1} parent=1 // pred_region
      %s53 = ssub.s32 512, 512
      %54 = vsyncadd [#allocation9], %s53
      %s56 = sshll.u32 [#allocation8], 4
      %s57 = int_to_ptr.vmem [resolvable:$true] %s56
      %59 = dma.hbm_to_vmem [thread:$0]  %s4, 512, %s57, [#allocation9]
    $region21: #{tpu_custom_call.1} parent=1 // pred_fallthru
      _
    // Predicated region
    $region22: #{tpu_custom_call.1} parent=1 // pred_check
      _
    $region23: #{tpu_custom_call.1} parent=1 // pred_check_branch
      %61 = sbr.rel (0) target = $region25
    $region24: #{tpu_custom_call.1} parent=1 // pred_region
      %62 = dma.done [#allocation3], 32
    $region25: #{tpu_custom_call.1} parent=1 // pred_fallthru
      _
    // Predicated region
    $region26: #{tpu_custom_call.1} parent=1 // pred_check
      _
    $region27: #{tpu_custom_call.1} parent=1 // pred_check_branch
      %64 = sbr.rel (0) target = $region29
    $region28: #{tpu_custom_call.1} parent=1 // pred_region
      %65 = dma.done [#allocation6], 2048
    $region29: #{tpu_custom_call.1} parent=1 // pred_fallthru
      _
    // Predicated region
    $region30: #{tpu_custom_call.1} parent=1 // pred_check
      _
    $region31: #{tpu_custom_call.1} parent=1 // pred_check_branch
      %67 = sbr.rel (0) target = $region33
    $region32: #{tpu_custom_call.1} parent=1 // pred_region
      %68 = dma.done [#allocation6], 131072
    $region33: #{tpu_custom_call.1} parent=1 // pred_fallthru
      _
    // Predicated region
    $region34: #{tpu_custom_call.1} parent=1 // pred_check
      _
    $region35: #{tpu_custom_call.1} parent=1 // pred_check_branch
      %70 = sbr.rel (0) target = $region37
    $region36: #{tpu_custom_call.1} parent=1 // pred_region
      %71 = dma.done [#allocation9], 512
    $region37: #{tpu_custom_call.1} parent=1 // pred_fallthru
      _
    %v72 = vld [vmem:[#allocation2] sm:$0x3]
    %v73 = vld [vmem:[#allocation8] sm:$0x77]
    %v74 = vld [vmem:[#allocation8 + $0x8] sm:$0x77]
    %v75 = vld [vmem:[#allocation8 + $0x10] sm:$0x77]
    %v76 = vld [vmem:[#allocation8 + $0x18] sm:$0x77]
    %v77 = vld [vmem:[#allocation5] sm:$0xff]
    %v78 = vld [vmem:[#allocation5 + $0x8] sm:$0xff]
    %v79 = vld [vmem:[#allocation5 + $0x10] sm:$0xff]
    %v80 = vld [vmem:[#allocation5 + $0x18] sm:$0xff]
    %v81 = vld [vmem:[#allocation5 + $0x20] sm:$0xff]
    %v82 = vld [vmem:[#allocation5 + $0x28] sm:$0xff]
    %v83 = vld [vmem:[#allocation5 + $0x30] sm:$0xff]
    %v84 = vld [vmem:[#allocation5 + $0x38] sm:$0xff]
    %v85 = vld [vmem:[#allocation5 + $0x40] sm:$0x3f]
    %v86 = vld [vmem:[#allocation5 + $0x48] sm:$0x3f]
    %v87 = vld [vmem:[#allocation5 + $0x50] sm:$0x3f]
    %v88 = vld [vmem:[#allocation5 + $0x58] sm:$0x3f]
    %v89 = vld [vmem:[#allocation5 + $0x60] sm:$0x3f]
    %v90 = vld [vmem:[#allocation5 + $0x68] sm:$0x3f]
    %v91 = vld [vmem:[#allocation5 + $0x70] sm:$0x3f]
    %v92 = vld [vmem:[#allocation5 + $0x78] sm:$0x3f]
    %v97 = vlaneseq
    %v98 = vshrl.u32 %v97, 7
    %v99 = vsub.s32 0, %v98
    %v100 = vrot.slane %v73, %v99
    %v101 = vlaneseq
    %v102 = vshrl.u32 %v101, 7
    %v103 = vsub.s32 4, %v102
    %v104 = vrot.slane %v73, %v103
    %v105 = vlaneseq
    %v106 = vshrl.u32 %v105, 7
    %v107 = vsub.s32 0, %v106
    %v108 = vrot.slane %v74, %v107
    %v109 = vlaneseq
    %v110 = vshrl.u32 %v109, 7
    %v111 = vsub.s32 4, %v110
    %v112 = vrot.slane %v74, %v111
    %v113 = vlaneseq
    %v114 = vshrl.u32 %v113, 7
    %v115 = vsub.s32 0, %v114
    %v116 = vrot.slane %v75, %v115
    %v117 = vlaneseq
    %v118 = vshrl.u32 %v117, 7
    %v119 = vsub.s32 4, %v118
    %v120 = vrot.slane %v75, %v119
    %v121 = vlaneseq
    %v122 = vshrl.u32 %v121, 7
    %v123 = vsub.s32 0, %v122
    %v124 = vrot.slane %v76, %v123
    %v125 = vlaneseq
    %v126 = vshrl.u32 %v125, 7
    %v127 = vsub.s32 4, %v126
    %v128 = vrot.slane %v76, %v127
    %v137 = vlaneseq
    %v138 = vshrl.u32 %v137, 7
    %v139 = vsub.s32 0, %v138
    %v140 = vrot.slane %v100, %v139
    %v141 = vlaneseq
    %v142 = vshrl.u32 %v141, 7
    %v143 = vsub.s32 0, %v142
    %v144 = vrot.slane %v104, %v143
    %v145 = vlaneseq
    %v146 = vshrl.u32 %v145, 7
    %v147 = vsub.s32 0, %v146
    %v148 = vrot.slane %v108, %v147
    %v149 = vlaneseq
    %v150 = vshrl.u32 %v149, 7
    %v151 = vsub.s32 0, %v150
    %v152 = vrot.slane %v112, %v151
    %v153 = vlaneseq
    %v154 = vshrl.u32 %v153, 7
    %v155 = vsub.s32 0, %v154
    %v156 = vrot.slane %v116, %v155
    %v157 = vlaneseq
    %v158 = vshrl.u32 %v157, 7
    %v159 = vsub.s32 0, %v158
    %v160 = vrot.slane %v120, %v159
    %v161 = vlaneseq
    %v162 = vshrl.u32 %v161, 7
    %v163 = vsub.s32 0, %v162
    %v164 = vrot.slane %v124, %v163
    %v165 = vlaneseq
    %v166 = vshrl.u32 %v165, 7
    %v167 = vsub.s32 0, %v166
    %v168 = vrot.slane %v128, %v167
    %vm169 = vcmask 113664
    %v171 = vsel %vm169, %v72, 0
    %vm173 = vcmask 1045504
    %v175 = vsel %vm173, %v85, 0
    %v178 = vsel %vm173, %v86, 0
    %v181 = vsel %vm173, %v87, 0
    %v184 = vsel %vm173, %v88, 0
    %v187 = vsel %vm173, %v89, 0
    %v190 = vsel %vm173, %v90, 0
    %v193 = vsel %vm173, %v91, 0
    %v196 = vsel %vm173, %v92, 0
    %198 = vmatprep.subr.mxu0 0.0
    %199 = vmatpush1.msra.mxu0 0.0
    %200 = vmatprep.subr.mxu0 0.0
    %201 = vmatpush1.msra.mxu0 0.0
    %202 = vmatprep.subr.mxu0 0.0
    %203 = vmatpush1.msra.mxu0 0.0
    %204 = vmatprep.subr.mxu0 0.0
    %205 = vmatpush1.msra.mxu0 0.0
    %206 = vmatprep.subr.mxu0 0.0
    %207 = vmatpush1.msra.mxu0 0.0
    %208 = vmatprep.subr.mxu0 0.0
    %209 = vmatpush1.msra.mxu0 0.0
    %210 = vmatprep.subr.mxu0 0.0
    %211 = vmatpush1.msra.mxu0 0.0
    %212 = vmatprep.subr.mxu0 0.0
    %213 = vmatpush1.msra.mxu0 0.0
    %214 = vmatprep.subr.mxu0 0.0
    %215 = vmatpush1.msra.mxu0 0.0
    %216 = vmatprep.subr.mxu0 0.0
    %217 = vmatpush1.msra.mxu0 0.0
    %218 = vmatprep.subr.mxu0 0.0
    %219 = vmatpush1.msra.mxu0 0.0
    %220 = vmatprep.subr.mxu0 0.0
    %221 = vmatpush1.msra.mxu0 0.0
    %222 = vmatprep.subr.mxu0 0.0
    %223 = vmatpush1.msra.mxu0 0.0
    %224 = vmatprep.subr.mxu0 0.0
    %225 = vmatpush1.msra.mxu0 0.0
    %226 = vmatprep.subr.mxu0 %v178
    %227 = vmatpush1.msra.mxu0 %v175
    %228 = vmatprep.subr.mxu0 %v78
    %229 = vmatpush1.msra.mxu0 %v77
    %230 = vmatprep.subr.mxu0 0.0
    %231 = vmatpush2.msra.mxu0 0.0
    %232 = vmatprep.subr.mxu0 0.0
    %233 = vmatpush2.msra.mxu0 0.0
    %234 = vmatprep.subr.mxu0 0.0
    %235 = vmatpush2.msra.mxu0 0.0
    %236 = vmatprep.subr.mxu0 0.0
    %237 = vmatpush2.msra.mxu0 0.0
    %238 = vmatprep.subr.mxu0 0.0
    %239 = vmatpush2.msra.mxu0 0.0
    %240 = vmatprep.subr.mxu0 0.0
    %241 = vmatpush2.msra.mxu0 0.0
    %242 = vmatprep.subr.mxu0 0.0
    %243 = vmatpush2.msra.mxu0 0.0
    %244 = vmatprep.subr.mxu0 0.0
    %245 = vmatpush2.msra.mxu0 0.0
    %246 = vmatprep.subr.mxu0 0.0
    %247 = vmatpush2.msra.mxu0 0.0
    %248 = vmatprep.subr.mxu0 0.0
    %249 = vmatpush2.msra.mxu0 0.0
    %250 = vmatprep.subr.mxu0 0.0
    %251 = vmatpush2.msra.mxu0 0.0
    %252 = vmatprep.subr.mxu0 0.0
    %253 = vmatpush2.msra.mxu0 0.0
    %254 = vmatprep.subr.mxu0 0.0
    %255 = vmatpush2.msra.mxu0 0.0
    %256 = vmatprep.subr.mxu0 0.0
    %257 = vmatpush2.msra.mxu0 0.0
    %258 = vmatprep.subr.mxu0 0.0
    %259 = vmatpush2.msra.mxu0 0.0
    %260 = vmatprep.subr.mxu0 0.0
    %261 = vmatpush2.msra.mxu0 0.0
    %262 = vmatprep.mubr.f32.mxu0 0.0
    %263 = vmatmul.mubr.f32.gmra.mxu0 %v171
    %v264 = vpop.f32.mrf.mxu0
    %v265 = vadd.f32 %v140, %v264
    %v266 = vpop.f32.mrf.mxu0
    %v267 = vadd.f32 %v144, %v266
    %268 = vdwg.mxu0
    %269 = vmatprep.subr.mxu0 0.0
    %270 = vmatpush1.msra.mxu0 0.0
    %271 = vmatprep.subr.mxu0 0.0
    %272 = vmatpush1.msra.mxu0 0.0
    %273 = vmatprep.subr.mxu0 0.0
    %274 = vmatpush1.msra.mxu0 0.0
    %275 = vmatprep.subr.mxu0 0.0
    %276 = vmatpush1.msra.mxu0 0.0
    %277 = vmatprep.subr.mxu0 0.0
    %278 = vmatpush1.msra.mxu0 0.0
    %279 = vmatprep.subr.mxu0 0.0
    %280 = vmatpush1.msra.mxu0 0.0
    %281 = vmatprep.subr.mxu0 0.0
    %282 = vmatpush1.msra.mxu0 0.0
    %283 = vmatprep.subr.mxu0 0.0
    %284 = vmatpush1.msra.mxu0 0.0
    %285 = vmatprep.subr.mxu0 0.0
    %286 = vmatpush1.msra.mxu0 0.0
    %287 = vmatprep.subr.mxu0 0.0
    %288 = vmatpush1.msra.mxu0 0.0
    %289 = vmatprep.subr.mxu0 0.0
    %290 = vmatpush1.msra.mxu0 0.0
    %291 = vmatprep.subr.mxu0 0.0
    %292 = vmatpush1.msra.mxu0 0.0
    %293 = vmatprep.subr.mxu0 0.0
    %294 = vmatpush1.msra.mxu0 0.0
    %295 = vmatprep.subr.mxu0 0.0
    %296 = vmatpush1.msra.mxu0 0.0
    %297 = vmatprep.subr.mxu0 %v184
    %298 = vmatpush1.msra.mxu0 %v181
    %299 = vmatprep.subr.mxu0 %v80
    %300 = vmatpush1.msra.mxu0 %v79
    %301 = vmatprep.subr.mxu0 0.0
    %302 = vmatpush2.msra.mxu0 0.0
    %303 = vmatprep.subr.mxu0 0.0
    %304 = vmatpush2.msra.mxu0 0.0
    %305 = vmatprep.subr.mxu0 0.0
    %306 = vmatpush2.msra.mxu0 0.0
    %307 = vmatprep.subr.mxu0 0.0
    %308 = vmatpush2.msra.mxu0 0.0
    %309 = vmatprep.subr.mxu0 0.0
    %310 = vmatpush2.msra.mxu0 0.0
    %311 = vmatprep.subr.mxu0 0.0
    %312 = vmatpush2.msra.mxu0 0.0
    %313 = vmatprep.subr.mxu0 0.0
    %314 = vmatpush2.msra.mxu0 0.0
    %315 = vmatprep.subr.mxu0 0.0
    %316 = vmatpush2.msra.mxu0 0.0
    %317 = vmatprep.subr.mxu0 0.0
    %318 = vmatpush2.msra.mxu0 0.0
    %319 = vmatprep.subr.mxu0 0.0
    %320 = vmatpush2.msra.mxu0 0.0
    %321 = vmatprep.subr.mxu0 0.0
    %322 = vmatpush2.msra.mxu0 0.0
    %323 = vmatprep.subr.mxu0 0.0
    %324 = vmatpush2.msra.mxu0 0.0
    %325 = vmatprep.subr.mxu0 0.0
    %326 = vmatpush2.msra.mxu0 0.0
    %327 = vmatprep.subr.mxu0 0.0
    %328 = vmatpush2.msra.mxu0 0.0
    %329 = vmatprep.subr.mxu0 0.0
    %330 = vmatpush2.msra.mxu0 0.0
    %331 = vmatprep.subr.mxu0 0.0
    %332 = vmatpush2.msra.mxu0 0.0
    %333 = vmatprep.mubr.f32.mxu0 0.0
    %334 = vmatmul.mubr.f32.gmra.mxu0 %v171
    %v335 = vpop.f32.mrf.mxu0
    %v336 = vadd.f32 %v148, %v335
    %v337 = vpop.f32.mrf.mxu0
    %v338 = vadd.f32 %v152, %v337
    %339 = vdwg.mxu0
    %340 = vmatprep.subr.mxu0 0.0
    %341 = vmatpush1.msra.mxu0 0.0
    %342 = vmatprep.subr.mxu0 0.0
    %343 = vmatpush1.msra.mxu0 0.0
    %344 = vmatprep.subr.mxu0 0.0
    %345 = vmatpush1.msra.mxu0 0.0
    %346 = vmatprep.subr.mxu0 0.0
    %347 = vmatpush1.msra.mxu0 0.0
    %348 = vmatprep.subr.mxu0 0.0
    %349 = vmatpush1.msra.mxu0 0.0
    %350 = vmatprep.subr.mxu0 0.0
    %351 = vmatpush1.msra.mxu0 0.0
    %352 = vmatprep.subr.mxu0 0.0
    %353 = vmatpush1.msra.mxu0 0.0
    %354 = vmatprep.subr.mxu0 0.0
    %355 = vmatpush1.msra.mxu0 0.0
    %356 = vmatprep.subr.mxu0 0.0
    %357 = vmatpush1.msra.mxu0 0.0
    %358 = vmatprep.subr.mxu0 0.0
    %359 = vmatpush1.msra.mxu0 0.0
    %360 = vmatprep.subr.mxu0 0.0
    %361 = vmatpush1.msra.mxu0 0.0
    %362 = vmatprep.subr.mxu0 0.0
    %363 = vmatpush1.msra.mxu0 0.0
    %364 = vmatprep.subr.mxu0 0.0
    %365 = vmatpush1.msra.mxu0 0.0
    %366 = vmatprep.subr.mxu0 0.0
    %367 = vmatpush1.msra.mxu0 0.0
    %368 = vmatprep.subr.mxu0 %v190
    %369 = vmatpush1.msra.mxu0 %v187
    %370 = vmatprep.subr.mxu0 %v82
    %371 = vmatpush1.msra.mxu0 %v81
    %372 = vmatprep.subr.mxu0 0.0
    %373 = vmatpush2.msra.mxu0 0.0
    %374 = vmatprep.subr.mxu0 0.0
    %375 = vmatpush2.msra.mxu0 0.0
    %376 = vmatprep.subr.mxu0 0.0
    %377 = vmatpush2.msra.mxu0 0.0
    %378 = vmatprep.subr.mxu0 0.0
    %379 = vmatpush2.msra.mxu0 0.0
    %380 = vmatprep.subr.mxu0 0.0
    %381 = vmatpush2.msra.mxu0 0.0
    %382 = vmatprep.subr.mxu0 0.0
    %383 = vmatpush2.msra.mxu0 0.0
    %384 = vmatprep.subr.mxu0 0.0
    %385 = vmatpush2.msra.mxu0 0.0
    %386 = vmatprep.subr.mxu0 0.0
    %387 = vmatpush2.msra.mxu0 0.0
    %388 = vmatprep.subr.mxu0 0.0
    %389 = vmatpush2.msra.mxu0 0.0
    %390 = vmatprep.subr.mxu0 0.0
    %391 = vmatpush2.msra.mxu0 0.0
    %392 = vmatprep.subr.mxu0 0.0
    %393 = vmatpush2.msra.mxu0 0.0
    %394 = vmatprep.subr.mxu0 0.0
    %395 = vmatpush2.msra.mxu0 0.0
    %396 = vmatprep.subr.mxu0 0.0
    %397 = vmatpush2.msra.mxu0 0.0
    %398 = vmatprep.subr.mxu0 0.0
    %399 = vmatpush2.msra.mxu0 0.0
    %400 = vmatprep.subr.mxu0 0.0
    %401 = vmatpush2.msra.mxu0 0.0
    %402 = vmatprep.subr.mxu0 0.0
    %403 = vmatpush2.msra.mxu0 0.0
    %404 = vmatprep.mubr.f32.mxu0 0.0
    %405 = vmatmul.mubr.f32.gmra.mxu0 %v171
    %v406 = vpop.f32.mrf.mxu0
    %v407 = vadd.f32 %v156, %v406
    %v408 = vpop.f32.mrf.mxu0
    %v409 = vadd.f32 %v160, %v408
    %410 = vdwg.mxu0
    %411 = vmatprep.subr.mxu0 0.0
    %412 = vmatpush1.msra.mxu0 0.0
    %413 = vmatprep.subr.mxu0 0.0
    %414 = vmatpush1.msra.mxu0 0.0
    %415 = vmatprep.subr.mxu0 0.0
    %416 = vmatpush1.msra.mxu0 0.0
    %417 = vmatprep.subr.mxu0 0.0
    %418 = vmatpush1.msra.mxu0 0.0
    %419 = vmatprep.subr.mxu0 0.0
    %420 = vmatpush1.msra.mxu0 0.0
    %421 = vmatprep.subr.mxu0 0.0
    %422 = vmatpush1.msra.mxu0 0.0
    %423 = vmatprep.subr.mxu0 0.0
    %424 = vmatpush1.msra.mxu0 0.0
    %425 = vmatprep.subr.mxu0 0.0
    %426 = vmatpush1.msra.mxu0 0.0
    %427 = vmatprep.subr.mxu0 0.0
    %428 = vmatpush1.msra.mxu0 0.0
    %429 = vmatprep.subr.mxu0 0.0
    %430 = vmatpush1.msra.mxu0 0.0
    %431 = vmatprep.subr.mxu0 0.0
    %432 = vmatpush1.msra.mxu0 0.0
    %433 = vmatprep.subr.mxu0 0.0
    %434 = vmatpush1.msra.mxu0 0.0
    %435 = vmatprep.subr.mxu0 0.0
    %436 = vmatpush1.msra.mxu0 0.0
    %437 = vmatprep.subr.mxu0 0.0
    %438 = vmatpush1.msra.mxu0 0.0
    %439 = vmatprep.subr.mxu0 %v196
    %440 = vmatpush1.msra.mxu0 %v193
    %441 = vmatprep.subr.mxu0 %v84
    %442 = vmatpush1.msra.mxu0 %v83
    %443 = vmatprep.subr.mxu0 0.0
    %444 = vmatpush2.msra.mxu0 0.0
    %445 = vmatprep.subr.mxu0 0.0
    %446 = vmatpush2.msra.mxu0 0.0
    %447 = vmatprep.subr.mxu0 0.0
    %448 = vmatpush2.msra.mxu0 0.0
    %449 = vmatprep.subr.mxu0 0.0
    %450 = vmatpush2.msra.mxu0 0.0
    %451 = vmatprep.subr.mxu0 0.0
    %452 = vmatpush2.msra.mxu0 0.0
    %453 = vmatprep.subr.mxu0 0.0
    %454 = vmatpush2.msra.mxu0 0.0
    %455 = vmatprep.subr.mxu0 0.0
    %456 = vmatpush2.msra.mxu0 0.0
    %457 = vmatprep.subr.mxu0 0.0
    %458 = vmatpush2.msra.mxu0 0.0
    %459 = vmatprep.subr.mxu0 0.0
    %460 = vmatpush2.msra.mxu0 0.0
    %461 = vmatprep.subr.mxu0 0.0
    %462 = vmatpush2.msra.mxu0 0.0
    %463 = vmatprep.subr.mxu0 0.0
    %464 = vmatpush2.msra.mxu0 0.0
    %465 = vmatprep.subr.mxu0 0.0
    %466 = vmatpush2.msra.mxu0 0.0
    %467 = vmatprep.subr.mxu0 0.0
    %468 = vmatpush2.msra.mxu0 0.0
    %469 = vmatprep.subr.mxu0 0.0
    %470 = vmatpush2.msra.mxu0 0.0
    %471 = vmatprep.subr.mxu0 0.0
    %472 = vmatpush2.msra.mxu0 0.0
    %473 = vmatprep.subr.mxu0 0.0
    %474 = vmatpush2.msra.mxu0 0.0
    %475 = vmatprep.mubr.f32.mxu0 0.0
    %476 = vmatmul.mubr.f32.gmra.mxu0 %v171
    %v477 = vpop.f32.mrf.mxu0
    %v478 = vadd.f32 %v164, %v477
    %v479 = vpop.f32.mrf.mxu0
    %v480 = vadd.f32 %v168, %v479
    %481 = vdwg.mxu0
    %vm482 = vcmp.gt.f32.partialorder %v265, 0.0
    %vm483 = vcmp.gt.f32.partialorder %v267, 0.0
    %vm484 = vcmp.gt.f32.partialorder %v336, 0.0
    %vm485 = vcmp.gt.f32.partialorder %v338, 0.0
    %vm486 = vcmp.gt.f32.partialorder %v407, 0.0
    %vm487 = vcmp.gt.f32.partialorder %v409, 0.0
    %vm488 = vcmp.gt.f32.partialorder %v478, 0.0
    %vm489 = vcmp.gt.f32.partialorder %v480, 0.0
    %v490 = vmul.f32 %v265, 0.2
    %v491 = vmul.f32 %v267, 0.2
    %v492 = vmul.f32 %v336, 0.2
    %v493 = vmul.f32 %v338, 0.2
    %v494 = vmul.f32 %v407, 0.2
    %v495 = vmul.f32 %v409, 0.2
    %v496 = vmul.f32 %v478, 0.2
    %v497 = vmul.f32 %v480, 0.2
    %v498 = vsel %vm482, %v265, %v490
    %v499 = vsel %vm483, %v267, %v491
    %v500 = vsel %vm484, %v336, %v492
    %v501 = vsel %vm485, %v338, %v493
    %v502 = vsel %vm486, %v407, %v494
    %v503 = vsel %vm487, %v409, %v495
    %v504 = vsel %vm488, %v478, %v496
    %v505 = vsel %vm489, %v480, %v497
    %v506 = vld [vmem:[#allocation7] sm:$0xff]
    %v507 = vld [vmem:[#allocation7 + $0x8] sm:$0xff]
    %v508 = vld [vmem:[#allocation7 + $0x10] sm:$0xff]
    %v509 = vld [vmem:[#allocation7 + $0x18] sm:$0xff]
    %v510 = vld [vmem:[#allocation7 + $0x20] sm:$0xff]
    %v511 = vld [vmem:[#allocation7 + $0x28] sm:$0xff]
    %v512 = vld [vmem:[#allocation7 + $0x30] sm:$0xff]
    %v513 = vld [vmem:[#allocation7 + $0x38] sm:$0xff]
    %v514 = vld [vmem:[#allocation7 + $0x40] sm:$0xff]
    %v515 = vld [vmem:[#allocation7 + $0x48] sm:$0xff]
    %v516 = vld [vmem:[#allocation7 + $0x50] sm:$0xff]
    %v517 = vld [vmem:[#allocation7 + $0x58] sm:$0xff]
    %v518 = vld [vmem:[#allocation7 + $0x60] sm:$0xff]
    %v519 = vld [vmem:[#allocation7 + $0x68] sm:$0xff]
    %v520 = vld [vmem:[#allocation7 + $0x70] sm:$0xff]
    %v521 = vld [vmem:[#allocation7 + $0x78] sm:$0xff]
    %v522 = vld [vmem:[#allocation7 + $0x80] sm:$0xff]
    %v523 = vld [vmem:[#allocation7 + $0x88] sm:$0xff]
    %v524 = vld [vmem:[#allocation7 + $0x90] sm:$0xff]
    %v525 = vld [vmem:[#allocation7 + $0x98] sm:$0xff]
    %v526 = vld [vmem:[#allocation7 + $0xa0] sm:$0xff]
    %v527 = vld [vmem:[#allocation7 + $0xa8] sm:$0xff]
    %v528 = vld [vmem:[#allocation7 + $0xb0] sm:$0xff]
    %v529 = vld [vmem:[#allocation7 + $0xb8] sm:$0xff]
    %v530 = vld [vmem:[#allocation7 + $0xc0] sm:$0xff]
    %v531 = vld [vmem:[#allocation7 + $0xc8] sm:$0xff]
    %v532 = vld [vmem:[#allocation7 + $0xd0] sm:$0xff]
    %v533 = vld [vmem:[#allocation7 + $0xd8] sm:$0xff]
    %v534 = vld [vmem:[#allocation7 + $0xe0] sm:$0xff]
    %v535 = vld [vmem:[#allocation7 + $0xe8] sm:$0xff]
    %v536 = vld [vmem:[#allocation7 + $0xf0] sm:$0xff]
    %v537 = vld [vmem:[#allocation7 + $0xf8] sm:$0xff]
    %v538 = vld [vmem:[#allocation7 + $0x100] sm:$0xff]
    %v539 = vld [vmem:[#allocation7 + $0x108] sm:$0xff]
    %v540 = vld [vmem:[#allocation7 + $0x110] sm:$0xff]
    %v541 = vld [vmem:[#allocation7 + $0x118] sm:$0xff]
    %v542 = vld [vmem:[#allocation7 + $0x120] sm:$0xff]
    %v543 = vld [vmem:[#allocation7 + $0x128] sm:$0xff]
    %v544 = vld [vmem:[#allocation7 + $0x130] sm:$0xff]
    %v545 = vld [vmem:[#allocation7 + $0x138] sm:$0xff]
    %v546 = vld [vmem:[#allocation7 + $0x140] sm:$0xff]
    %v547 = vld [vmem:[#allocation7 + $0x148] sm:$0xff]
    %v548 = vld [vmem:[#allocation7 + $0x150] sm:$0xff]
    %v549 = vld [vmem:[#allocation7 + $0x158] sm:$0xff]
    %v550 = vld [vmem:[#allocation7 + $0x160] sm:$0xff]
    %v551 = vld [vmem:[#allocation7 + $0x168] sm:$0xff]
    %v552 = vld [vmem:[#allocation7 + $0x170] sm:$0xff]
    %v553 = vld [vmem:[#allocation7 + $0x178] sm:$0xff]
    %v554 = vld [vmem:[#allocation7 + $0x180] sm:$0xff]
    %v555 = vld [vmem:[#allocation7 + $0x188] sm:$0xff]
    %v556 = vld [vmem:[#allocation7 + $0x190] sm:$0xff]
    %v557 = vld [vmem:[#allocation7 + $0x198] sm:$0xff]
    %v558 = vld [vmem:[#allocation7 + $0x1a0] sm:$0xff]
    %v559 = vld [vmem:[#allocation7 + $0x1a8] sm:$0xff]
    %v560 = vld [vmem:[#allocation7 + $0x1b0] sm:$0xff]
    %v561 = vld [vmem:[#allocation7 + $0x1b8] sm:$0xff]
    %v562 = vld [vmem:[#allocation7 + $0x1c0] sm:$0xff]
    %v563 = vld [vmem:[#allocation7 + $0x1c8] sm:$0xff]
    %v564 = vld [vmem:[#allocation7 + $0x1d0] sm:$0xff]
    %v565 = vld [vmem:[#allocation7 + $0x1d8] sm:$0xff]
    %v566 = vld [vmem:[#allocation7 + $0x1e0] sm:$0xff]
    %v567 = vld [vmem:[#allocation7 + $0x1e8] sm:$0xff]
    %v568 = vld [vmem:[#allocation7 + $0x1f0] sm:$0xff]
    %v569 = vld [vmem:[#allocation7 + $0x1f8] sm:$0xff]
    %v570 = vld [vmem:[#allocation7 + $0x200] sm:$0xff]
    %v571 = vld [vmem:[#allocation7 + $0x208] sm:$0xff]
    %v572 = vld [vmem:[#allocation7 + $0x210] sm:$0xff]
    %v573 = vld [vmem:[#allocation7 + $0x218] sm:$0xff]
    %v574 = vld [vmem:[#allocation7 + $0x220] sm:$0xff]
    %v575 = vld [vmem:[#allocation7 + $0x228] sm:$0xff]
    %v576 = vld [vmem:[#allocation7 + $0x230] sm:$0xff]
    %v577 = vld [vmem:[#allocation7 + $0x238] sm:$0xff]
    %v578 = vld [vmem:[#allocation7 + $0x240] sm:$0xff]
    %v579 = vld [vmem:[#allocation7 + $0x248] sm:$0xff]
    %v580 = vld [vmem:[#allocation7 + $0x250] sm:$0xff]
    %v581 = vld [vmem:[#allocation7 + $0x258] sm:$0xff]
    %v582 = vld [vmem:[#allocation7 + $0x260] sm:$0xff]
    %v583 = vld [vmem:[#allocation7 + $0x268] sm:$0xff]
    %v584 = vld [vmem:[#allocation7 + $0x270] sm:$0xff]
    %v585 = vld [vmem:[#allocation7 + $0x278] sm:$0xff]
    %v586 = vld [vmem:[#allocation7 + $0x280] sm:$0xff]
    %v587 = vld [vmem:[#allocation7 + $0x288] sm:$0xff]
    %v588 = vld [vmem:[#allocation7 + $0x290] sm:$0xff]
    %v589 = vld [vmem:[#allocation7 + $0x298] sm:$0xff]
    %v590 = vld [vmem:[#allocation7 + $0x2a0] sm:$0xff]
    %v591 = vld [vmem:[#allocation7 + $0x2a8] sm:$0xff]
    %v592 = vld [vmem:[#allocation7 + $0x2b0] sm:$0xff]
    %v593 = vld [vmem:[#allocation7 + $0x2b8] sm:$0xff]
    %v594 = vld [vmem:[#allocation7 + $0x2c0] sm:$0xff]
    %v595 = vld [vmem:[#allocation7 + $0x2c8] sm:$0xff]
    %v596 = vld [vmem:[#allocation7 + $0x2d0] sm:$0xff]
    %v597 = vld [vmem:[#allocation7 + $0x2d8] sm:$0xff]
    %v598 = vld [vmem:[#allocation7 + $0x2e0] sm:$0xff]
    %v599 = vld [vmem:[#allocation7 + $0x2e8] sm:$0xff]
    %v600 = vld [vmem:[#allocation7 + $0x2f0] sm:$0xff]
    %v601 = vld [vmem:[#allocation7 + $0x2f8] sm:$0xff]
    %v602 = vld [vmem:[#allocation7 + $0x300] sm:$0xff]
    %v603 = vld [vmem:[#allocation7 + $0x308] sm:$0xff]
    %v604 = vld [vmem:[#allocation7 + $0x310] sm:$0xff]
    %v605 = vld [vmem:[#allocation7 + $0x318] sm:$0xff]
    %v606 = vld [vmem:[#allocation7 + $0x320] sm:$0xff]
    %v607 = vld [vmem:[#allocation7 + $0x328] sm:$0xff]
    %v608 = vld [vmem:[#allocation7 + $0x330] sm:$0xff]
    %v609 = vld [vmem:[#allocation7 + $0x338] sm:$0xff]
    %v610 = vld [vmem:[#allocation7 + $0x340] sm:$0xff]
    %v611 = vld [vmem:[#allocation7 + $0x348] sm:$0xff]
    %v612 = vld [vmem:[#allocation7 + $0x350] sm:$0xff]
    %v613 = vld [vmem:[#allocation7 + $0x358] sm:$0xff]
    %v614 = vld [vmem:[#allocation7 + $0x360] sm:$0xff]
    %v615 = vld [vmem:[#allocation7 + $0x368] sm:$0xff]
    %v616 = vld [vmem:[#allocation7 + $0x370] sm:$0xff]
    %v617 = vld [vmem:[#allocation7 + $0x378] sm:$0xff]
    %v618 = vld [vmem:[#allocation7 + $0x380] sm:$0xff]
    %v619 = vld [vmem:[#allocation7 + $0x388] sm:$0xff]
    %v620 = vld [vmem:[#allocation7 + $0x390] sm:$0xff]
    %v621 = vld [vmem:[#allocation7 + $0x398] sm:$0xff]
    %v622 = vld [vmem:[#allocation7 + $0x3a0] sm:$0xff]
    %v623 = vld [vmem:[#allocation7 + $0x3a8] sm:$0xff]
    %v624 = vld [vmem:[#allocation7 + $0x3b0] sm:$0xff]
    %v625 = vld [vmem:[#allocation7 + $0x3b8] sm:$0xff]
    %v626 = vld [vmem:[#allocation7 + $0x3c0] sm:$0xff]
    %v627 = vld [vmem:[#allocation7 + $0x3c8] sm:$0xff]
    %v628 = vld [vmem:[#allocation7 + $0x3d0] sm:$0xff]
    %v629 = vld [vmem:[#allocation7 + $0x3d8] sm:$0xff]
    %v630 = vld [vmem:[#allocation7 + $0x3e0] sm:$0xff]
    %v631 = vld [vmem:[#allocation7 + $0x3e8] sm:$0xff]
    %v632 = vld [vmem:[#allocation7 + $0x3f0] sm:$0xff]
    %v633 = vld [vmem:[#allocation7 + $0x3f8] sm:$0xff]
    %v634 = vld [vmem:[#allocation7 + $0x400] sm:$0xff]
    %v635 = vld [vmem:[#allocation7 + $0x408] sm:$0xff]
    %v636 = vld [vmem:[#allocation7 + $0x410] sm:$0xff]
    %v637 = vld [vmem:[#allocation7 + $0x418] sm:$0xff]
    %v638 = vld [vmem:[#allocation7 + $0x420] sm:$0xff]
    %v639 = vld [vmem:[#allocation7 + $0x428] sm:$0xff]
    %v640 = vld [vmem:[#allocation7 + $0x430] sm:$0xff]
    %v641 = vld [vmem:[#allocation7 + $0x438] sm:$0xff]
    %v642 = vld [vmem:[#allocation7 + $0x440] sm:$0xff]
    %v643 = vld [vmem:[#allocation7 + $0x448] sm:$0xff]
    %v644 = vld [vmem:[#allocation7 + $0x450] sm:$0xff]
    %v645 = vld [vmem:[#allocation7 + $0x458] sm:$0xff]
    %v646 = vld [vmem:[#allocation7 + $0x460] sm:$0xff]
    %v647 = vld [vmem:[#allocation7 + $0x468] sm:$0xff]
    %v648 = vld [vmem:[#allocation7 + $0x470] sm:$0xff]
    %v649 = vld [vmem:[#allocation7 + $0x478] sm:$0xff]
    %v650 = vld [vmem:[#allocation7 + $0x480] sm:$0xff]
    %v651 = vld [vmem:[#allocation7 + $0x488] sm:$0xff]
    %v652 = vld [vmem:[#allocation7 + $0x490] sm:$0xff]
    %v653 = vld [vmem:[#allocation7 + $0x498] sm:$0xff]
    %v654 = vld [vmem:[#allocation7 + $0x4a0] sm:$0xff]
    %v655 = vld [vmem:[#allocation7 + $0x4a8] sm:$0xff]
    %v656 = vld [vmem:[#allocation7 + $0x4b0] sm:$0xff]
    %v657 = vld [vmem:[#allocation7 + $0x4b8] sm:$0xff]
    %v658 = vld [vmem:[#allocation7 + $0x4c0] sm:$0xff]
    %v659 = vld [vmem:[#allocation7 + $0x4c8] sm:$0xff]
    %v660 = vld [vmem:[#allocation7 + $0x4d0] sm:$0xff]
    %v661 = vld [vmem:[#allocation7 + $0x4d8] sm:$0xff]
    %v662 = vld [vmem:[#allocation7 + $0x4e0] sm:$0xff]
    %v663 = vld [vmem:[#allocation7 + $0x4e8] sm:$0xff]
    %v664 = vld [vmem:[#allocation7 + $0x4f0] sm:$0xff]
    %v665 = vld [vmem:[#allocation7 + $0x4f8] sm:$0xff]
    %v666 = vld [vmem:[#allocation7 + $0x500] sm:$0xff]
    %v667 = vld [vmem:[#allocation7 + $0x508] sm:$0xff]
    %v668 = vld [vmem:[#allocation7 + $0x510] sm:$0xff]
    %v669 = vld [vmem:[#allocation7 + $0x518] sm:$0xff]
    %v670 = vld [vmem:[#allocation7 + $0x520] sm:$0xff]
    %v671 = vld [vmem:[#allocation7 + $0x528] sm:$0xff]
    %v672 = vld [vmem:[#allocation7 + $0x530] sm:$0xff]
    %v673 = vld [vmem:[#allocation7 + $0x538] sm:$0xff]
    %v674 = vld [vmem:[#allocation7 + $0x540] sm:$0xff]
    %v675 = vld [vmem:[#allocation7 + $0x548] sm:$0xff]
    %v676 = vld [vmem:[#allocation7 + $0x550] sm:$0xff]
    %v677 = vld [vmem:[#allocation7 + $0x558] sm:$0xff]
    %v678 = vld [vmem:[#allocation7 + $0x560] sm:$0xff]
    %v679 = vld [vmem:[#allocation7 + $0x568] sm:$0xff]
    %v680 = vld [vmem:[#allocation7 + $0x570] sm:$0xff]
    %v681 = vld [vmem:[#allocation7 + $0x578] sm:$0xff]
    %v682 = vld [vmem:[#allocation7 + $0x580] sm:$0xff]
    %v683 = vld [vmem:[#allocation7 + $0x588] sm:$0xff]
    %v684 = vld [vmem:[#allocation7 + $0x590] sm:$0xff]
    %v685 = vld [vmem:[#allocation7 + $0x598] sm:$0xff]
    %v686 = vld [vmem:[#allocation7 + $0x5a0] sm:$0xff]
    %v687 = vld [vmem:[#allocation7 + $0x5a8] sm:$0xff]
    %v688 = vld [vmem:[#allocation7 + $0x5b0] sm:$0xff]
    %v689 = vld [vmem:[#allocation7 + $0x5b8] sm:$0xff]
    %v690 = vld [vmem:[#allocation7 + $0x5c0] sm:$0xff]
    %v691 = vld [vmem:[#allocation7 + $0x5c8] sm:$0xff]
    %v692 = vld [vmem:[#allocation7 + $0x5d0] sm:$0xff]
    %v693 = vld [vmem:[#allocation7 + $0x5d8] sm:$0xff]
    %v694 = vld [vmem:[#allocation7 + $0x5e0] sm:$0xff]
    %v695 = vld [vmem:[#allocation7 + $0x5e8] sm:$0xff]
    %v696 = vld [vmem:[#allocation7 + $0x5f0] sm:$0xff]
    %v697 = vld [vmem:[#allocation7 + $0x5f8] sm:$0xff]
    %v698 = vld [vmem:[#allocation7 + $0x600] sm:$0xff]
    %v699 = vld [vmem:[#allocation7 + $0x608] sm:$0xff]
    %v700 = vld [vmem:[#allocation7 + $0x610] sm:$0xff]
    %v701 = vld [vmem:[#allocation7 + $0x618] sm:$0xff]
    %v702 = vld [vmem:[#allocation7 + $0x620] sm:$0xff]
    %v703 = vld [vmem:[#allocation7 + $0x628] sm:$0xff]
    %v704 = vld [vmem:[#allocation7 + $0x630] sm:$0xff]
    %v705 = vld [vmem:[#allocation7 + $0x638] sm:$0xff]
    %v706 = vld [vmem:[#allocation7 + $0x640] sm:$0xff]
    %v707 = vld [vmem:[#allocation7 + $0x648] sm:$0xff]
    %v708 = vld [vmem:[#allocation7 + $0x650] sm:$0xff]
    %v709 = vld [vmem:[#allocation7 + $0x658] sm:$0xff]
    %v710 = vld [vmem:[#allocation7 + $0x660] sm:$0xff]
    %v711 = vld [vmem:[#allocation7 + $0x668] sm:$0xff]
    %v712 = vld [vmem:[#allocation7 + $0x670] sm:$0xff]
    %v713 = vld [vmem:[#allocation7 + $0x678] sm:$0xff]
    %v714 = vld [vmem:[#allocation7 + $0x680] sm:$0xff]
    %v715 = vld [vmem:[#allocation7 + $0x688] sm:$0xff]
    %v716 = vld [vmem:[#allocation7 + $0x690] sm:$0xff]
    %v717 = vld [vmem:[#allocation7 + $0x698] sm:$0xff]
    %v718 = vld [vmem:[#allocation7 + $0x6a0] sm:$0xff]
    %v719 = vld [vmem:[#allocation7 + $0x6a8] sm:$0xff]
    %v720 = vld [vmem:[#allocation7 + $0x6b0] sm:$0xff]
    %v721 = vld [vmem:[#allocation7 + $0x6b8] sm:$0xff]
    %v722 = vld [vmem:[#allocation7 + $0x6c0] sm:$0xff]
    %v723 = vld [vmem:[#allocation7 + $0x6c8] sm:$0xff]
    %v724 = vld [vmem:[#allocation7 + $0x6d0] sm:$0xff]
    %v725 = vld [vmem:[#allocation7 + $0x6d8] sm:$0xff]
    %v726 = vld [vmem:[#allocation7 + $0x6e0] sm:$0xff]
    %v727 = vld [vmem:[#allocation7 + $0x6e8] sm:$0xff]
    %v728 = vld [vmem:[#allocation7 + $0x6f0] sm:$0xff]
    %v729 = vld [vmem:[#allocation7 + $0x6f8] sm:$0xff]
    %v730 = vld [vmem:[#allocation7 + $0x700] sm:$0xff]
    %v731 = vld [vmem:[#allocation7 + $0x708] sm:$0xff]
    %v732 = vld [vmem:[#allocation7 + $0x710] sm:$0xff]
    %v733 = vld [vmem:[#allocation7 + $0x718] sm:$0xff]
    %v734 = vld [vmem:[#allocation7 + $0x720] sm:$0xff]
    %v735 = vld [vmem:[#allocation7 + $0x728] sm:$0xff]
    %v736 = vld [vmem:[#allocation7 + $0x730] sm:$0xff]
    %v737 = vld [vmem:[#allocation7 + $0x738] sm:$0xff]
    %v738 = vld [vmem:[#allocation7 + $0x740] sm:$0xff]
    %v739 = vld [vmem:[#allocation7 + $0x748] sm:$0xff]
    %v740 = vld [vmem:[#allocation7 + $0x750] sm:$0xff]
    %v741 = vld [vmem:[#allocation7 + $0x758] sm:$0xff]
    %v742 = vld [vmem:[#allocation7 + $0x760] sm:$0xff]
    %v743 = vld [vmem:[#allocation7 + $0x768] sm:$0xff]
    %v744 = vld [vmem:[#allocation7 + $0x770] sm:$0xff]
    %v745 = vld [vmem:[#allocation7 + $0x778] sm:$0xff]
    %v746 = vld [vmem:[#allocation7 + $0x780] sm:$0xff]
    %v747 = vld [vmem:[#allocation7 + $0x788] sm:$0xff]
    %v748 = vld [vmem:[#allocation7 + $0x790] sm:$0xff]
    %v749 = vld [vmem:[#allocation7 + $0x798] sm:$0xff]
    %v750 = vld [vmem:[#allocation7 + $0x7a0] sm:$0xff]
    %v751 = vld [vmem:[#allocation7 + $0x7a8] sm:$0xff]
    %v752 = vld [vmem:[#allocation7 + $0x7b0] sm:$0xff]
    %v753 = vld [vmem:[#allocation7 + $0x7b8] sm:$0xff]
    %v754 = vld [vmem:[#allocation7 + $0x7c0] sm:$0xff]
    %v755 = vld [vmem:[#allocation7 + $0x7c8] sm:$0xff]
    %v756 = vld [vmem:[#allocation7 + $0x7d0] sm:$0xff]
    %v757 = vld [vmem:[#allocation7 + $0x7d8] sm:$0xff]
    %v758 = vld [vmem:[#allocation7 + $0x7e0] sm:$0xff]
    %v759 = vld [vmem:[#allocation7 + $0x7e8] sm:$0xff]
    %v760 = vld [vmem:[#allocation7 + $0x7f0] sm:$0xff]
    %v761 = vld [vmem:[#allocation7 + $0x7f8] sm:$0xff]
    %v762 = vld [vmem:[#allocation7 + $0x800] sm:$0xff]
    %v763 = vld [vmem:[#allocation7 + $0x808] sm:$0xff]
    %v764 = vld [vmem:[#allocation7 + $0x810] sm:$0xff]
    %v765 = vld [vmem:[#allocation7 + $0x818] sm:$0xff]
    %v766 = vld [vmem:[#allocation7 + $0x820] sm:$0xff]
    %v767 = vld [vmem:[#allocation7 + $0x828] sm:$0xff]
    %v768 = vld [vmem:[#allocation7 + $0x830] sm:$0xff]
    %v769 = vld [vmem:[#allocation7 + $0x838] sm:$0xff]
    %v770 = vld [vmem:[#allocation7 + $0x840] sm:$0xff]
    %v771 = vld [vmem:[#allocation7 + $0x848] sm:$0xff]
    %v772 = vld [vmem:[#allocation7 + $0x850] sm:$0xff]
    %v773 = vld [vmem:[#allocation7 + $0x858] sm:$0xff]
    %v774 = vld [vmem:[#allocation7 + $0x860] sm:$0xff]
    %v775 = vld [vmem:[#allocation7 + $0x868] sm:$0xff]
    %v776 = vld [vmem:[#allocation7 + $0x870] sm:$0xff]
    %v777 = vld [vmem:[#allocation7 + $0x878] sm:$0xff]
    %v778 = vld [vmem:[#allocation7 + $0x880] sm:$0xff]
    %v779 = vld [vmem:[#allocation7 + $0x888] sm:$0xff]
    %v780 = vld [vmem:[#allocation7 + $0x890] sm:$0xff]
    %v781 = vld [vmem:[#allocation7 + $0x898] sm:$0xff]
    %v782 = vld [vmem:[#allocation7 + $0x8a0] sm:$0xff]
    %v783 = vld [vmem:[#allocation7 + $0x8a8] sm:$0xff]
    %v784 = vld [vmem:[#allocation7 + $0x8b0] sm:$0xff]
    %v785 = vld [vmem:[#allocation7 + $0x8b8] sm:$0xff]
    %v786 = vld [vmem:[#allocation7 + $0x8c0] sm:$0xff]
    %v787 = vld [vmem:[#allocation7 + $0x8c8] sm:$0xff]
    %v788 = vld [vmem:[#allocation7 + $0x8d0] sm:$0xff]
    %v789 = vld [vmem:[#allocation7 + $0x8d8] sm:$0xff]
    %v790 = vld [vmem:[#allocation7 + $0x8e0] sm:$0xff]
    %v791 = vld [vmem:[#allocation7 + $0x8e8] sm:$0xff]
    %v792 = vld [vmem:[#allocation7 + $0x8f0] sm:$0xff]
    %v793 = vld [vmem:[#allocation7 + $0x8f8] sm:$0xff]
    %v794 = vld [vmem:[#allocation7 + $0x900] sm:$0xff]
    %v795 = vld [vmem:[#allocation7 + $0x908] sm:$0xff]
    %v796 = vld [vmem:[#allocation7 + $0x910] sm:$0xff]
    %v797 = vld [vmem:[#allocation7 + $0x918] sm:$0xff]
    %v798 = vld [vmem:[#allocation7 + $0x920] sm:$0xff]
    %v799 = vld [vmem:[#allocation7 + $0x928] sm:$0xff]
    %v800 = vld [vmem:[#allocation7 + $0x930] sm:$0xff]
    %v801 = vld [vmem:[#allocation7 + $0x938] sm:$0xff]
    %v802 = vld [vmem:[#allocation7 + $0x940] sm:$0xff]
    %v803 = vld [vmem:[#allocation7 + $0x948] sm:$0xff]
    %v804 = vld [vmem:[#allocation7 + $0x950] sm:$0xff]
    %v805 = vld [vmem:[#allocation7 + $0x958] sm:$0xff]
    %v806 = vld [vmem:[#allocation7 + $0x960] sm:$0xff]
    %v807 = vld [vmem:[#allocation7 + $0x968] sm:$0xff]
    %v808 = vld [vmem:[#allocation7 + $0x970] sm:$0xff]
    %v809 = vld [vmem:[#allocation7 + $0x978] sm:$0xff]
    %v810 = vld [vmem:[#allocation7 + $0x980] sm:$0xff]
    %v811 = vld [vmem:[#allocation7 + $0x988] sm:$0xff]
    %v812 = vld [vmem:[#allocation7 + $0x990] sm:$0xff]
    %v813 = vld [vmem:[#allocation7 + $0x998] sm:$0xff]
    %v814 = vld [vmem:[#allocation7 + $0x9a0] sm:$0xff]
    %v815 = vld [vmem:[#allocation7 + $0x9a8] sm:$0xff]
    %v816 = vld [vmem:[#allocation7 + $0x9b0] sm:$0xff]
    %v817 = vld [vmem:[#allocation7 + $0x9b8] sm:$0xff]
    %v818 = vld [vmem:[#allocation7 + $0x9c0] sm:$0xff]
    %v819 = vld [vmem:[#allocation7 + $0x9c8] sm:$0xff]
    %v820 = vld [vmem:[#allocation7 + $0x9d0] sm:$0xff]
    %v821 = vld [vmem:[#allocation7 + $0x9d8] sm:$0xff]
    %v822 = vld [vmem:[#allocation7 + $0x9e0] sm:$0xff]
    %v823 = vld [vmem:[#allocation7 + $0x9e8] sm:$0xff]
    %v824 = vld [vmem:[#allocation7 + $0x9f0] sm:$0xff]
    %v825 = vld [vmem:[#allocation7 + $0x9f8] sm:$0xff]
    %v826 = vld [vmem:[#allocation7 + $0xa00] sm:$0xff]
    %v827 = vld [vmem:[#allocation7 + $0xa08] sm:$0xff]
    %v828 = vld [vmem:[#allocation7 + $0xa10] sm:$0xff]
    %v829 = vld [vmem:[#allocation7 + $0xa18] sm:$0xff]
    %v830 = vld [vmem:[#allocation7 + $0xa20] sm:$0xff]
    %v831 = vld [vmem:[#allocation7 + $0xa28] sm:$0xff]
    %v832 = vld [vmem:[#allocation7 + $0xa30] sm:$0xff]
    %v833 = vld [vmem:[#allocation7 + $0xa38] sm:$0xff]
    %v834 = vld [vmem:[#allocation7 + $0xa40] sm:$0xff]
    %v835 = vld [vmem:[#allocation7 + $0xa48] sm:$0xff]
    %v836 = vld [vmem:[#allocation7 + $0xa50] sm:$0xff]
    %v837 = vld [vmem:[#allocation7 + $0xa58] sm:$0xff]
    %v838 = vld [vmem:[#allocation7 + $0xa60] sm:$0xff]
    %v839 = vld [vmem:[#allocation7 + $0xa68] sm:$0xff]
    %v840 = vld [vmem:[#allocation7 + $0xa70] sm:$0xff]
    %v841 = vld [vmem:[#allocation7 + $0xa78] sm:$0xff]
    %v842 = vld [vmem:[#allocation7 + $0xa80] sm:$0xff]
    %v843 = vld [vmem:[#allocation7 + $0xa88] sm:$0xff]
    %v844 = vld [vmem:[#allocation7 + $0xa90] sm:$0xff]
    %v845 = vld [vmem:[#allocation7 + $0xa98] sm:$0xff]
    %v846 = vld [vmem:[#allocation7 + $0xaa0] sm:$0xff]
    %v847 = vld [vmem:[#allocation7 + $0xaa8] sm:$0xff]
    %v848 = vld [vmem:[#allocation7 + $0xab0] sm:$0xff]
    %v849 = vld [vmem:[#allocation7 + $0xab8] sm:$0xff]
    %v850 = vld [vmem:[#allocation7 + $0xac0] sm:$0xff]
    %v851 = vld [vmem:[#allocation7 + $0xac8] sm:$0xff]
    %v852 = vld [vmem:[#allocation7 + $0xad0] sm:$0xff]
    %v853 = vld [vmem:[#allocation7 + $0xad8] sm:$0xff]
    %v854 = vld [vmem:[#allocation7 + $0xae0] sm:$0xff]
    %v855 = vld [vmem:[#allocation7 + $0xae8] sm:$0xff]
    %v856 = vld [vmem:[#allocation7 + $0xaf0] sm:$0xff]
    %v857 = vld [vmem:[#allocation7 + $0xaf8] sm:$0xff]
    %v858 = vld [vmem:[#allocation7 + $0xb00] sm:$0xff]
    %v859 = vld [vmem:[#allocation7 + $0xb08] sm:$0xff]
    %v860 = vld [vmem:[#allocation7 + $0xb10] sm:$0xff]
    %v861 = vld [vmem:[#allocation7 + $0xb18] sm:$0xff]
    %v862 = vld [vmem:[#allocation7 + $0xb20] sm:$0xff]
    %v863 = vld [vmem:[#allocation7 + $0xb28] sm:$0xff]
    %v864 = vld [vmem:[#allocation7 + $0xb30] sm:$0xff]
    %v865 = vld [vmem:[#allocation7 + $0xb38] sm:$0xff]
    %v866 = vld [vmem:[#allocation7 + $0xb40] sm:$0xff]
    %v867 = vld [vmem:[#allocation7 + $0xb48] sm:$0xff]
    %v868 = vld [vmem:[#allocation7 + $0xb50] sm:$0xff]
    %v869 = vld [vmem:[#allocation7 + $0xb58] sm:$0xff]
    %v870 = vld [vmem:[#allocation7 + $0xb60] sm:$0xff]
    %v871 = vld [vmem:[#allocation7 + $0xb68] sm:$0xff]
    %v872 = vld [vmem:[#allocation7 + $0xb70] sm:$0xff]
    %v873 = vld [vmem:[#allocation7 + $0xb78] sm:$0xff]
    %v874 = vld [vmem:[#allocation7 + $0xb80] sm:$0xff]
    %v875 = vld [vmem:[#allocation7 + $0xb88] sm:$0xff]
    %v876 = vld [vmem:[#allocation7 + $0xb90] sm:$0xff]
    %v877 = vld [vmem:[#allocation7 + $0xb98] sm:$0xff]
    %v878 = vld [vmem:[#allocation7 + $0xba0] sm:$0xff]
    %v879 = vld [vmem:[#allocation7 + $0xba8] sm:$0xff]
    %v880 = vld [vmem:[#allocation7 + $0xbb0] sm:$0xff]
    %v881 = vld [vmem:[#allocation7 + $0xbb8] sm:$0xff]
    %v882 = vld [vmem:[#allocation7 + $0xbc0] sm:$0xff]
    %v883 = vld [vmem:[#allocation7 + $0xbc8] sm:$0xff]
    %v884 = vld [vmem:[#allocation7 + $0xbd0] sm:$0xff]
    %v885 = vld [vmem:[#allocation7 + $0xbd8] sm:$0xff]
    %v886 = vld [vmem:[#allocation7 + $0xbe0] sm:$0xff]
    %v887 = vld [vmem:[#allocation7 + $0xbe8] sm:$0xff]
    %v888 = vld [vmem:[#allocation7 + $0xbf0] sm:$0xff]
    %v889 = vld [vmem:[#allocation7 + $0xbf8] sm:$0xff]
    %v890 = vld [vmem:[#allocation7 + $0xc00] sm:$0xff]
    %v891 = vld [vmem:[#allocation7 + $0xc08] sm:$0xff]
    %v892 = vld [vmem:[#allocation7 + $0xc10] sm:$0xff]
    %v893 = vld [vmem:[#allocation7 + $0xc18] sm:$0xff]
    %v894 = vld [vmem:[#allocation7 + $0xc20] sm:$0xff]
    %v895 = vld [vmem:[#allocation7 + $0xc28] sm:$0xff]
    %v896 = vld [vmem:[#allocation7 + $0xc30] sm:$0xff]
    %v897 = vld [vmem:[#allocation7 + $0xc38] sm:$0xff]
    %v898 = vld [vmem:[#allocation7 + $0xc40] sm:$0xff]
    %v899 = vld [vmem:[#allocation7 + $0xc48] sm:$0xff]
    %v900 = vld [vmem:[#allocation7 + $0xc50] sm:$0xff]
    %v901 = vld [vmem:[#allocation7 + $0xc58] sm:$0xff]
    %v902 = vld [vmem:[#allocation7 + $0xc60] sm:$0xff]
    %v903 = vld [vmem:[#allocation7 + $0xc68] sm:$0xff]
    %v904 = vld [vmem:[#allocation7 + $0xc70] sm:$0xff]
    %v905 = vld [vmem:[#allocation7 + $0xc78] sm:$0xff]
    %v906 = vld [vmem:[#allocation7 + $0xc80] sm:$0xff]
    %v907 = vld [vmem:[#allocation7 + $0xc88] sm:$0xff]
    %v908 = vld [vmem:[#allocation7 + $0xc90] sm:$0xff]
    %v909 = vld [vmem:[#allocation7 + $0xc98] sm:$0xff]
    %v910 = vld [vmem:[#allocation7 + $0xca0] sm:$0xff]
    %v911 = vld [vmem:[#allocation7 + $0xca8] sm:$0xff]
    %v912 = vld [vmem:[#allocation7 + $0xcb0] sm:$0xff]
    %v913 = vld [vmem:[#allocation7 + $0xcb8] sm:$0xff]
    %v914 = vld [vmem:[#allocation7 + $0xcc0] sm:$0xff]
    %v915 = vld [vmem:[#allocation7 + $0xcc8] sm:$0xff]
    %v916 = vld [vmem:[#allocation7 + $0xcd0] sm:$0xff]
    %v917 = vld [vmem:[#allocation7 + $0xcd8] sm:$0xff]
    %v918 = vld [vmem:[#allocation7 + $0xce0] sm:$0xff]
    %v919 = vld [vmem:[#allocation7 + $0xce8] sm:$0xff]
    %v920 = vld [vmem:[#allocation7 + $0xcf0] sm:$0xff]
    %v921 = vld [vmem:[#allocation7 + $0xcf8] sm:$0xff]
    %v922 = vld [vmem:[#allocation7 + $0xd00] sm:$0xff]
    %v923 = vld [vmem:[#allocation7 + $0xd08] sm:$0xff]
    %v924 = vld [vmem:[#allocation7 + $0xd10] sm:$0xff]
    %v925 = vld [vmem:[#allocation7 + $0xd18] sm:$0xff]
    %v926 = vld [vmem:[#allocation7 + $0xd20] sm:$0xff]
    %v927 = vld [vmem:[#allocation7 + $0xd28] sm:$0xff]
    %v928 = vld [vmem:[#allocation7 + $0xd30] sm:$0xff]
    %v929 = vld [vmem:[#allocation7 + $0xd38] sm:$0xff]
    %v930 = vld [vmem:[#allocation7 + $0xd40] sm:$0xff]
    %v931 = vld [vmem:[#allocation7 + $0xd48] sm:$0xff]
    %v932 = vld [vmem:[#allocation7 + $0xd50] sm:$0xff]
    %v933 = vld [vmem:[#allocation7 + $0xd58] sm:$0xff]
    %v934 = vld [vmem:[#allocation7 + $0xd60] sm:$0xff]
    %v935 = vld [vmem:[#allocation7 + $0xd68] sm:$0xff]
    %v936 = vld [vmem:[#allocation7 + $0xd70] sm:$0xff]
    %v937 = vld [vmem:[#allocation7 + $0xd78] sm:$0xff]
    %v938 = vld [vmem:[#allocation7 + $0xd80] sm:$0xff]
    %v939 = vld [vmem:[#allocation7 + $0xd88] sm:$0xff]
    %v940 = vld [vmem:[#allocation7 + $0xd90] sm:$0xff]
    %v941 = vld [vmem:[#allocation7 + $0xd98] sm:$0xff]
    %v942 = vld [vmem:[#allocation7 + $0xda0] sm:$0xff]
    %v943 = vld [vmem:[#allocation7 + $0xda8] sm:$0xff]
    %v944 = vld [vmem:[#allocation7 + $0xdb0] sm:$0xff]
    %v945 = vld [vmem:[#allocation7 + $0xdb8] sm:$0xff]
    %v946 = vld [vmem:[#allocation7 + $0xdc0] sm:$0xff]
    %v947 = vld [vmem:[#allocation7 + $0xdc8] sm:$0xff]
    %v948 = vld [vmem:[#allocation7 + $0xdd0] sm:$0xff]
    %v949 = vld [vmem:[#allocation7 + $0xdd8] sm:$0xff]
    %v950 = vld [vmem:[#allocation7 + $0xde0] sm:$0xff]
    %v951 = vld [vmem:[#allocation7 + $0xde8] sm:$0xff]
    %v952 = vld [vmem:[#allocation7 + $0xdf0] sm:$0xff]
    %v953 = vld [vmem:[#allocation7 + $0xdf8] sm:$0xff]
    %v954 = vld [vmem:[#allocation7 + $0xe00] sm:$0xff]
    %v955 = vld [vmem:[#allocation7 + $0xe08] sm:$0xff]
    %v956 = vld [vmem:[#allocation7 + $0xe10] sm:$0xff]
    %v957 = vld [vmem:[#allocation7 + $0xe18] sm:$0xff]
    %v958 = vld [vmem:[#allocation7 + $0xe20] sm:$0xff]
    %v959 = vld [vmem:[#allocation7 + $0xe28] sm:$0xff]
    %v960 = vld [vmem:[#allocation7 + $0xe30] sm:$0xff]
    %v961 = vld [vmem:[#allocation7 + $0xe38] sm:$0xff]
    %v962 = vld [vmem:[#allocation7 + $0xe40] sm:$0xff]
    %v963 = vld [vmem:[#allocation7 + $0xe48] sm:$0xff]
    %v964 = vld [vmem:[#allocation7 + $0xe50] sm:$0xff]
    %v965 = vld [vmem:[#allocation7 + $0xe58] sm:$0xff]
    %v966 = vld [vmem:[#allocation7 + $0xe60] sm:$0xff]
    %v967 = vld [vmem:[#allocation7 + $0xe68] sm:$0xff]
    %v968 = vld [vmem:[#allocation7 + $0xe70] sm:$0xff]
    %v969 = vld [vmem:[#allocation7 + $0xe78] sm:$0xff]
    %v970 = vld [vmem:[#allocation7 + $0xe80] sm:$0xff]
    %v971 = vld [vmem:[#allocation7 + $0xe88] sm:$0xff]
    %v972 = vld [vmem:[#allocation7 + $0xe90] sm:$0xff]
    %v973 = vld [vmem:[#allocation7 + $0xe98] sm:$0xff]
    %v974 = vld [vmem:[#allocation7 + $0xea0] sm:$0xff]
    %v975 = vld [vmem:[#allocation7 + $0xea8] sm:$0xff]
    %v976 = vld [vmem:[#allocation7 + $0xeb0] sm:$0xff]
    %v977 = vld [vmem:[#allocation7 + $0xeb8] sm:$0xff]
    %v978 = vld [vmem:[#allocation7 + $0xec0] sm:$0xff]
    %v979 = vld [vmem:[#allocation7 + $0xec8] sm:$0xff]
    %v980 = vld [vmem:[#allocation7 + $0xed0] sm:$0xff]
    %v981 = vld [vmem:[#allocation7 + $0xed8] sm:$0xff]
    %v982 = vld [vmem:[#allocation7 + $0xee0] sm:$0xff]
    %v983 = vld [vmem:[#allocation7 + $0xee8] sm:$0xff]
    %v984 = vld [vmem:[#allocation7 + $0xef0] sm:$0xff]
    %v985 = vld [vmem:[#allocation7 + $0xef8] sm:$0xff]
    %v986 = vld [vmem:[#allocation7 + $0xf00] sm:$0xff]
    %v987 = vld [vmem:[#allocation7 + $0xf08] sm:$0xff]
    %v988 = vld [vmem:[#allocation7 + $0xf10] sm:$0xff]
    %v989 = vld [vmem:[#allocation7 + $0xf18] sm:$0xff]
    %v990 = vld [vmem:[#allocation7 + $0xf20] sm:$0xff]
    %v991 = vld [vmem:[#allocation7 + $0xf28] sm:$0xff]
    %v992 = vld [vmem:[#allocation7 + $0xf30] sm:$0xff]
    %v993 = vld [vmem:[#allocation7 + $0xf38] sm:$0xff]
    %v994 = vld [vmem:[#allocation7 + $0xf40] sm:$0xff]
    %v995 = vld [vmem:[#allocation7 + $0xf48] sm:$0xff]
    %v996 = vld [vmem:[#allocation7 + $0xf50] sm:$0xff]
    %v997 = vld [vmem:[#allocation7 + $0xf58] sm:$0xff]
    %v998 = vld [vmem:[#allocation7 + $0xf60] sm:$0xff]
    %v999 = vld [vmem:[#allocation7 + $0xf68] sm:$0xff]
    %v1000 = vld [vmem:[#allocation7 + $0xf70] sm:$0xff]
    %v1001 = vld [vmem:[#allocation7 + $0xf78] sm:$0xff]
    %v1002 = vld [vmem:[#allocation7 + $0xf80] sm:$0xff]
    %v1003 = vld [vmem:[#allocation7 + $0xf88] sm:$0xff]
    %v1004 = vld [vmem:[#allocation7 + $0xf90] sm:$0xff]
    %v1005 = vld [vmem:[#allocation7 + $0xf98] sm:$0xff]
    %v1006 = vld [vmem:[#allocation7 + $0xfa0] sm:$0xff]
    %v1007 = vld [vmem:[#allocation7 + $0xfa8] sm:$0xff]
    %v1008 = vld [vmem:[#allocation7 + $0xfb0] sm:$0xff]
    %v1009 = vld [vmem:[#allocation7 + $0xfb8] sm:$0xff]
    %v1010 = vld [vmem:[#allocation7 + $0xfc0] sm:$0xff]
    %v1011 = vld [vmem:[#allocation7 + $0xfc8] sm:$0xff]
    %v1012 = vld [vmem:[#allocation7 + $0xfd0] sm:$0xff]
    %v1013 = vld [vmem:[#allocation7 + $0xfd8] sm:$0xff]
    %v1014 = vld [vmem:[#allocation7 + $0xfe0] sm:$0xff]
    %v1015 = vld [vmem:[#allocation7 + $0xfe8] sm:$0xff]
    %v1016 = vld [vmem:[#allocation7 + $0xff0] sm:$0xff]
    %v1017 = vld [vmem:[#allocation7 + $0xff8] sm:$0xff]
    %v1018 = vld [vmem:[#allocation7 + $0x1000] sm:$0xff]
    %v1019 = vld [vmem:[#allocation7 + $0x1008] sm:$0xff]
    %v1020 = vld [vmem:[#allocation7 + $0x1010] sm:$0xff]
    %v1021 = vld [vmem:[#allocation7 + $0x1018] sm:$0xff]
    %v1022 = vld [vmem:[#allocation7 + $0x1020] sm:$0xff]
    %v1023 = vld [vmem:[#allocation7 + $0x1028] sm:$0xff]
    %v1024 = vld [vmem:[#allocation7 + $0x1030] sm:$0xff]
    %v1025 = vld [vmem:[#allocation7 + $0x1038] sm:$0xff]
    %v1026 = vld [vmem:[#allocation7 + $0x1040] sm:$0xff]
    %v1027 = vld [vmem:[#allocation7 + $0x1048] sm:$0xff]
    %v1028 = vld [vmem:[#allocation7 + $0x1050] sm:$0xff]
    %v1029 = vld [vmem:[#allocation7 + $0x1058] sm:$0xff]
    %v1030 = vld [vmem:[#allocation7 + $0x1060] sm:$0xff]
    %v1031 = vld [vmem:[#allocation7 + $0x1068] sm:$0xff]
    %v1032 = vld [vmem:[#allocation7 + $0x1070] sm:$0xff]
    %v1033 = vld [vmem:[#allocation7 + $0x1078] sm:$0xff]
    %v1034 = vld [vmem:[#allocation7 + $0x1080] sm:$0xff]
    %v1035 = vld [vmem:[#allocation7 + $0x1088] sm:$0xff]
    %v1036 = vld [vmem:[#allocation7 + $0x1090] sm:$0xff]
    %v1037 = vld [vmem:[#allocation7 + $0x1098] sm:$0xff]
    %v1038 = vld [vmem:[#allocation7 + $0x10a0] sm:$0xff]
    %v1039 = vld [vmem:[#allocation7 + $0x10a8] sm:$0xff]
    %v1040 = vld [vmem:[#allocation7 + $0x10b0] sm:$0xff]
    %v1041 = vld [vmem:[#allocation7 + $0x10b8] sm:$0xff]
    %v1042 = vld [vmem:[#allocation7 + $0x10c0] sm:$0xff]
    %v1043 = vld [vmem:[#allocation7 + $0x10c8] sm:$0xff]
    %v1044 = vld [vmem:[#allocation7 + $0x10d0] sm:$0xff]
    %v1045 = vld [vmem:[#allocation7 + $0x10d8] sm:$0xff]
    %v1046 = vld [vmem:[#allocation7 + $0x10e0] sm:$0xff]
    %v1047 = vld [vmem:[#allocation7 + $0x10e8] sm:$0xff]
    %v1048 = vld [vmem:[#allocation7 + $0x10f0] sm:$0xff]
    %v1049 = vld [vmem:[#allocation7 + $0x10f8] sm:$0xff]
    %v1050 = vld [vmem:[#allocation7 + $0x1100] sm:$0xff]
    %v1051 = vld [vmem:[#allocation7 + $0x1108] sm:$0xff]
    %v1052 = vld [vmem:[#allocation7 + $0x1110] sm:$0xff]
    %v1053 = vld [vmem:[#allocation7 + $0x1118] sm:$0xff]
    %v1054 = vld [vmem:[#allocation7 + $0x1120] sm:$0xff]
    %v1055 = vld [vmem:[#allocation7 + $0x1128] sm:$0xff]
    %v1056 = vld [vmem:[#allocation7 + $0x1130] sm:$0xff]
    %v1057 = vld [vmem:[#allocation7 + $0x1138] sm:$0xff]
    %v1058 = vld [vmem:[#allocation7 + $0x1140] sm:$0xff]
    %v1059 = vld [vmem:[#allocation7 + $0x1148] sm:$0xff]
    %v1060 = vld [vmem:[#allocation7 + $0x1150] sm:$0xff]
    %v1061 = vld [vmem:[#allocation7 + $0x1158] sm:$0xff]
    %v1062 = vld [vmem:[#allocation7 + $0x1160] sm:$0xff]
    %v1063 = vld [vmem:[#allocation7 + $0x1168] sm:$0xff]
    %v1064 = vld [vmem:[#allocation7 + $0x1170] sm:$0xff]
    %v1065 = vld [vmem:[#allocation7 + $0x1178] sm:$0xff]
    %v1066 = vld [vmem:[#allocation7 + $0x1180] sm:$0xff]
    %v1067 = vld [vmem:[#allocation7 + $0x1188] sm:$0xff]
    %v1068 = vld [vmem:[#allocation7 + $0x1190] sm:$0xff]
    %v1069 = vld [vmem:[#allocation7 + $0x1198] sm:$0xff]
    %v1070 = vld [vmem:[#allocation7 + $0x11a0] sm:$0xff]
    %v1071 = vld [vmem:[#allocation7 + $0x11a8] sm:$0xff]
    %v1072 = vld [vmem:[#allocation7 + $0x11b0] sm:$0xff]
    %v1073 = vld [vmem:[#allocation7 + $0x11b8] sm:$0xff]
    %v1074 = vld [vmem:[#allocation7 + $0x11c0] sm:$0xff]
    %v1075 = vld [vmem:[#allocation7 + $0x11c8] sm:$0xff]
    %v1076 = vld [vmem:[#allocation7 + $0x11d0] sm:$0xff]
    %v1077 = vld [vmem:[#allocation7 + $0x11d8] sm:$0xff]
    %v1078 = vld [vmem:[#allocation7 + $0x11e0] sm:$0xff]
    %v1079 = vld [vmem:[#allocation7 + $0x11e8] sm:$0xff]
    %v1080 = vld [vmem:[#allocation7 + $0x11f0] sm:$0xff]
    %v1081 = vld [vmem:[#allocation7 + $0x11f8] sm:$0xff]
    %v1082 = vld [vmem:[#allocation7 + $0x1200] sm:$0xff]
    %v1083 = vld [vmem:[#allocation7 + $0x1208] sm:$0xff]
    %v1084 = vld [vmem:[#allocation7 + $0x1210] sm:$0xff]
    %v1085 = vld [vmem:[#allocation7 + $0x1218] sm:$0xff]
    %v1086 = vld [vmem:[#allocation7 + $0x1220] sm:$0xff]
    %v1087 = vld [vmem:[#allocation7 + $0x1228] sm:$0xff]
    %v1088 = vld [vmem:[#allocation7 + $0x1230] sm:$0xff]
    %v1089 = vld [vmem:[#allocation7 + $0x1238] sm:$0xff]
    %v1090 = vld [vmem:[#allocation7 + $0x1240] sm:$0xff]
    %v1091 = vld [vmem:[#allocation7 + $0x1248] sm:$0xff]
    %v1092 = vld [vmem:[#allocation7 + $0x1250] sm:$0xff]
    %v1093 = vld [vmem:[#allocation7 + $0x1258] sm:$0xff]
    %v1094 = vld [vmem:[#allocation7 + $0x1260] sm:$0xff]
    %v1095 = vld [vmem:[#allocation7 + $0x1268] sm:$0xff]
    %v1096 = vld [vmem:[#allocation7 + $0x1270] sm:$0xff]
    %v1097 = vld [vmem:[#allocation7 + $0x1278] sm:$0xff]
    %v1098 = vld [vmem:[#allocation7 + $0x1280] sm:$0xff]
    %v1099 = vld [vmem:[#allocation7 + $0x1288] sm:$0xff]
    %v1100 = vld [vmem:[#allocation7 + $0x1290] sm:$0xff]
    %v1101 = vld [vmem:[#allocation7 + $0x1298] sm:$0xff]
    %v1102 = vld [vmem:[#allocation7 + $0x12a0] sm:$0xff]
    %v1103 = vld [vmem:[#allocation7 + $0x12a8] sm:$0xff]
    %v1104 = vld [vmem:[#allocation7 + $0x12b0] sm:$0xff]
    %v1105 = vld [vmem:[#allocation7 + $0x12b8] sm:$0xff]
    %v1106 = vld [vmem:[#allocation7 + $0x12c0] sm:$0xff]
    %v1107 = vld [vmem:[#allocation7 + $0x12c8] sm:$0xff]
    %v1108 = vld [vmem:[#allocation7 + $0x12d0] sm:$0xff]
    %v1109 = vld [vmem:[#allocation7 + $0x12d8] sm:$0xff]
    %v1110 = vld [vmem:[#allocation7 + $0x12e0] sm:$0xff]
    %v1111 = vld [vmem:[#allocation7 + $0x12e8] sm:$0xff]
    %v1112 = vld [vmem:[#allocation7 + $0x12f0] sm:$0xff]
    %v1113 = vld [vmem:[#allocation7 + $0x12f8] sm:$0xff]
    %v1114 = vld [vmem:[#allocation7 + $0x1300] sm:$0xff]
    %v1115 = vld [vmem:[#allocation7 + $0x1308] sm:$0xff]
    %v1116 = vld [vmem:[#allocation7 + $0x1310] sm:$0xff]
    %v1117 = vld [vmem:[#allocation7 + $0x1318] sm:$0xff]
    %v1118 = vld [vmem:[#allocation7 + $0x1320] sm:$0xff]
    %v1119 = vld [vmem:[#allocation7 + $0x1328] sm:$0xff]
    %v1120 = vld [vmem:[#allocation7 + $0x1330] sm:$0xff]
    %v1121 = vld [vmem:[#allocation7 + $0x1338] sm:$0xff]
    %v1122 = vld [vmem:[#allocation7 + $0x1340] sm:$0xff]
    %v1123 = vld [vmem:[#allocation7 + $0x1348] sm:$0xff]
    %v1124 = vld [vmem:[#allocation7 + $0x1350] sm:$0xff]
    %v1125 = vld [vmem:[#allocation7 + $0x1358] sm:$0xff]
    %v1126 = vld [vmem:[#allocation7 + $0x1360] sm:$0xff]
    %v1127 = vld [vmem:[#allocation7 + $0x1368] sm:$0xff]
    %v1128 = vld [vmem:[#allocation7 + $0x1370] sm:$0xff]
    %v1129 = vld [vmem:[#allocation7 + $0x1378] sm:$0xff]
    %v1130 = vld [vmem:[#allocation7 + $0x1380] sm:$0xff]
    %v1131 = vld [vmem:[#allocation7 + $0x1388] sm:$0xff]
    %v1132 = vld [vmem:[#allocation7 + $0x1390] sm:$0xff]
    %v1133 = vld [vmem:[#allocation7 + $0x1398] sm:$0xff]
    %v1134 = vld [vmem:[#allocation7 + $0x13a0] sm:$0xff]
    %v1135 = vld [vmem:[#allocation7 + $0x13a8] sm:$0xff]
    %v1136 = vld [vmem:[#allocation7 + $0x13b0] sm:$0xff]
    %v1137 = vld [vmem:[#allocation7 + $0x13b8] sm:$0xff]
    %v1138 = vld [vmem:[#allocation7 + $0x13c0] sm:$0xff]
    %v1139 = vld [vmem:[#allocation7 + $0x13c8] sm:$0xff]
    %v1140 = vld [vmem:[#allocation7 + $0x13d0] sm:$0xff]
    %v1141 = vld [vmem:[#allocation7 + $0x13d8] sm:$0xff]
    %v1142 = vld [vmem:[#allocation7 + $0x13e0] sm:$0xff]
    %v1143 = vld [vmem:[#allocation7 + $0x13e8] sm:$0xff]
    %v1144 = vld [vmem:[#allocation7 + $0x13f0] sm:$0xff]
    %v1145 = vld [vmem:[#allocation7 + $0x13f8] sm:$0xff]
    %v1146 = vld [vmem:[#allocation7 + $0x1400] sm:$0xff]
    %v1147 = vld [vmem:[#allocation7 + $0x1408] sm:$0xff]
    %v1148 = vld [vmem:[#allocation7 + $0x1410] sm:$0xff]
    %v1149 = vld [vmem:[#allocation7 + $0x1418] sm:$0xff]
    %v1150 = vld [vmem:[#allocation7 + $0x1420] sm:$0xff]
    %v1151 = vld [vmem:[#allocation7 + $0x1428] sm:$0xff]
    %v1152 = vld [vmem:[#allocation7 + $0x1430] sm:$0xff]
    %v1153 = vld [vmem:[#allocation7 + $0x1438] sm:$0xff]
    %v1154 = vld [vmem:[#allocation7 + $0x1440] sm:$0xff]
    %v1155 = vld [vmem:[#allocation7 + $0x1448] sm:$0xff]
    %v1156 = vld [vmem:[#allocation7 + $0x1450] sm:$0xff]
    %v1157 = vld [vmem:[#allocation7 + $0x1458] sm:$0xff]
    %v1158 = vld [vmem:[#allocation7 + $0x1460] sm:$0xff]
    %v1159 = vld [vmem:[#allocation7 + $0x1468] sm:$0xff]
    %v1160 = vld [vmem:[#allocation7 + $0x1470] sm:$0xff]
    %v1161 = vld [vmem:[#allocation7 + $0x1478] sm:$0xff]
    %v1162 = vld [vmem:[#allocation7 + $0x1480] sm:$0xff]
    %v1163 = vld [vmem:[#allocation7 + $0x1488] sm:$0xff]
    %v1164 = vld [vmem:[#allocation7 + $0x1490] sm:$0xff]
    %v1165 = vld [vmem:[#allocation7 + $0x1498] sm:$0xff]
    %v1166 = vld [vmem:[#allocation7 + $0x14a0] sm:$0xff]
    %v1167 = vld [vmem:[#allocation7 + $0x14a8] sm:$0xff]
    %v1168 = vld [vmem:[#allocation7 + $0x14b0] sm:$0xff]
    %v1169 = vld [vmem:[#allocation7 + $0x14b8] sm:$0xff]
    %v1170 = vld [vmem:[#allocation7 + $0x14c0] sm:$0xff]
    %v1171 = vld [vmem:[#allocation7 + $0x14c8] sm:$0xff]
    %v1172 = vld [vmem:[#allocation7 + $0x14d0] sm:$0xff]
    %v1173 = vld [vmem:[#allocation7 + $0x14d8] sm:$0xff]
    %v1174 = vld [vmem:[#allocation7 + $0x14e0] sm:$0xff]
    %v1175 = vld [vmem:[#allocation7 + $0x14e8] sm:$0xff]
    %v1176 = vld [vmem:[#allocation7 + $0x14f0] sm:$0xff]
    %v1177 = vld [vmem:[#allocation7 + $0x14f8] sm:$0xff]
    %v1178 = vld [vmem:[#allocation7 + $0x1500] sm:$0xff]
    %v1179 = vld [vmem:[#allocation7 + $0x1508] sm:$0xff]
    %v1180 = vld [vmem:[#allocation7 + $0x1510] sm:$0xff]
    %v1181 = vld [vmem:[#allocation7 + $0x1518] sm:$0xff]
    %v1182 = vld [vmem:[#allocation7 + $0x1520] sm:$0xff]
    %v1183 = vld [vmem:[#allocation7 + $0x1528] sm:$0xff]
    %v1184 = vld [vmem:[#allocation7 + $0x1530] sm:$0xff]
    %v1185 = vld [vmem:[#allocation7 + $0x1538] sm:$0xff]
    %v1186 = vld [vmem:[#allocation7 + $0x1540] sm:$0xff]
    %v1187 = vld [vmem:[#allocation7 + $0x1548] sm:$0xff]
    %v1188 = vld [vmem:[#allocation7 + $0x1550] sm:$0xff]
    %v1189 = vld [vmem:[#allocation7 + $0x1558] sm:$0xff]
    %v1190 = vld [vmem:[#allocation7 + $0x1560] sm:$0xff]
    %v1191 = vld [vmem:[#allocation7 + $0x1568] sm:$0xff]
    %v1192 = vld [vmem:[#allocation7 + $0x1570] sm:$0xff]
    %v1193 = vld [vmem:[#allocation7 + $0x1578] sm:$0xff]
    %v1194 = vld [vmem:[#allocation7 + $0x1580] sm:$0xff]
    %v1195 = vld [vmem:[#allocation7 + $0x1588] sm:$0xff]
    %v1196 = vld [vmem:[#allocation7 + $0x1590] sm:$0xff]
    %v1197 = vld [vmem:[#allocation7 + $0x1598] sm:$0xff]
    %v1198 = vld [vmem:[#allocation7 + $0x15a0] sm:$0xff]
    %v1199 = vld [vmem:[#allocation7 + $0x15a8] sm:$0xff]
    %v1200 = vld [vmem:[#allocation7 + $0x15b0] sm:$0xff]
    %v1201 = vld [vmem:[#allocation7 + $0x15b8] sm:$0xff]
    %v1202 = vld [vmem:[#allocation7 + $0x15c0] sm:$0xff]
    %v1203 = vld [vmem:[#allocation7 + $0x15c8] sm:$0xff]
    %v1204 = vld [vmem:[#allocation7 + $0x15d0] sm:$0xff]
    %v1205 = vld [vmem:[#allocation7 + $0x15d8] sm:$0xff]
    %v1206 = vld [vmem:[#allocation7 + $0x15e0] sm:$0xff]
    %v1207 = vld [vmem:[#allocation7 + $0x15e8] sm:$0xff]
    %v1208 = vld [vmem:[#allocation7 + $0x15f0] sm:$0xff]
    %v1209 = vld [vmem:[#allocation7 + $0x15f8] sm:$0xff]
    %v1210 = vld [vmem:[#allocation7 + $0x1600] sm:$0xff]
    %v1211 = vld [vmem:[#allocation7 + $0x1608] sm:$0xff]
    %v1212 = vld [vmem:[#allocation7 + $0x1610] sm:$0xff]
    %v1213 = vld [vmem:[#allocation7 + $0x1618] sm:$0xff]
    %v1214 = vld [vmem:[#allocation7 + $0x1620] sm:$0xff]
    %v1215 = vld [vmem:[#allocation7 + $0x1628] sm:$0xff]
    %v1216 = vld [vmem:[#allocation7 + $0x1630] sm:$0xff]
    %v1217 = vld [vmem:[#allocation7 + $0x1638] sm:$0xff]
    %v1218 = vld [vmem:[#allocation7 + $0x1640] sm:$0xff]
    %v1219 = vld [vmem:[#allocation7 + $0x1648] sm:$0xff]
    %v1220 = vld [vmem:[#allocation7 + $0x1650] sm:$0xff]
    %v1221 = vld [vmem:[#allocation7 + $0x1658] sm:$0xff]
    %v1222 = vld [vmem:[#allocation7 + $0x1660] sm:$0xff]
    %v1223 = vld [vmem:[#allocation7 + $0x1668] sm:$0xff]
    %v1224 = vld [vmem:[#allocation7 + $0x1670] sm:$0xff]
    %v1225 = vld [vmem:[#allocation7 + $0x1678] sm:$0xff]
    %v1226 = vld [vmem:[#allocation7 + $0x1680] sm:$0xff]
    %v1227 = vld [vmem:[#allocation7 + $0x1688] sm:$0xff]
    %v1228 = vld [vmem:[#allocation7 + $0x1690] sm:$0xff]
    %v1229 = vld [vmem:[#allocation7 + $0x1698] sm:$0xff]
    %v1230 = vld [vmem:[#allocation7 + $0x16a0] sm:$0xff]
    %v1231 = vld [vmem:[#allocation7 + $0x16a8] sm:$0xff]
    %v1232 = vld [vmem:[#allocation7 + $0x16b0] sm:$0xff]
    %v1233 = vld [vmem:[#allocation7 + $0x16b8] sm:$0xff]
    %v1234 = vld [vmem:[#allocation7 + $0x16c0] sm:$0xff]
    %v1235 = vld [vmem:[#allocation7 + $0x16c8] sm:$0xff]
    %v1236 = vld [vmem:[#allocation7 + $0x16d0] sm:$0xff]
    %v1237 = vld [vmem:[#allocation7 + $0x16d8] sm:$0xff]
    %v1238 = vld [vmem:[#allocation7 + $0x16e0] sm:$0xff]
    %v1239 = vld [vmem:[#allocation7 + $0x16e8] sm:$0xff]
    %v1240 = vld [vmem:[#allocation7 + $0x16f0] sm:$0xff]
    %v1241 = vld [vmem:[#allocation7 + $0x16f8] sm:$0xff]
    %v1242 = vld [vmem:[#allocation7 + $0x1700] sm:$0xff]
    %v1243 = vld [vmem:[#allocation7 + $0x1708] sm:$0xff]
    %v1244 = vld [vmem:[#allocation7 + $0x1710] sm:$0xff]
    %v1245 = vld [vmem:[#allocation7 + $0x1718] sm:$0xff]
    %v1246 = vld [vmem:[#allocation7 + $0x1720] sm:$0xff]
    %v1247 = vld [vmem:[#allocation7 + $0x1728] sm:$0xff]
    %v1248 = vld [vmem:[#allocation7 + $0x1730] sm:$0xff]
    %v1249 = vld [vmem:[#allocation7 + $0x1738] sm:$0xff]
    %v1250 = vld [vmem:[#allocation7 + $0x1740] sm:$0xff]
    %v1251 = vld [vmem:[#allocation7 + $0x1748] sm:$0xff]
    %v1252 = vld [vmem:[#allocation7 + $0x1750] sm:$0xff]
    %v1253 = vld [vmem:[#allocation7 + $0x1758] sm:$0xff]
    %v1254 = vld [vmem:[#allocation7 + $0x1760] sm:$0xff]
    %v1255 = vld [vmem:[#allocation7 + $0x1768] sm:$0xff]
    %v1256 = vld [vmem:[#allocation7 + $0x1770] sm:$0xff]
    %v1257 = vld [vmem:[#allocation7 + $0x1778] sm:$0xff]
    %v1258 = vld [vmem:[#allocation7 + $0x1780] sm:$0xff]
    %v1259 = vld [vmem:[#allocation7 + $0x1788] sm:$0xff]
    %v1260 = vld [vmem:[#allocation7 + $0x1790] sm:$0xff]
    %v1261 = vld [vmem:[#allocation7 + $0x1798] sm:$0xff]
    %v1262 = vld [vmem:[#allocation7 + $0x17a0] sm:$0xff]
    %v1263 = vld [vmem:[#allocation7 + $0x17a8] sm:$0xff]
    %v1264 = vld [vmem:[#allocation7 + $0x17b0] sm:$0xff]
    %v1265 = vld [vmem:[#allocation7 + $0x17b8] sm:$0xff]
    %v1266 = vld [vmem:[#allocation7 + $0x17c0] sm:$0xff]
    %v1267 = vld [vmem:[#allocation7 + $0x17c8] sm:$0xff]
    %v1268 = vld [vmem:[#allocation7 + $0x17d0] sm:$0xff]
    %v1269 = vld [vmem:[#allocation7 + $0x17d8] sm:$0xff]
    %v1270 = vld [vmem:[#allocation7 + $0x17e0] sm:$0xff]
    %v1271 = vld [vmem:[#allocation7 + $0x17e8] sm:$0xff]
    %v1272 = vld [vmem:[#allocation7 + $0x17f0] sm:$0xff]
    %v1273 = vld [vmem:[#allocation7 + $0x17f8] sm:$0xff]
    %v1274 = vld [vmem:[#allocation7 + $0x1800] sm:$0xff]
    %v1275 = vld [vmem:[#allocation7 + $0x1808] sm:$0xff]
    %v1276 = vld [vmem:[#allocation7 + $0x1810] sm:$0xff]
    %v1277 = vld [vmem:[#allocation7 + $0x1818] sm:$0xff]
    %v1278 = vld [vmem:[#allocation7 + $0x1820] sm:$0xff]
    %v1279 = vld [vmem:[#allocation7 + $0x1828] sm:$0xff]
    %v1280 = vld [vmem:[#allocation7 + $0x1830] sm:$0xff]
    %v1281 = vld [vmem:[#allocation7 + $0x1838] sm:$0xff]
    %v1282 = vld [vmem:[#allocation7 + $0x1840] sm:$0xff]
    %v1283 = vld [vmem:[#allocation7 + $0x1848] sm:$0xff]
    %v1284 = vld [vmem:[#allocation7 + $0x1850] sm:$0xff]
    %v1285 = vld [vmem:[#allocation7 + $0x1858] sm:$0xff]
    %v1286 = vld [vmem:[#allocation7 + $0x1860] sm:$0xff]
    %v1287 = vld [vmem:[#allocation7 + $0x1868] sm:$0xff]
    %v1288 = vld [vmem:[#allocation7 + $0x1870] sm:$0xff]
    %v1289 = vld [vmem:[#allocation7 + $0x1878] sm:$0xff]
    %v1290 = vld [vmem:[#allocation7 + $0x1880] sm:$0xff]
    %v1291 = vld [vmem:[#allocation7 + $0x1888] sm:$0xff]
    %v1292 = vld [vmem:[#allocation7 + $0x1890] sm:$0xff]
    %v1293 = vld [vmem:[#allocation7 + $0x1898] sm:$0xff]
    %v1294 = vld [vmem:[#allocation7 + $0x18a0] sm:$0xff]
    %v1295 = vld [vmem:[#allocation7 + $0x18a8] sm:$0xff]
    %v1296 = vld [vmem:[#allocation7 + $0x18b0] sm:$0xff]
    %v1297 = vld [vmem:[#allocation7 + $0x18b8] sm:$0xff]
    %v1298 = vld [vmem:[#allocation7 + $0x18c0] sm:$0xff]
    %v1299 = vld [vmem:[#allocation7 + $0x18c8] sm:$0xff]
    %v1300 = vld [vmem:[#allocation7 + $0x18d0] sm:$0xff]
    %v1301 = vld [vmem:[#allocation7 + $0x18d8] sm:$0xff]
    %v1302 = vld [vmem:[#allocation7 + $0x18e0] sm:$0xff]
    %v1303 = vld [vmem:[#allocation7 + $0x18e8] sm:$0xff]
    %v1304 = vld [vmem:[#allocation7 + $0x18f0] sm:$0xff]
    %v1305 = vld [vmem:[#allocation7 + $0x18f8] sm:$0xff]
    %v1306 = vld [vmem:[#allocation7 + $0x1900] sm:$0xff]
    %v1307 = vld [vmem:[#allocation7 + $0x1908] sm:$0xff]
    %v1308 = vld [vmem:[#allocation7 + $0x1910] sm:$0xff]
    %v1309 = vld [vmem:[#allocation7 + $0x1918] sm:$0xff]
    %v1310 = vld [vmem:[#allocation7 + $0x1920] sm:$0xff]
    %v1311 = vld [vmem:[#allocation7 + $0x1928] sm:$0xff]
    %v1312 = vld [vmem:[#allocation7 + $0x1930] sm:$0xff]
    %v1313 = vld [vmem:[#allocation7 + $0x1938] sm:$0xff]
    %v1314 = vld [vmem:[#allocation7 + $0x1940] sm:$0xff]
    %v1315 = vld [vmem:[#allocation7 + $0x1948] sm:$0xff]
    %v1316 = vld [vmem:[#allocation7 + $0x1950] sm:$0xff]
    %v1317 = vld [vmem:[#allocation7 + $0x1958] sm:$0xff]
    %v1318 = vld [vmem:[#allocation7 + $0x1960] sm:$0xff]
    %v1319 = vld [vmem:[#allocation7 + $0x1968] sm:$0xff]
    %v1320 = vld [vmem:[#allocation7 + $0x1970] sm:$0xff]
    %v1321 = vld [vmem:[#allocation7 + $0x1978] sm:$0xff]
    %v1322 = vld [vmem:[#allocation7 + $0x1980] sm:$0xff]
    %v1323 = vld [vmem:[#allocation7 + $0x1988] sm:$0xff]
    %v1324 = vld [vmem:[#allocation7 + $0x1990] sm:$0xff]
    %v1325 = vld [vmem:[#allocation7 + $0x1998] sm:$0xff]
    %v1326 = vld [vmem:[#allocation7 + $0x19a0] sm:$0xff]
    %v1327 = vld [vmem:[#allocation7 + $0x19a8] sm:$0xff]
    %v1328 = vld [vmem:[#allocation7 + $0x19b0] sm:$0xff]
    %v1329 = vld [vmem:[#allocation7 + $0x19b8] sm:$0xff]
    %v1330 = vld [vmem:[#allocation7 + $0x19c0] sm:$0xff]
    %v1331 = vld [vmem:[#allocation7 + $0x19c8] sm:$0xff]
    %v1332 = vld [vmem:[#allocation7 + $0x19d0] sm:$0xff]
    %v1333 = vld [vmem:[#allocation7 + $0x19d8] sm:$0xff]
    %v1334 = vld [vmem:[#allocation7 + $0x19e0] sm:$0xff]
    %v1335 = vld [vmem:[#allocation7 + $0x19e8] sm:$0xff]
    %v1336 = vld [vmem:[#allocation7 + $0x19f0] sm:$0xff]
    %v1337 = vld [vmem:[#allocation7 + $0x19f8] sm:$0xff]
    %v1338 = vld [vmem:[#allocation7 + $0x1a00] sm:$0xff]
    %v1339 = vld [vmem:[#allocation7 + $0x1a08] sm:$0xff]
    %v1340 = vld [vmem:[#allocation7 + $0x1a10] sm:$0xff]
    %v1341 = vld [vmem:[#allocation7 + $0x1a18] sm:$0xff]
    %v1342 = vld [vmem:[#allocation7 + $0x1a20] sm:$0xff]
    %v1343 = vld [vmem:[#allocation7 + $0x1a28] sm:$0xff]
    %v1344 = vld [vmem:[#allocation7 + $0x1a30] sm:$0xff]
    %v1345 = vld [vmem:[#allocation7 + $0x1a38] sm:$0xff]
    %v1346 = vld [vmem:[#allocation7 + $0x1a40] sm:$0xff]
    %v1347 = vld [vmem:[#allocation7 + $0x1a48] sm:$0xff]
    %v1348 = vld [vmem:[#allocation7 + $0x1a50] sm:$0xff]
    %v1349 = vld [vmem:[#allocation7 + $0x1a58] sm:$0xff]
    %v1350 = vld [vmem:[#allocation7 + $0x1a60] sm:$0xff]
    %v1351 = vld [vmem:[#allocation7 + $0x1a68] sm:$0xff]
    %v1352 = vld [vmem:[#allocation7 + $0x1a70] sm:$0xff]
    %v1353 = vld [vmem:[#allocation7 + $0x1a78] sm:$0xff]
    %v1354 = vld [vmem:[#allocation7 + $0x1a80] sm:$0xff]
    %v1355 = vld [vmem:[#allocation7 + $0x1a88] sm:$0xff]
    %v1356 = vld [vmem:[#allocation7 + $0x1a90] sm:$0xff]
    %v1357 = vld [vmem:[#allocation7 + $0x1a98] sm:$0xff]
    %v1358 = vld [vmem:[#allocation7 + $0x1aa0] sm:$0xff]
    %v1359 = vld [vmem:[#allocation7 + $0x1aa8] sm:$0xff]
    %v1360 = vld [vmem:[#allocation7 + $0x1ab0] sm:$0xff]
    %v1361 = vld [vmem:[#allocation7 + $0x1ab8] sm:$0xff]
    %v1362 = vld [vmem:[#allocation7 + $0x1ac0] sm:$0xff]
    %v1363 = vld [vmem:[#allocation7 + $0x1ac8] sm:$0xff]
    %v1364 = vld [vmem:[#allocation7 + $0x1ad0] sm:$0xff]
    %v1365 = vld [vmem:[#allocation7 + $0x1ad8] sm:$0xff]
    %v1366 = vld [vmem:[#allocation7 + $0x1ae0] sm:$0xff]
    %v1367 = vld [vmem:[#allocation7 + $0x1ae8] sm:$0xff]
    %v1368 = vld [vmem:[#allocation7 + $0x1af0] sm:$0xff]
    %v1369 = vld [vmem:[#allocation7 + $0x1af8] sm:$0xff]
    %v1370 = vld [vmem:[#allocation7 + $0x1b00] sm:$0xff]
    %v1371 = vld [vmem:[#allocation7 + $0x1b08] sm:$0xff]
    %v1372 = vld [vmem:[#allocation7 + $0x1b10] sm:$0xff]
    %v1373 = vld [vmem:[#allocation7 + $0x1b18] sm:$0xff]
    %v1374 = vld [vmem:[#allocation7 + $0x1b20] sm:$0xff]
    %v1375 = vld [vmem:[#allocation7 + $0x1b28] sm:$0xff]
    %v1376 = vld [vmem:[#allocation7 + $0x1b30] sm:$0xff]
    %v1377 = vld [vmem:[#allocation7 + $0x1b38] sm:$0xff]
    %v1378 = vld [vmem:[#allocation7 + $0x1b40] sm:$0xff]
    %v1379 = vld [vmem:[#allocation7 + $0x1b48] sm:$0xff]
    %v1380 = vld [vmem:[#allocation7 + $0x1b50] sm:$0xff]
    %v1381 = vld [vmem:[#allocation7 + $0x1b58] sm:$0xff]
    %v1382 = vld [vmem:[#allocation7 + $0x1b60] sm:$0xff]
    %v1383 = vld [vmem:[#allocation7 + $0x1b68] sm:$0xff]
    %v1384 = vld [vmem:[#allocation7 + $0x1b70] sm:$0xff]
    %v1385 = vld [vmem:[#allocation7 + $0x1b78] sm:$0xff]
    %v1386 = vld [vmem:[#allocation7 + $0x1b80] sm:$0xff]
    %v1387 = vld [vmem:[#allocation7 + $0x1b88] sm:$0xff]
    %v1388 = vld [vmem:[#allocation7 + $0x1b90] sm:$0xff]
    %v1389 = vld [vmem:[#allocation7 + $0x1b98] sm:$0xff]
    %v1390 = vld [vmem:[#allocation7 + $0x1ba0] sm:$0xff]
    %v1391 = vld [vmem:[#allocation7 + $0x1ba8] sm:$0xff]
    %v1392 = vld [vmem:[#allocation7 + $0x1bb0] sm:$0xff]
    %v1393 = vld [vmem:[#allocation7 + $0x1bb8] sm:$0xff]
    %v1394 = vld [vmem:[#allocation7 + $0x1bc0] sm:$0xff]
    %v1395 = vld [vmem:[#allocation7 + $0x1bc8] sm:$0xff]
    %v1396 = vld [vmem:[#allocation7 + $0x1bd0] sm:$0xff]
    %v1397 = vld [vmem:[#allocation7 + $0x1bd8] sm:$0xff]
    %v1398 = vld [vmem:[#allocation7 + $0x1be0] sm:$0xff]
    %v1399 = vld [vmem:[#allocation7 + $0x1be8] sm:$0xff]
    %v1400 = vld [vmem:[#allocation7 + $0x1bf0] sm:$0xff]
    %v1401 = vld [vmem:[#allocation7 + $0x1bf8] sm:$0xff]
    %v1402 = vld [vmem:[#allocation7 + $0x1c00] sm:$0xff]
    %v1403 = vld [vmem:[#allocation7 + $0x1c08] sm:$0xff]
    %v1404 = vld [vmem:[#allocation7 + $0x1c10] sm:$0xff]
    %v1405 = vld [vmem:[#allocation7 + $0x1c18] sm:$0xff]
    %v1406 = vld [vmem:[#allocation7 + $0x1c20] sm:$0xff]
    %v1407 = vld [vmem:[#allocation7 + $0x1c28] sm:$0xff]
    %v1408 = vld [vmem:[#allocation7 + $0x1c30] sm:$0xff]
    %v1409 = vld [vmem:[#allocation7 + $0x1c38] sm:$0xff]
    %v1410 = vld [vmem:[#allocation7 + $0x1c40] sm:$0xff]
    %v1411 = vld [vmem:[#allocation7 + $0x1c48] sm:$0xff]
    %v1412 = vld [vmem:[#allocation7 + $0x1c50] sm:$0xff]
    %v1413 = vld [vmem:[#allocation7 + $0x1c58] sm:$0xff]
    %v1414 = vld [vmem:[#allocation7 + $0x1c60] sm:$0xff]
    %v1415 = vld [vmem:[#allocation7 + $0x1c68] sm:$0xff]
    %v1416 = vld [vmem:[#allocation7 + $0x1c70] sm:$0xff]
    %v1417 = vld [vmem:[#allocation7 + $0x1c78] sm:$0xff]
    %v1418 = vld [vmem:[#allocation7 + $0x1c80] sm:$0xff]
    %v1419 = vld [vmem:[#allocation7 + $0x1c88] sm:$0xff]
    %v1420 = vld [vmem:[#allocation7 + $0x1c90] sm:$0xff]
    %v1421 = vld [vmem:[#allocation7 + $0x1c98] sm:$0xff]
    %v1422 = vld [vmem:[#allocation7 + $0x1ca0] sm:$0xff]
    %v1423 = vld [vmem:[#allocation7 + $0x1ca8] sm:$0xff]
    %v1424 = vld [vmem:[#allocation7 + $0x1cb0] sm:$0xff]
    %v1425 = vld [vmem:[#allocation7 + $0x1cb8] sm:$0xff]
    %v1426 = vld [vmem:[#allocation7 + $0x1cc0] sm:$0xff]
    %v1427 = vld [vmem:[#allocation7 + $0x1cc8] sm:$0xff]
    %v1428 = vld [vmem:[#allocation7 + $0x1cd0] sm:$0xff]
    %v1429 = vld [vmem:[#allocation7 + $0x1cd8] sm:$0xff]
    %v1430 = vld [vmem:[#allocation7 + $0x1ce0] sm:$0xff]
    %v1431 = vld [vmem:[#allocation7 + $0x1ce8] sm:$0xff]
    %v1432 = vld [vmem:[#allocation7 + $0x1cf0] sm:$0xff]
    %v1433 = vld [vmem:[#allocation7 + $0x1cf8] sm:$0xff]
    %v1434 = vld [vmem:[#allocation7 + $0x1d00] sm:$0xff]
    %v1435 = vld [vmem:[#allocation7 + $0x1d08] sm:$0xff]
    %v1436 = vld [vmem:[#allocation7 + $0x1d10] sm:$0xff]
    %v1437 = vld [vmem:[#allocation7 + $0x1d18] sm:$0xff]
    %v1438 = vld [vmem:[#allocation7 + $0x1d20] sm:$0xff]
    %v1439 = vld [vmem:[#allocation7 + $0x1d28] sm:$0xff]
    %v1440 = vld [vmem:[#allocation7 + $0x1d30] sm:$0xff]
    %v1441 = vld [vmem:[#allocation7 + $0x1d38] sm:$0xff]
    %v1442 = vld [vmem:[#allocation7 + $0x1d40] sm:$0xff]
    %v1443 = vld [vmem:[#allocation7 + $0x1d48] sm:$0xff]
    %v1444 = vld [vmem:[#allocation7 + $0x1d50] sm:$0xff]
    %v1445 = vld [vmem:[#allocation7 + $0x1d58] sm:$0xff]
    %v1446 = vld [vmem:[#allocation7 + $0x1d60] sm:$0xff]
    %v1447 = vld [vmem:[#allocation7 + $0x1d68] sm:$0xff]
    %v1448 = vld [vmem:[#allocation7 + $0x1d70] sm:$0xff]
    %v1449 = vld [vmem:[#allocation7 + $0x1d78] sm:$0xff]
    %v1450 = vld [vmem:[#allocation7 + $0x1d80] sm:$0xff]
    %v1451 = vld [vmem:[#allocation7 + $0x1d88] sm:$0xff]
    %v1452 = vld [vmem:[#allocation7 + $0x1d90] sm:$0xff]
    %v1453 = vld [vmem:[#allocation7 + $0x1d98] sm:$0xff]
    %v1454 = vld [vmem:[#allocation7 + $0x1da0] sm:$0xff]
    %v1455 = vld [vmem:[#allocation7 + $0x1da8] sm:$0xff]
    %v1456 = vld [vmem:[#allocation7 + $0x1db0] sm:$0xff]
    %v1457 = vld [vmem:[#allocation7 + $0x1db8] sm:$0xff]
    %v1458 = vld [vmem:[#allocation7 + $0x1dc0] sm:$0xff]
    %v1459 = vld [vmem:[#allocation7 + $0x1dc8] sm:$0xff]
    %v1460 = vld [vmem:[#allocation7 + $0x1dd0] sm:$0xff]
    %v1461 = vld [vmem:[#allocation7 + $0x1dd8] sm:$0xff]
    %v1462 = vld [vmem:[#allocation7 + $0x1de0] sm:$0xff]
    %v1463 = vld [vmem:[#allocation7 + $0x1de8] sm:$0xff]
    %v1464 = vld [vmem:[#allocation7 + $0x1df0] sm:$0xff]
    %v1465 = vld [vmem:[#allocation7 + $0x1df8] sm:$0xff]
    %v1466 = vld [vmem:[#allocation7 + $0x1e00] sm:$0xff]
    %v1467 = vld [vmem:[#allocation7 + $0x1e08] sm:$0xff]
    %v1468 = vld [vmem:[#allocation7 + $0x1e10] sm:$0xff]
    %v1469 = vld [vmem:[#allocation7 + $0x1e18] sm:$0xff]
    %v1470 = vld [vmem:[#allocation7 + $0x1e20] sm:$0xff]
    %v1471 = vld [vmem:[#allocation7 + $0x1e28] sm:$0xff]
    %v1472 = vld [vmem:[#allocation7 + $0x1e30] sm:$0xff]
    %v1473 = vld [vmem:[#allocation7 + $0x1e38] sm:$0xff]
    %v1474 = vld [vmem:[#allocation7 + $0x1e40] sm:$0xff]
    %v1475 = vld [vmem:[#allocation7 + $0x1e48] sm:$0xff]
    %v1476 = vld [vmem:[#allocation7 + $0x1e50] sm:$0xff]
    %v1477 = vld [vmem:[#allocation7 + $0x1e58] sm:$0xff]
    %v1478 = vld [vmem:[#allocation7 + $0x1e60] sm:$0xff]
    %v1479 = vld [vmem:[#allocation7 + $0x1e68] sm:$0xff]
    %v1480 = vld [vmem:[#allocation7 + $0x1e70] sm:$0xff]
    %v1481 = vld [vmem:[#allocation7 + $0x1e78] sm:$0xff]
    %v1482 = vld [vmem:[#allocation7 + $0x1e80] sm:$0xff]
    %v1483 = vld [vmem:[#allocation7 + $0x1e88] sm:$0xff]
    %v1484 = vld [vmem:[#allocation7 + $0x1e90] sm:$0xff]
    %v1485 = vld [vmem:[#allocation7 + $0x1e98] sm:$0xff]
    %v1486 = vld [vmem:[#allocation7 + $0x1ea0] sm:$0xff]
    %v1487 = vld [vmem:[#allocation7 + $0x1ea8] sm:$0xff]
    %v1488 = vld [vmem:[#allocation7 + $0x1eb0] sm:$0xff]
    %v1489 = vld [vmem:[#allocation7 + $0x1eb8] sm:$0xff]
    %v1490 = vld [vmem:[#allocation7 + $0x1ec0] sm:$0xff]
    %v1491 = vld [vmem:[#allocation7 + $0x1ec8] sm:$0xff]
    %v1492 = vld [vmem:[#allocation7 + $0x1ed0] sm:$0xff]
    %v1493 = vld [vmem:[#allocation7 + $0x1ed8] sm:$0xff]
    %v1494 = vld [vmem:[#allocation7 + $0x1ee0] sm:$0xff]
    %v1495 = vld [vmem:[#allocation7 + $0x1ee8] sm:$0xff]
    %v1496 = vld [vmem:[#allocation7 + $0x1ef0] sm:$0xff]
    %v1497 = vld [vmem:[#allocation7 + $0x1ef8] sm:$0xff]
    %v1498 = vld [vmem:[#allocation7 + $0x1f00] sm:$0xff]
    %v1499 = vld [vmem:[#allocation7 + $0x1f08] sm:$0xff]
    %v1500 = vld [vmem:[#allocation7 + $0x1f10] sm:$0xff]
    %v1501 = vld [vmem:[#allocation7 + $0x1f18] sm:$0xff]
    %v1502 = vld [vmem:[#allocation7 + $0x1f20] sm:$0xff]
    %v1503 = vld [vmem:[#allocation7 + $0x1f28] sm:$0xff]
    %v1504 = vld [vmem:[#allocation7 + $0x1f30] sm:$0xff]
    %v1505 = vld [vmem:[#allocation7 + $0x1f38] sm:$0xff]
    %v1506 = vld [vmem:[#allocation7 + $0x1f40] sm:$0xff]
    %v1507 = vld [vmem:[#allocation7 + $0x1f48] sm:$0xff]
    %v1508 = vld [vmem:[#allocation7 + $0x1f50] sm:$0xff]
    %v1509 = vld [vmem:[#allocation7 + $0x1f58] sm:$0xff]
    %v1510 = vld [vmem:[#allocation7 + $0x1f60] sm:$0xff]
    %v1511 = vld [vmem:[#allocation7 + $0x1f68] sm:$0xff]
    %v1512 = vld [vmem:[#allocation7 + $0x1f70] sm:$0xff]
    %v1513 = vld [vmem:[#allocation7 + $0x1f78] sm:$0xff]
    %v1514 = vld [vmem:[#allocation7 + $0x1f80] sm:$0xff]
    %v1515 = vld [vmem:[#allocation7 + $0x1f88] sm:$0xff]
    %v1516 = vld [vmem:[#allocation7 + $0x1f90] sm:$0xff]
    %v1517 = vld [vmem:[#allocation7 + $0x1f98] sm:$0xff]
    %v1518 = vld [vmem:[#allocation7 + $0x1fa0] sm:$0xff]
    %v1519 = vld [vmem:[#allocation7 + $0x1fa8] sm:$0xff]
    %v1520 = vld [vmem:[#allocation7 + $0x1fb0] sm:$0xff]
    %v1521 = vld [vmem:[#allocation7 + $0x1fb8] sm:$0xff]
    %v1522 = vld [vmem:[#allocation7 + $0x1fc0] sm:$0xff]
    %v1523 = vld [vmem:[#allocation7 + $0x1fc8] sm:$0xff]
    %v1524 = vld [vmem:[#allocation7 + $0x1fd0] sm:$0xff]
    %v1525 = vld [vmem:[#allocation7 + $0x1fd8] sm:$0xff]
    %v1526 = vld [vmem:[#allocation7 + $0x1fe0] sm:$0xff]
    %v1527 = vld [vmem:[#allocation7 + $0x1fe8] sm:$0xff]
    %v1528 = vld [vmem:[#allocation7 + $0x1ff0] sm:$0xff]
    %v1529 = vld [vmem:[#allocation7 + $0x1ff8] sm:$0xff]
    %v1530 = vlaneseq
    %v1531 = vshrl.u32 %v1530, 7
    %v1532 = vsub.s32 1, %v1531
    %v1533 = vrot.slane %v73, %v1532
    %v1534 = vlaneseq
    %v1535 = vshrl.u32 %v1534, 7
    %v1536 = vsub.s32 5, %v1535
    %v1537 = vrot.slane %v73, %v1536
    %v1538 = vlaneseq
    %v1539 = vshrl.u32 %v1538, 7
    %v1540 = vsub.s32 1, %v1539
    %v1541 = vrot.slane %v74, %v1540
    %v1542 = vlaneseq
    %v1543 = vshrl.u32 %v1542, 7
    %v1544 = vsub.s32 5, %v1543
    %v1545 = vrot.slane %v74, %v1544
    %v1546 = vlaneseq
    %v1547 = vshrl.u32 %v1546, 7
    %v1548 = vsub.s32 1, %v1547
    %v1549 = vrot.slane %v75, %v1548
    %v1550 = vlaneseq
    %v1551 = vshrl.u32 %v1550, 7
    %v1552 = vsub.s32 5, %v1551
    %v1553 = vrot.slane %v75, %v1552
    %v1554 = vlaneseq
    %v1555 = vshrl.u32 %v1554, 7
    %v1556 = vsub.s32 1, %v1555
    %v1557 = vrot.slane %v76, %v1556
    %v1558 = vlaneseq
    %v1559 = vshrl.u32 %v1558, 7
    %v1560 = vsub.s32 5, %v1559
    %v1561 = vrot.slane %v76, %v1560
    %v1570 = vlaneseq
    %v1571 = vshrl.u32 %v1570, 7
    %v1572 = vsub.s32 1, %v1571
    %v1573 = vrot.slane %v1533, %v1572
    %v1574 = vlaneseq
    %v1575 = vshrl.u32 %v1574, 7
    %v1576 = vsub.s32 1, %v1575
    %v1577 = vrot.slane %v1537, %v1576
    %v1578 = vlaneseq
    %v1579 = vshrl.u32 %v1578, 7
    %v1580 = vsub.s32 1, %v1579
    %v1581 = vrot.slane %v1541, %v1580
    %v1582 = vlaneseq
    %v1583 = vshrl.u32 %v1582, 7
    %v1584 = vsub.s32 1, %v1583
    %v1585 = vrot.slane %v1545, %v1584
    %v1586 = vlaneseq
    %v1587 = vshrl.u32 %v1586, 7
    %v1588 = vsub.s32 1, %v1587
    %v1589 = vrot.slane %v1549, %v1588
    %v1590 = vlaneseq
    %v1591 = vshrl.u32 %v1590, 7
    %v1592 = vsub.s32 1, %v1591
    %v1593 = vrot.slane %v1553, %v1592
    %v1594 = vlaneseq
    %v1595 = vshrl.u32 %v1594, 7
    %v1596 = vsub.s32 1, %v1595
    %v1597 = vrot.slane %v1557, %v1596
    %v1598 = vlaneseq
    %v1599 = vshrl.u32 %v1598, 7
    %v1600 = vsub.s32 1, %v1599
    %v1601 = vrot.slane %v1561, %v1600
    %1602 = vmatprep.subr.mxu0 %v627
    %1603 = vmatpush1.msra.mxu0 %v626
    %1604 = vmatprep.subr.mxu0 %v619
    %1605 = vmatpush1.msra.mxu0 %v618
    %1606 = vmatprep.subr.mxu0 %v611
    %1607 = vmatpush1.msra.mxu0 %v610
    %1608 = vmatprep.subr.mxu0 %v603
    %1609 = vmatpush1.msra.mxu0 %v602
    %1610 = vmatprep.subr.mxu0 %v595
    %1611 = vmatpush1.msra.mxu0 %v594
    %1612 = vmatprep.subr.mxu0 %v587
    %1613 = vmatpush1.msra.mxu0 %v586
    %1614 = vmatprep.subr.mxu0 %v579
    %1615 = vmatpush1.msra.mxu0 %v578
    %1616 = vmatprep.subr.mxu0 %v571
    %1617 = vmatpush1.msra.mxu0 %v570
    %1618 = vmatprep.subr.mxu0 %v563
    %1619 = vmatpush1.msra.mxu0 %v562
    %1620 = vmatprep.subr.mxu0 %v555
    %1621 = vmatpush1.msra.mxu0 %v554
    %1622 = vmatprep.subr.mxu0 %v547
    %1623 = vmatpush1.msra.mxu0 %v546
    %1624 = vmatprep.subr.mxu0 %v539
    %1625 = vmatpush1.msra.mxu0 %v538
    %1626 = vmatprep.subr.mxu0 %v531
    %1627 = vmatpush1.msra.mxu0 %v530
    %1628 = vmatprep.subr.mxu0 %v523
    %1629 = vmatpush1.msra.mxu0 %v522
    %1630 = vmatprep.subr.mxu0 %v515
    %1631 = vmatpush1.msra.mxu0 %v514
    %1632 = vmatprep.subr.mxu0 %v507
    %1633 = vmatpush1.msra.mxu0 %v506
    %1634 = vmatprep.subr.mxu0 %v755
    %1635 = vmatpush2.msra.mxu0 %v754
    %1636 = vmatprep.subr.mxu0 %v747
    %1637 = vmatpush2.msra.mxu0 %v746
    %1638 = vmatprep.subr.mxu0 %v739
    %1639 = vmatpush2.msra.mxu0 %v738
    %1640 = vmatprep.subr.mxu0 %v731
    %1641 = vmatpush2.msra.mxu0 %v730
    %1642 = vmatprep.subr.mxu0 %v723
    %1643 = vmatpush2.msra.mxu0 %v722
    %1644 = vmatprep.subr.mxu0 %v715
    %1645 = vmatpush2.msra.mxu0 %v714
    %1646 = vmatprep.subr.mxu0 %v707
    %1647 = vmatpush2.msra.mxu0 %v706
    %1648 = vmatprep.subr.mxu0 %v699
    %1649 = vmatpush2.msra.mxu0 %v698
    %1650 = vmatprep.subr.mxu0 %v691
    %1651 = vmatpush2.msra.mxu0 %v690
    %1652 = vmatprep.subr.mxu0 %v683
    %1653 = vmatpush2.msra.mxu0 %v682
    %1654 = vmatprep.subr.mxu0 %v675
    %1655 = vmatpush2.msra.mxu0 %v674
    %1656 = vmatprep.subr.mxu0 %v667
    %1657 = vmatpush2.msra.mxu0 %v666
    %1658 = vmatprep.subr.mxu0 %v659
    %1659 = vmatpush2.msra.mxu0 %v658
    %1660 = vmatprep.subr.mxu0 %v651
    %1661 = vmatpush2.msra.mxu0 %v650
    %1662 = vmatprep.subr.mxu0 %v643
    %1663 = vmatpush2.msra.mxu0 %v642
    %1664 = vmatprep.subr.mxu0 %v635
    %1665 = vmatpush2.msra.mxu0 %v634
    %1666 = vmatprep.mubr.f32.mxu0 %v499
    %1667 = vmatmul.mubr.f32.gmra.mxu0 %v498
    %v1668 = vpop.f32.mrf.mxu0
    %v1669 = vadd.f32 %v1573, %v1668
    %v1670 = vpop.f32.mrf.mxu0
    %v1671 = vadd.f32 %v1577, %v1670
    %1672 = vdwg.mxu0
    %1673 = vmatprep.subr.mxu0 %v883
    %1674 = vmatpush1.msra.mxu0 %v882
    %1675 = vmatprep.subr.mxu0 %v875
    %1676 = vmatpush1.msra.mxu0 %v874
    %1677 = vmatprep.subr.mxu0 %v867
    %1678 = vmatpush1.msra.mxu0 %v866
    %1679 = vmatprep.subr.mxu0 %v859
    %1680 = vmatpush1.msra.mxu0 %v858
    %1681 = vmatprep.subr.mxu0 %v851
    %1682 = vmatpush1.msra.mxu0 %v850
    %1683 = vmatprep.subr.mxu0 %v843
    %1684 = vmatpush1.msra.mxu0 %v842
    %1685 = vmatprep.subr.mxu0 %v835
    %1686 = vmatpush1.msra.mxu0 %v834
    %1687 = vmatprep.subr.mxu0 %v827
    %1688 = vmatpush1.msra.mxu0 %v826
    %1689 = vmatprep.subr.mxu0 %v819
    %1690 = vmatpush1.msra.mxu0 %v818
    %1691 = vmatprep.subr.mxu0 %v811
    %1692 = vmatpush1.msra.mxu0 %v810
    %1693 = vmatprep.subr.mxu0 %v803
    %1694 = vmatpush1.msra.mxu0 %v802
    %1695 = vmatprep.subr.mxu0 %v795
    %1696 = vmatpush1.msra.mxu0 %v794
    %1697 = vmatprep.subr.mxu0 %v787
    %1698 = vmatpush1.msra.mxu0 %v786
    %1699 = vmatprep.subr.mxu0 %v779
    %1700 = vmatpush1.msra.mxu0 %v778
    %1701 = vmatprep.subr.mxu0 %v771
    %1702 = vmatpush1.msra.mxu0 %v770
    %1703 = vmatprep.subr.mxu0 %v763
    %1704 = vmatpush1.msra.mxu0 %v762
    %1705 = vmatprep.subr.mxu0 %v1011
    %1706 = vmatpush2.msra.mxu0 %v1010
    %1707 = vmatprep.subr.mxu0 %v1003
    %1708 = vmatpush2.msra.mxu0 %v1002
    %1709 = vmatprep.subr.mxu0 %v995
    %1710 = vmatpush2.msra.mxu0 %v994
    %1711 = vmatprep.subr.mxu0 %v987
    %1712 = vmatpush2.msra.mxu0 %v986
    %1713 = vmatprep.subr.mxu0 %v979
    %1714 = vmatpush2.msra.mxu0 %v978
    %1715 = vmatprep.subr.mxu0 %v971
    %1716 = vmatpush2.msra.mxu0 %v970
    %1717 = vmatprep.subr.mxu0 %v963
    %1718 = vmatpush2.msra.mxu0 %v962
    %1719 = vmatprep.subr.mxu0 %v955
    %1720 = vmatpush2.msra.mxu0 %v954
    %1721 = vmatprep.subr.mxu0 %v947
    %1722 = vmatpush2.msra.mxu0 %v946
    %1723 = vmatprep.subr.mxu0 %v939
    %1724 = vmatpush2.msra.mxu0 %v938
    %1725 = vmatprep.subr.mxu0 %v931
    %1726 = vmatpush2.msra.mxu0 %v930
    %1727 = vmatprep.subr.mxu0 %v923
    %1728 = vmatpush2.msra.mxu0 %v922
    %1729 = vmatprep.subr.mxu0 %v915
    %1730 = vmatpush2.msra.mxu0 %v914
    %1731 = vmatprep.subr.mxu0 %v907
    %1732 = vmatpush2.msra.mxu0 %v906
    %1733 = vmatprep.subr.mxu0 %v899
    %1734 = vmatpush2.msra.mxu0 %v898
    %1735 = vmatprep.subr.mxu0 %v891
    %1736 = vmatpush2.msra.mxu0 %v890
    %1737 = vmatprep.mubr.f32.mxu0 %v501
    %1738 = vmatmul.mubr.f32.gmra.mxu0 %v500
    %v1739 = vpop.f32.mrf.mxu0
    %v1740 = vadd.f32 %v1669, %v1739
    %v1741 = vpop.f32.mrf.mxu0
    %v1742 = vadd.f32 %v1671, %v1741
    %1743 = vdwg.mxu0
    %1744 = vmatprep.subr.mxu0 %v1139
    %1745 = vmatpush1.msra.mxu0 %v1138
    %1746 = vmatprep.subr.mxu0 %v1131
    %1747 = vmatpush1.msra.mxu0 %v1130
    %1748 = vmatprep.subr.mxu0 %v1123
    %1749 = vmatpush1.msra.mxu0 %v1122
    %1750 = vmatprep.subr.mxu0 %v1115
    %1751 = vmatpush1.msra.mxu0 %v1114
    %1752 = vmatprep.subr.mxu0 %v1107
    %1753 = vmatpush1.msra.mxu0 %v1106
    %1754 = vmatprep.subr.mxu0 %v1099
    %1755 = vmatpush1.msra.mxu0 %v1098
    %1756 = vmatprep.subr.mxu0 %v1091
    %1757 = vmatpush1.msra.mxu0 %v1090
    %1758 = vmatprep.subr.mxu0 %v1083
    %1759 = vmatpush1.msra.mxu0 %v1082
    %1760 = vmatprep.subr.mxu0 %v1075
    %1761 = vmatpush1.msra.mxu0 %v1074
    %1762 = vmatprep.subr.mxu0 %v1067
    %1763 = vmatpush1.msra.mxu0 %v1066
    %1764 = vmatprep.subr.mxu0 %v1059
    %1765 = vmatpush1.msra.mxu0 %v1058
    %1766 = vmatprep.subr.mxu0 %v1051
    %1767 = vmatpush1.msra.mxu0 %v1050
    %1768 = vmatprep.subr.mxu0 %v1043
    %1769 = vmatpush1.msra.mxu0 %v1042
    %1770 = vmatprep.subr.mxu0 %v1035
    %1771 = vmatpush1.msra.mxu0 %v1034
    %1772 = vmatprep.subr.mxu0 %v1027
    %1773 = vmatpush1.msra.mxu0 %v1026
    %1774 = vmatprep.subr.mxu0 %v1019
    %1775 = vmatpush1.msra.mxu0 %v1018
    %1776 = vmatprep.subr.mxu0 %v1267
    %1777 = vmatpush2.msra.mxu0 %v1266
    %1778 = vmatprep.subr.mxu0 %v1259
    %1779 = vmatpush2.msra.mxu0 %v1258
    %1780 = vmatprep.subr.mxu0 %v1251
    %1781 = vmatpush2.msra.mxu0 %v1250
    %1782 = vmatprep.subr.mxu0 %v1243
    %1783 = vmatpush2.msra.mxu0 %v1242
    %1784 = vmatprep.subr.mxu0 %v1235
    %1785 = vmatpush2.msra.mxu0 %v1234
    %1786 = vmatprep.subr.mxu0 %v1227
    %1787 = vmatpush2.msra.mxu0 %v1226
    %1788 = vmatprep.subr.mxu0 %v1219
    %1789 = vmatpush2.msra.mxu0 %v1218
    %1790 = vmatprep.subr.mxu0 %v1211
    %1791 = vmatpush2.msra.mxu0 %v1210
    %1792 = vmatprep.subr.mxu0 %v1203
    %1793 = vmatpush2.msra.mxu0 %v1202
    %1794 = vmatprep.subr.mxu0 %v1195
    %1795 = vmatpush2.msra.mxu0 %v1194
    %1796 = vmatprep.subr.mxu0 %v1187
    %1797 = vmatpush2.msra.mxu0 %v1186
    %1798 = vmatprep.subr.mxu0 %v1179
    %1799 = vmatpush2.msra.mxu0 %v1178
    %1800 = vmatprep.subr.mxu0 %v1171
    %1801 = vmatpush2.msra.mxu0 %v1170
    %1802 = vmatprep.subr.mxu0 %v1163
    %1803 = vmatpush2.msra.mxu0 %v1162
    %1804 = vmatprep.subr.mxu0 %v1155
    %1805 = vmatpush2.msra.mxu0 %v1154
    %1806 = vmatprep.subr.mxu0 %v1147
    %1807 = vmatpush2.msra.mxu0 %v1146
    %1808 = vmatprep.mubr.f32.mxu0 %v503
    %1809 = vmatmul.mubr.f32.gmra.mxu0 %v502
    %v1810 = vpop.f32.mrf.mxu0
    %v1811 = vadd.f32 %v1740, %v1810
    %v1812 = vpop.f32.mrf.mxu0
    %v1813 = vadd.f32 %v1742, %v1812
    %1814 = vdwg.mxu0
    %1815 = vmatprep.subr.mxu0 %v1395
    %1816 = vmatpush1.msra.mxu0 %v1394
    %1817 = vmatprep.subr.mxu0 %v1387
    %1818 = vmatpush1.msra.mxu0 %v1386
    %1819 = vmatprep.subr.mxu0 %v1379
    %1820 = vmatpush1.msra.mxu0 %v1378
    %1821 = vmatprep.subr.mxu0 %v1371
    %1822 = vmatpush1.msra.mxu0 %v1370
    %1823 = vmatprep.subr.mxu0 %v1363
    %1824 = vmatpush1.msra.mxu0 %v1362
    %1825 = vmatprep.subr.mxu0 %v1355
    %1826 = vmatpush1.msra.mxu0 %v1354
    %1827 = vmatprep.subr.mxu0 %v1347
    %1828 = vmatpush1.msra.mxu0 %v1346
    %1829 = vmatprep.subr.mxu0 %v1339
    %1830 = vmatpush1.msra.mxu0 %v1338
    %1831 = vmatprep.subr.mxu0 %v1331
    %1832 = vmatpush1.msra.mxu0 %v1330
    %1833 = vmatprep.subr.mxu0 %v1323
    %1834 = vmatpush1.msra.mxu0 %v1322
    %1835 = vmatprep.subr.mxu0 %v1315
    %1836 = vmatpush1.msra.mxu0 %v1314
    %1837 = vmatprep.subr.mxu0 %v1307
    %1838 = vmatpush1.msra.mxu0 %v1306
    %1839 = vmatprep.subr.mxu0 %v1299
    %1840 = vmatpush1.msra.mxu0 %v1298
    %1841 = vmatprep.subr.mxu0 %v1291
    %1842 = vmatpush1.msra.mxu0 %v1290
    %1843 = vmatprep.subr.mxu0 %v1283
    %1844 = vmatpush1.msra.mxu0 %v1282
    %1845 = vmatprep.subr.mxu0 %v1275
    %1846 = vmatpush1.msra.mxu0 %v1274
    %1847 = vmatprep.subr.mxu0 %v1523
    %1848 = vmatpush2.msra.mxu0 %v1522
    %1849 = vmatprep.subr.mxu0 %v1515
    %1850 = vmatpush2.msra.mxu0 %v1514
    %1851 = vmatprep.subr.mxu0 %v1507
    %1852 = vmatpush2.msra.mxu0 %v1506
    %1853 = vmatprep.subr.mxu0 %v1499
    %1854 = vmatpush2.msra.mxu0 %v1498
    %1855 = vmatprep.subr.mxu0 %v1491
    %1856 = vmatpush2.msra.mxu0 %v1490
    %1857 = vmatprep.subr.mxu0 %v1483
    %1858 = vmatpush2.msra.mxu0 %v1482
    %1859 = vmatprep.subr.mxu0 %v1475
    %1860 = vmatpush2.msra.mxu0 %v1474
    %1861 = vmatprep.subr.mxu0 %v1467
    %1862 = vmatpush2.msra.mxu0 %v1466
    %1863 = vmatprep.subr.mxu0 %v1459
    %1864 = vmatpush2.msra.mxu0 %v1458
    %1865 = vmatprep.subr.mxu0 %v1451
    %1866 = vmatpush2.msra.mxu0 %v1450
    %1867 = vmatprep.subr.mxu0 %v1443
    %1868 = vmatpush2.msra.mxu0 %v1442
    %1869 = vmatprep.subr.mxu0 %v1435
    %1870 = vmatpush2.msra.mxu0 %v1434
    %1871 = vmatprep.subr.mxu0 %v1427
    %1872 = vmatpush2.msra.mxu0 %v1426
    %1873 = vmatprep.subr.mxu0 %v1419
    %1874 = vmatpush2.msra.mxu0 %v1418
    %1875 = vmatprep.subr.mxu0 %v1411
    %1876 = vmatpush2.msra.mxu0 %v1410
    %1877 = vmatprep.subr.mxu0 %v1403
    %1878 = vmatpush2.msra.mxu0 %v1402
    %1879 = vmatprep.mubr.f32.mxu0 %v505
    %1880 = vmatmul.mubr.f32.gmra.mxu0 %v504
    %v1881 = vpop.f32.mrf.mxu0
    %v1882 = vadd.f32 %v1811, %v1881
    %v1883 = vpop.f32.mrf.mxu0
    %v1884 = vadd.f32 %v1813, %v1883
    %1885 = vdwg.mxu0
    %1886 = vmatprep.subr.mxu0 %v629
    %1887 = vmatpush1.msra.mxu0 %v628
    %1888 = vmatprep.subr.mxu0 %v621
    %1889 = vmatpush1.msra.mxu0 %v620
    %1890 = vmatprep.subr.mxu0 %v613
    %1891 = vmatpush1.msra.mxu0 %v612
    %1892 = vmatprep.subr.mxu0 %v605
    %1893 = vmatpush1.msra.mxu0 %v604
    %1894 = vmatprep.subr.mxu0 %v597
    %1895 = vmatpush1.msra.mxu0 %v596
    %1896 = vmatprep.subr.mxu0 %v589
    %1897 = vmatpush1.msra.mxu0 %v588
    %1898 = vmatprep.subr.mxu0 %v581
    %1899 = vmatpush1.msra.mxu0 %v580
    %1900 = vmatprep.subr.mxu0 %v573
    %1901 = vmatpush1.msra.mxu0 %v572
    %1902 = vmatprep.subr.mxu0 %v565
    %1903 = vmatpush1.msra.mxu0 %v564
    %1904 = vmatprep.subr.mxu0 %v557
    %1905 = vmatpush1.msra.mxu0 %v556
    %1906 = vmatprep.subr.mxu0 %v549
    %1907 = vmatpush1.msra.mxu0 %v548
    %1908 = vmatprep.subr.mxu0 %v541
    %1909 = vmatpush1.msra.mxu0 %v540
    %1910 = vmatprep.subr.mxu0 %v533
    %1911 = vmatpush1.msra.mxu0 %v532
    %1912 = vmatprep.subr.mxu0 %v525
    %1913 = vmatpush1.msra.mxu0 %v524
    %1914 = vmatprep.subr.mxu0 %v517
    %1915 = vmatpush1.msra.mxu0 %v516
    %1916 = vmatprep.subr.mxu0 %v509
    %1917 = vmatpush1.msra.mxu0 %v508
    %1918 = vmatprep.subr.mxu0 %v757
    %1919 = vmatpush2.msra.mxu0 %v756
    %1920 = vmatprep.subr.mxu0 %v749
    %1921 = vmatpush2.msra.mxu0 %v748
    %1922 = vmatprep.subr.mxu0 %v741
    %1923 = vmatpush2.msra.mxu0 %v740
    %1924 = vmatprep.subr.mxu0 %v733
    %1925 = vmatpush2.msra.mxu0 %v732
    %1926 = vmatprep.subr.mxu0 %v725
    %1927 = vmatpush2.msra.mxu0 %v724
    %1928 = vmatprep.subr.mxu0 %v717
    %1929 = vmatpush2.msra.mxu0 %v716
    %1930 = vmatprep.subr.mxu0 %v709
    %1931 = vmatpush2.msra.mxu0 %v708
    %1932 = vmatprep.subr.mxu0 %v701
    %1933 = vmatpush2.msra.mxu0 %v700
    %1934 = vmatprep.subr.mxu0 %v693
    %1935 = vmatpush2.msra.mxu0 %v692
    %1936 = vmatprep.subr.mxu0 %v685
    %1937 = vmatpush2.msra.mxu0 %v684
    %1938 = vmatprep.subr.mxu0 %v677
    %1939 = vmatpush2.msra.mxu0 %v676
    %1940 = vmatprep.subr.mxu0 %v669
    %1941 = vmatpush2.msra.mxu0 %v668
    %1942 = vmatprep.subr.mxu0 %v661
    %1943 = vmatpush2.msra.mxu0 %v660
    %1944 = vmatprep.subr.mxu0 %v653
    %1945 = vmatpush2.msra.mxu0 %v652
    %1946 = vmatprep.subr.mxu0 %v645
    %1947 = vmatpush2.msra.mxu0 %v644
    %1948 = vmatprep.subr.mxu0 %v637
    %1949 = vmatpush2.msra.mxu0 %v636
    %1950 = vmatprep.mubr.f32.mxu0 %v499
    %1951 = vmatmul.mubr.f32.gmra.mxu0 %v498
    %v1952 = vpop.f32.mrf.mxu0
    %v1953 = vadd.f32 %v1581, %v1952
    %v1954 = vpop.f32.mrf.mxu0
    %v1955 = vadd.f32 %v1585, %v1954
    %1956 = vdwg.mxu0
    %1957 = vmatprep.subr.mxu0 %v885
    %1958 = vmatpush1.msra.mxu0 %v884
    %1959 = vmatprep.subr.mxu0 %v877
    %1960 = vmatpush1.msra.mxu0 %v876
    %1961 = vmatprep.subr.mxu0 %v869
    %1962 = vmatpush1.msra.mxu0 %v868
    %1963 = vmatprep.subr.mxu0 %v861
    %1964 = vmatpush1.msra.mxu0 %v860
    %1965 = vmatprep.subr.mxu0 %v853
    %1966 = vmatpush1.msra.mxu0 %v852
    %1967 = vmatprep.subr.mxu0 %v845
    %1968 = vmatpush1.msra.mxu0 %v844
    %1969 = vmatprep.subr.mxu0 %v837
    %1970 = vmatpush1.msra.mxu0 %v836
    %1971 = vmatprep.subr.mxu0 %v829
    %1972 = vmatpush1.msra.mxu0 %v828
    %1973 = vmatprep.subr.mxu0 %v821
    %1974 = vmatpush1.msra.mxu0 %v820
    %1975 = vmatprep.subr.mxu0 %v813
    %1976 = vmatpush1.msra.mxu0 %v812
    %1977 = vmatprep.subr.mxu0 %v805
    %1978 = vmatpush1.msra.mxu0 %v804
    %1979 = vmatprep.subr.mxu0 %v797
    %1980 = vmatpush1.msra.mxu0 %v796
    %1981 = vmatprep.subr.mxu0 %v789
    %1982 = vmatpush1.msra.mxu0 %v788
    %1983 = vmatprep.subr.mxu0 %v781
    %1984 = vmatpush1.msra.mxu0 %v780
    %1985 = vmatprep.subr.mxu0 %v773
    %1986 = vmatpush1.msra.mxu0 %v772
    %1987 = vmatprep.subr.mxu0 %v765
    %1988 = vmatpush1.msra.mxu0 %v764
    %1989 = vmatprep.subr.mxu0 %v1013
    %1990 = vmatpush2.msra.mxu0 %v1012
    %1991 = vmatprep.subr.mxu0 %v1005
    %1992 = vmatpush2.msra.mxu0 %v1004
    %1993 = vmatprep.subr.mxu0 %v997
    %1994 = vmatpush2.msra.mxu0 %v996
    %1995 = vmatprep.subr.mxu0 %v989
    %1996 = vmatpush2.msra.mxu0 %v988
    %1997 = vmatprep.subr.mxu0 %v981
    %1998 = vmatpush2.msra.mxu0 %v980
    %1999 = vmatprep.subr.mxu0 %v973
    %2000 = vmatpush2.msra.mxu0 %v972
    %2001 = vmatprep.subr.mxu0 %v965
    %2002 = vmatpush2.msra.mxu0 %v964
    %2003 = vmatprep.subr.mxu0 %v957
    %2004 = vmatpush2.msra.mxu0 %v956
    %2005 = vmatprep.subr.mxu0 %v949
    %2006 = vmatpush2.msra.mxu0 %v948
    %2007 = vmatprep.subr.mxu0 %v941
    %2008 = vmatpush2.msra.mxu0 %v940
    %2009 = vmatprep.subr.mxu0 %v933
    %2010 = vmatpush2.msra.mxu0 %v932
    %2011 = vmatprep.subr.mxu0 %v925
    %2012 = vmatpush2.msra.mxu0 %v924
    %2013 = vmatprep.subr.mxu0 %v917
    %2014 = vmatpush2.msra.mxu0 %v916
    %2015 = vmatprep.subr.mxu0 %v909
    %2016 = vmatpush2.msra.mxu0 %v908
    %2017 = vmatprep.subr.mxu0 %v901
    %2018 = vmatpush2.msra.mxu0 %v900
    %2019 = vmatprep.subr.mxu0 %v893
    %2020 = vmatpush2.msra.mxu0 %v892
    %2021 = vmatprep.mubr.f32.mxu0 %v501
    %2022 = vmatmul.mubr.f32.gmra.mxu0 %v500
    %v2023 = vpop.f32.mrf.mxu0
    %v2024 = vadd.f32 %v1953, %v2023
    %v2025 = vpop.f32.mrf.mxu0
    %v2026 = vadd.f32 %v1955, %v2025
    %2027 = vdwg.mxu0
    %2028 = vmatprep.subr.mxu0 %v1141
    %2029 = vmatpush1.msra.mxu0 %v1140
    %2030 = vmatprep.subr.mxu0 %v1133
    %2031 = vmatpush1.msra.mxu0 %v1132
    %2032 = vmatprep.subr.mxu0 %v1125
    %2033 = vmatpush1.msra.mxu0 %v1124
    %2034 = vmatprep.subr.mxu0 %v1117
    %2035 = vmatpush1.msra.mxu0 %v1116
    %2036 = vmatprep.subr.mxu0 %v1109
    %2037 = vmatpush1.msra.mxu0 %v1108
    %2038 = vmatprep.subr.mxu0 %v1101
    %2039 = vmatpush1.msra.mxu0 %v1100
    %2040 = vmatprep.subr.mxu0 %v1093
    %2041 = vmatpush1.msra.mxu0 %v1092
    %2042 = vmatprep.subr.mxu0 %v1085
    %2043 = vmatpush1.msra.mxu0 %v1084
    %2044 = vmatprep.subr.mxu0 %v1077
    %2045 = vmatpush1.msra.mxu0 %v1076
    %2046 = vmatprep.subr.mxu0 %v1069
    %2047 = vmatpush1.msra.mxu0 %v1068
    %2048 = vmatprep.subr.mxu0 %v1061
    %2049 = vmatpush1.msra.mxu0 %v1060
    %2050 = vmatprep.subr.mxu0 %v1053
    %2051 = vmatpush1.msra.mxu0 %v1052
    %2052 = vmatprep.subr.mxu0 %v1045
    %2053 = vmatpush1.msra.mxu0 %v1044
    %2054 = vmatprep.subr.mxu0 %v1037
    %2055 = vmatpush1.msra.mxu0 %v1036
    %2056 = vmatprep.subr.mxu0 %v1029
    %2057 = vmatpush1.msra.mxu0 %v1028
    %2058 = vmatprep.subr.mxu0 %v1021
    %2059 = vmatpush1.msra.mxu0 %v1020
    %2060 = vmatprep.subr.mxu0 %v1269
    %2061 = vmatpush2.msra.mxu0 %v1268
    %2062 = vmatprep.subr.mxu0 %v1261
    %2063 = vmatpush2.msra.mxu0 %v1260
    %2064 = vmatprep.subr.mxu0 %v1253
    %2065 = vmatpush2.msra.mxu0 %v1252
    %2066 = vmatprep.subr.mxu0 %v1245
    %2067 = vmatpush2.msra.mxu0 %v1244
    %2068 = vmatprep.subr.mxu0 %v1237
    %2069 = vmatpush2.msra.mxu0 %v1236
    %2070 = vmatprep.subr.mxu0 %v1229
    %2071 = vmatpush2.msra.mxu0 %v1228
    %2072 = vmatprep.subr.mxu0 %v1221
    %2073 = vmatpush2.msra.mxu0 %v1220
    %2074 = vmatprep.subr.mxu0 %v1213
    %2075 = vmatpush2.msra.mxu0 %v1212
    %2076 = vmatprep.subr.mxu0 %v1205
    %2077 = vmatpush2.msra.mxu0 %v1204
    %2078 = vmatprep.subr.mxu0 %v1197
    %2079 = vmatpush2.msra.mxu0 %v1196
    %2080 = vmatprep.subr.mxu0 %v1189
    %2081 = vmatpush2.msra.mxu0 %v1188
    %2082 = vmatprep.subr.mxu0 %v1181
    %2083 = vmatpush2.msra.mxu0 %v1180
    %2084 = vmatprep.subr.mxu0 %v1173
    %2085 = vmatpush2.msra.mxu0 %v1172
    %2086 = vmatprep.subr.mxu0 %v1165
    %2087 = vmatpush2.msra.mxu0 %v1164
    %2088 = vmatprep.subr.mxu0 %v1157
    %2089 = vmatpush2.msra.mxu0 %v1156
    %2090 = vmatprep.subr.mxu0 %v1149
    %2091 = vmatpush2.msra.mxu0 %v1148
    %2092 = vmatprep.mubr.f32.mxu0 %v503
    %2093 = vmatmul.mubr.f32.gmra.mxu0 %v502
    %v2094 = vpop.f32.mrf.mxu0
    %v2095 = vadd.f32 %v2024, %v2094
    %v2096 = vpop.f32.mrf.mxu0
    %v2097 = vadd.f32 %v2026, %v2096
    %2098 = vdwg.mxu0
    %2099 = vmatprep.subr.mxu0 %v1397
    %2100 = vmatpush1.msra.mxu0 %v1396
    %2101 = vmatprep.subr.mxu0 %v1389
    %2102 = vmatpush1.msra.mxu0 %v1388
    %2103 = vmatprep.subr.mxu0 %v1381
    %2104 = vmatpush1.msra.mxu0 %v1380
    %2105 = vmatprep.subr.mxu0 %v1373
    %2106 = vmatpush1.msra.mxu0 %v1372
    %2107 = vmatprep.subr.mxu0 %v1365
    %2108 = vmatpush1.msra.mxu0 %v1364
    %2109 = vmatprep.subr.mxu0 %v1357
    %2110 = vmatpush1.msra.mxu0 %v1356
    %2111 = vmatprep.subr.mxu0 %v1349
    %2112 = vmatpush1.msra.mxu0 %v1348
    %2113 = vmatprep.subr.mxu0 %v1341
    %2114 = vmatpush1.msra.mxu0 %v1340
    %2115 = vmatprep.subr.mxu0 %v1333
    %2116 = vmatpush1.msra.mxu0 %v1332
    %2117 = vmatprep.subr.mxu0 %v1325
    %2118 = vmatpush1.msra.mxu0 %v1324
    %2119 = vmatprep.subr.mxu0 %v1317
    %2120 = vmatpush1.msra.mxu0 %v1316
    %2121 = vmatprep.subr.mxu0 %v1309
    %2122 = vmatpush1.msra.mxu0 %v1308
    %2123 = vmatprep.subr.mxu0 %v1301
    %2124 = vmatpush1.msra.mxu0 %v1300
    %2125 = vmatprep.subr.mxu0 %v1293
    %2126 = vmatpush1.msra.mxu0 %v1292
    %2127 = vmatprep.subr.mxu0 %v1285
    %2128 = vmatpush1.msra.mxu0 %v1284
    %2129 = vmatprep.subr.mxu0 %v1277
    %2130 = vmatpush1.msra.mxu0 %v1276
    %2131 = vmatprep.subr.mxu0 %v1525
    %2132 = vmatpush2.msra.mxu0 %v1524
    %2133 = vmatprep.subr.mxu0 %v1517
    %2134 = vmatpush2.msra.mxu0 %v1516
    %2135 = vmatprep.subr.mxu0 %v1509
    %2136 = vmatpush2.msra.mxu0 %v1508
    %2137 = vmatprep.subr.mxu0 %v1501
    %2138 = vmatpush2.msra.mxu0 %v1500
    %2139 = vmatprep.subr.mxu0 %v1493
    %2140 = vmatpush2.msra.mxu0 %v1492
    %2141 = vmatprep.subr.mxu0 %v1485
    %2142 = vmatpush2.msra.mxu0 %v1484
    %2143 = vmatprep.subr.mxu0 %v1477
    %2144 = vmatpush2.msra.mxu0 %v1476
    %2145 = vmatprep.subr.mxu0 %v1469
    %2146 = vmatpush2.msra.mxu0 %v1468
    %2147 = vmatprep.subr.mxu0 %v1461
    %2148 = vmatpush2.msra.mxu0 %v1460
    %2149 = vmatprep.subr.mxu0 %v1453
    %2150 = vmatpush2.msra.mxu0 %v1452
    %2151 = vmatprep.subr.mxu0 %v1445
    %2152 = vmatpush2.msra.mxu0 %v1444
    %2153 = vmatprep.subr.mxu0 %v1437
    %2154 = vmatpush2.msra.mxu0 %v1436
    %2155 = vmatprep.subr.mxu0 %v1429
    %2156 = vmatpush2.msra.mxu0 %v1428
    %2157 = vmatprep.subr.mxu0 %v1421
    %2158 = vmatpush2.msra.mxu0 %v1420
    %2159 = vmatprep.subr.mxu0 %v1413
    %2160 = vmatpush2.msra.mxu0 %v1412
    %2161 = vmatprep.subr.mxu0 %v1405
    %2162 = vmatpush2.msra.mxu0 %v1404
    %2163 = vmatprep.mubr.f32.mxu0 %v505
    %2164 = vmatmul.mubr.f32.gmra.mxu0 %v504
    %v2165 = vpop.f32.mrf.mxu0
    %v2166 = vadd.f32 %v2095, %v2165
    %v2167 = vpop.f32.mrf.mxu0
    %v2168 = vadd.f32 %v2097, %v2167
    %2169 = vdwg.mxu0
    %2170 = vmatprep.subr.mxu0 %v631
    %2171 = vmatpush1.msra.mxu0 %v630
    %2172 = vmatprep.subr.mxu0 %v623
    %2173 = vmatpush1.msra.mxu0 %v622
    %2174 = vmatprep.subr.mxu0 %v615
    %2175 = vmatpush1.msra.mxu0 %v614
    %2176 = vmatprep.subr.mxu0 %v607
    %2177 = vmatpush1.msra.mxu0 %v606
    %2178 = vmatprep.subr.mxu0 %v599
    %2179 = vmatpush1.msra.mxu0 %v598
    %2180 = vmatprep.subr.mxu0 %v591
    %2181 = vmatpush1.msra.mxu0 %v590
    %2182 = vmatprep.subr.mxu0 %v583
    %2183 = vmatpush1.msra.mxu0 %v582
    %2184 = vmatprep.subr.mxu0 %v575
    %2185 = vmatpush1.msra.mxu0 %v574
    %2186 = vmatprep.subr.mxu0 %v567
    %2187 = vmatpush1.msra.mxu0 %v566
    %2188 = vmatprep.subr.mxu0 %v559
    %2189 = vmatpush1.msra.mxu0 %v558
    %2190 = vmatprep.subr.mxu0 %v551
    %2191 = vmatpush1.msra.mxu0 %v550
    %2192 = vmatprep.subr.mxu0 %v543
    %2193 = vmatpush1.msra.mxu0 %v542
    %2194 = vmatprep.subr.mxu0 %v535
    %2195 = vmatpush1.msra.mxu0 %v534
    %2196 = vmatprep.subr.mxu0 %v527
    %2197 = vmatpush1.msra.mxu0 %v526
    %2198 = vmatprep.subr.mxu0 %v519
    %2199 = vmatpush1.msra.mxu0 %v518
    %2200 = vmatprep.subr.mxu0 %v511
    %2201 = vmatpush1.msra.mxu0 %v510
    %2202 = vmatprep.subr.mxu0 %v759
    %2203 = vmatpush2.msra.mxu0 %v758
    %2204 = vmatprep.subr.mxu0 %v751
    %2205 = vmatpush2.msra.mxu0 %v750
    %2206 = vmatprep.subr.mxu0 %v743
    %2207 = vmatpush2.msra.mxu0 %v742
    %2208 = vmatprep.subr.mxu0 %v735
    %2209 = vmatpush2.msra.mxu0 %v734
    %2210 = vmatprep.subr.mxu0 %v727
    %2211 = vmatpush2.msra.mxu0 %v726
    %2212 = vmatprep.subr.mxu0 %v719
    %2213 = vmatpush2.msra.mxu0 %v718
    %2214 = vmatprep.subr.mxu0 %v711
    %2215 = vmatpush2.msra.mxu0 %v710
    %2216 = vmatprep.subr.mxu0 %v703
    %2217 = vmatpush2.msra.mxu0 %v702
    %2218 = vmatprep.subr.mxu0 %v695
    %2219 = vmatpush2.msra.mxu0 %v694
    %2220 = vmatprep.subr.mxu0 %v687
    %2221 = vmatpush2.msra.mxu0 %v686
    %2222 = vmatprep.subr.mxu0 %v679
    %2223 = vmatpush2.msra.mxu0 %v678
    %2224 = vmatprep.subr.mxu0 %v671
    %2225 = vmatpush2.msra.mxu0 %v670
    %2226 = vmatprep.subr.mxu0 %v663
    %2227 = vmatpush2.msra.mxu0 %v662
    %2228 = vmatprep.subr.mxu0 %v655
    %2229 = vmatpush2.msra.mxu0 %v654
    %2230 = vmatprep.subr.mxu0 %v647
    %2231 = vmatpush2.msra.mxu0 %v646
    %2232 = vmatprep.subr.mxu0 %v639
    %2233 = vmatpush2.msra.mxu0 %v638
    %2234 = vmatprep.mubr.f32.mxu0 %v499
    %2235 = vmatmul.mubr.f32.gmra.mxu0 %v498
    %v2236 = vpop.f32.mrf.mxu0
    %v2237 = vadd.f32 %v1589, %v2236
    %v2238 = vpop.f32.mrf.mxu0
    %v2239 = vadd.f32 %v1593, %v2238
    %2240 = vdwg.mxu0
    %2241 = vmatprep.subr.mxu0 %v887
    %2242 = vmatpush1.msra.mxu0 %v886
    %2243 = vmatprep.subr.mxu0 %v879
    %2244 = vmatpush1.msra.mxu0 %v878
    %2245 = vmatprep.subr.mxu0 %v871
    %2246 = vmatpush1.msra.mxu0 %v870
    %2247 = vmatprep.subr.mxu0 %v863
    %2248 = vmatpush1.msra.mxu0 %v862
    %2249 = vmatprep.subr.mxu0 %v855
    %2250 = vmatpush1.msra.mxu0 %v854
    %2251 = vmatprep.subr.mxu0 %v847
    %2252 = vmatpush1.msra.mxu0 %v846
    %2253 = vmatprep.subr.mxu0 %v839
    %2254 = vmatpush1.msra.mxu0 %v838
    %2255 = vmatprep.subr.mxu0 %v831
    %2256 = vmatpush1.msra.mxu0 %v830
    %2257 = vmatprep.subr.mxu0 %v823
    %2258 = vmatpush1.msra.mxu0 %v822
    %2259 = vmatprep.subr.mxu0 %v815
    %2260 = vmatpush1.msra.mxu0 %v814
    %2261 = vmatprep.subr.mxu0 %v807
    %2262 = vmatpush1.msra.mxu0 %v806
    %2263 = vmatprep.subr.mxu0 %v799
    %2264 = vmatpush1.msra.mxu0 %v798
    %2265 = vmatprep.subr.mxu0 %v791
    %2266 = vmatpush1.msra.mxu0 %v790
    %2267 = vmatprep.subr.mxu0 %v783
    %2268 = vmatpush1.msra.mxu0 %v782
    %2269 = vmatprep.subr.mxu0 %v775
    %2270 = vmatpush1.msra.mxu0 %v774
    %2271 = vmatprep.subr.mxu0 %v767
    %2272 = vmatpush1.msra.mxu0 %v766
    %2273 = vmatprep.subr.mxu0 %v1015
    %2274 = vmatpush2.msra.mxu0 %v1014
    %2275 = vmatprep.subr.mxu0 %v1007
    %2276 = vmatpush2.msra.mxu0 %v1006
    %2277 = vmatprep.subr.mxu0 %v999
    %2278 = vmatpush2.msra.mxu0 %v998
    %2279 = vmatprep.subr.mxu0 %v991
    %2280 = vmatpush2.msra.mxu0 %v990
    %2281 = vmatprep.subr.mxu0 %v983
    %2282 = vmatpush2.msra.mxu0 %v982
    %2283 = vmatprep.subr.mxu0 %v975
    %2284 = vmatpush2.msra.mxu0 %v974
    %2285 = vmatprep.subr.mxu0 %v967
    %2286 = vmatpush2.msra.mxu0 %v966
    %2287 = vmatprep.subr.mxu0 %v959
    %2288 = vmatpush2.msra.mxu0 %v958
    %2289 = vmatprep.subr.mxu0 %v951
    %2290 = vmatpush2.msra.mxu0 %v950
    %2291 = vmatprep.subr.mxu0 %v943
    %2292 = vmatpush2.msra.mxu0 %v942
    %2293 = vmatprep.subr.mxu0 %v935
    %2294 = vmatpush2.msra.mxu0 %v934
    %2295 = vmatprep.subr.mxu0 %v927
    %2296 = vmatpush2.msra.mxu0 %v926
    %2297 = vmatprep.subr.mxu0 %v919
    %2298 = vmatpush2.msra.mxu0 %v918
    %2299 = vmatprep.subr.mxu0 %v911
    %2300 = vmatpush2.msra.mxu0 %v910
    %2301 = vmatprep.subr.mxu0 %v903
    %2302 = vmatpush2.msra.mxu0 %v902
    %2303 = vmatprep.subr.mxu0 %v895
    %2304 = vmatpush2.msra.mxu0 %v894
    %2305 = vmatprep.mubr.f32.mxu0 %v501
    %2306 = vmatmul.mubr.f32.gmra.mxu0 %v500
    %v2307 = vpop.f32.mrf.mxu0
    %v2308 = vadd.f32 %v2237, %v2307
    %v2309 = vpop.f32.mrf.mxu0
    %v2310 = vadd.f32 %v2239, %v2309
    %2311 = vdwg.mxu0
    %2312 = vmatprep.subr.mxu0 %v1143
    %2313 = vmatpush1.msra.mxu0 %v1142
    %2314 = vmatprep.subr.mxu0 %v1135
    %2315 = vmatpush1.msra.mxu0 %v1134
    %2316 = vmatprep.subr.mxu0 %v1127
    %2317 = vmatpush1.msra.mxu0 %v1126
    %2318 = vmatprep.subr.mxu0 %v1119
    %2319 = vmatpush1.msra.mxu0 %v1118
    %2320 = vmatprep.subr.mxu0 %v1111
    %2321 = vmatpush1.msra.mxu0 %v1110
    %2322 = vmatprep.subr.mxu0 %v1103
    %2323 = vmatpush1.msra.mxu0 %v1102
    %2324 = vmatprep.subr.mxu0 %v1095
    %2325 = vmatpush1.msra.mxu0 %v1094
    %2326 = vmatprep.subr.mxu0 %v1087
    %2327 = vmatpush1.msra.mxu0 %v1086
    %2328 = vmatprep.subr.mxu0 %v1079
    %2329 = vmatpush1.msra.mxu0 %v1078
    %2330 = vmatprep.subr.mxu0 %v1071
    %2331 = vmatpush1.msra.mxu0 %v1070
    %2332 = vmatprep.subr.mxu0 %v1063
    %2333 = vmatpush1.msra.mxu0 %v1062
    %2334 = vmatprep.subr.mxu0 %v1055
    %2335 = vmatpush1.msra.mxu0 %v1054
    %2336 = vmatprep.subr.mxu0 %v1047
    %2337 = vmatpush1.msra.mxu0 %v1046
    %2338 = vmatprep.subr.mxu0 %v1039
    %2339 = vmatpush1.msra.mxu0 %v1038
    %2340 = vmatprep.subr.mxu0 %v1031
    %2341 = vmatpush1.msra.mxu0 %v1030
    %2342 = vmatprep.subr.mxu0 %v1023
    %2343 = vmatpush1.msra.mxu0 %v1022
    %2344 = vmatprep.subr.mxu0 %v1271
    %2345 = vmatpush2.msra.mxu0 %v1270
    %2346 = vmatprep.subr.mxu0 %v1263
    %2347 = vmatpush2.msra.mxu0 %v1262
    %2348 = vmatprep.subr.mxu0 %v1255
    %2349 = vmatpush2.msra.mxu0 %v1254
    %2350 = vmatprep.subr.mxu0 %v1247
    %2351 = vmatpush2.msra.mxu0 %v1246
    %2352 = vmatprep.subr.mxu0 %v1239
    %2353 = vmatpush2.msra.mxu0 %v1238
    %2354 = vmatprep.subr.mxu0 %v1231
    %2355 = vmatpush2.msra.mxu0 %v1230
    %2356 = vmatprep.subr.mxu0 %v1223
    %2357 = vmatpush2.msra.mxu0 %v1222
    %2358 = vmatprep.subr.mxu0 %v1215
    %2359 = vmatpush2.msra.mxu0 %v1214
    %2360 = vmatprep.subr.mxu0 %v1207
    %2361 = vmatpush2.msra.mxu0 %v1206
    %2362 = vmatprep.subr.mxu0 %v1199
    %2363 = vmatpush2.msra.mxu0 %v1198
    %2364 = vmatprep.subr.mxu0 %v1191
    %2365 = vmatpush2.msra.mxu0 %v1190
    %2366 = vmatprep.subr.mxu0 %v1183
    %2367 = vmatpush2.msra.mxu0 %v1182
    %2368 = vmatprep.subr.mxu0 %v1175
    %2369 = vmatpush2.msra.mxu0 %v1174
    %2370 = vmatprep.subr.mxu0 %v1167
    %2371 = vmatpush2.msra.mxu0 %v1166
    %2372 = vmatprep.subr.mxu0 %v1159
    %2373 = vmatpush2.msra.mxu0 %v1158
    %2374 = vmatprep.subr.mxu0 %v1151
    %2375 = vmatpush2.msra.mxu0 %v1150
    %2376 = vmatprep.mubr.f32.mxu0 %v503
    %2377 = vmatmul.mubr.f32.gmra.mxu0 %v502
    %v2378 = vpop.f32.mrf.mxu0
    %v2379 = vadd.f32 %v2308, %v2378
    %v2380 = vpop.f32.mrf.mxu0
    %v2381 = vadd.f32 %v2310, %v2380
    %2382 = vdwg.mxu0
    %2383 = vmatprep.subr.mxu0 %v1399
    %2384 = vmatpush1.msra.mxu0 %v1398
    %2385 = vmatprep.subr.mxu0 %v1391
    %2386 = vmatpush1.msra.mxu0 %v1390
    %2387 = vmatprep.subr.mxu0 %v1383
    %2388 = vmatpush1.msra.mxu0 %v1382
    %2389 = vmatprep.subr.mxu0 %v1375
    %2390 = vmatpush1.msra.mxu0 %v1374
    %2391 = vmatprep.subr.mxu0 %v1367
    %2392 = vmatpush1.msra.mxu0 %v1366
    %2393 = vmatprep.subr.mxu0 %v1359
    %2394 = vmatpush1.msra.mxu0 %v1358
    %2395 = vmatprep.subr.mxu0 %v1351
    %2396 = vmatpush1.msra.mxu0 %v1350
    %2397 = vmatprep.subr.mxu0 %v1343
    %2398 = vmatpush1.msra.mxu0 %v1342
    %2399 = vmatprep.subr.mxu0 %v1335
    %2400 = vmatpush1.msra.mxu0 %v1334
    %2401 = vmatprep.subr.mxu0 %v1327
    %2402 = vmatpush1.msra.mxu0 %v1326
    %2403 = vmatprep.subr.mxu0 %v1319
    %2404 = vmatpush1.msra.mxu0 %v1318
    %2405 = vmatprep.subr.mxu0 %v1311
    %2406 = vmatpush1.msra.mxu0 %v1310
    %2407 = vmatprep.subr.mxu0 %v1303
    %2408 = vmatpush1.msra.mxu0 %v1302
    %2409 = vmatprep.subr.mxu0 %v1295
    %2410 = vmatpush1.msra.mxu0 %v1294
    %2411 = vmatprep.subr.mxu0 %v1287
    %2412 = vmatpush1.msra.mxu0 %v1286
    %2413 = vmatprep.subr.mxu0 %v1279
    %2414 = vmatpush1.msra.mxu0 %v1278
    %2415 = vmatprep.subr.mxu0 %v1527
    %2416 = vmatpush2.msra.mxu0 %v1526
    %2417 = vmatprep.subr.mxu0 %v1519
    %2418 = vmatpush2.msra.mxu0 %v1518
    %2419 = vmatprep.subr.mxu0 %v1511
    %2420 = vmatpush2.msra.mxu0 %v1510
    %2421 = vmatprep.subr.mxu0 %v1503
    %2422 = vmatpush2.msra.mxu0 %v1502
    %2423 = vmatprep.subr.mxu0 %v1495
    %2424 = vmatpush2.msra.mxu0 %v1494
    %2425 = vmatprep.subr.mxu0 %v1487
    %2426 = vmatpush2.msra.mxu0 %v1486
    %2427 = vmatprep.subr.mxu0 %v1479
    %2428 = vmatpush2.msra.mxu0 %v1478
    %2429 = vmatprep.subr.mxu0 %v1471
    %2430 = vmatpush2.msra.mxu0 %v1470
    %2431 = vmatprep.subr.mxu0 %v1463
    %2432 = vmatpush2.msra.mxu0 %v1462
    %2433 = vmatprep.subr.mxu0 %v1455
    %2434 = vmatpush2.msra.mxu0 %v1454
    %2435 = vmatprep.subr.mxu0 %v1447
    %2436 = vmatpush2.msra.mxu0 %v1446
    %2437 = vmatprep.subr.mxu0 %v1439
    %2438 = vmatpush2.msra.mxu0 %v1438
    %2439 = vmatprep.subr.mxu0 %v1431
    %2440 = vmatpush2.msra.mxu0 %v1430
    %2441 = vmatprep.subr.mxu0 %v1423
    %2442 = vmatpush2.msra.mxu0 %v1422
    %2443 = vmatprep.subr.mxu0 %v1415
    %2444 = vmatpush2.msra.mxu0 %v1414
    %2445 = vmatprep.subr.mxu0 %v1407
    %2446 = vmatpush2.msra.mxu0 %v1406
    %2447 = vmatprep.mubr.f32.mxu0 %v505
    %2448 = vmatmul.mubr.f32.gmra.mxu0 %v504
    %v2449 = vpop.f32.mrf.mxu0
    %v2450 = vadd.f32 %v2379, %v2449
    %v2451 = vpop.f32.mrf.mxu0
    %v2452 = vadd.f32 %v2381, %v2451
    %2453 = vdwg.mxu0
    %2454 = vmatprep.subr.mxu0 %v633
    %2455 = vmatpush1.msra.mxu0 %v632
    %2456 = vmatprep.subr.mxu0 %v625
    %2457 = vmatpush1.msra.mxu0 %v624
    %2458 = vmatprep.subr.mxu0 %v617
    %2459 = vmatpush1.msra.mxu0 %v616
    %2460 = vmatprep.subr.mxu0 %v609
    %2461 = vmatpush1.msra.mxu0 %v608
    %2462 = vmatprep.subr.mxu0 %v601
    %2463 = vmatpush1.msra.mxu0 %v600
    %2464 = vmatprep.subr.mxu0 %v593
    %2465 = vmatpush1.msra.mxu0 %v592
    %2466 = vmatprep.subr.mxu0 %v585
    %2467 = vmatpush1.msra.mxu0 %v584
    %2468 = vmatprep.subr.mxu0 %v577
    %2469 = vmatpush1.msra.mxu0 %v576
    %2470 = vmatprep.subr.mxu0 %v569
    %2471 = vmatpush1.msra.mxu0 %v568
    %2472 = vmatprep.subr.mxu0 %v561
    %2473 = vmatpush1.msra.mxu0 %v560
    %2474 = vmatprep.subr.mxu0 %v553
    %2475 = vmatpush1.msra.mxu0 %v552
    %2476 = vmatprep.subr.mxu0 %v545
    %2477 = vmatpush1.msra.mxu0 %v544
    %2478 = vmatprep.subr.mxu0 %v537
    %2479 = vmatpush1.msra.mxu0 %v536
    %2480 = vmatprep.subr.mxu0 %v529
    %2481 = vmatpush1.msra.mxu0 %v528
    %2482 = vmatprep.subr.mxu0 %v521
    %2483 = vmatpush1.msra.mxu0 %v520
    %2484 = vmatprep.subr.mxu0 %v513
    %2485 = vmatpush1.msra.mxu0 %v512
    %2486 = vmatprep.subr.mxu0 %v761
    %2487 = vmatpush2.msra.mxu0 %v760
    %2488 = vmatprep.subr.mxu0 %v753
    %2489 = vmatpush2.msra.mxu0 %v752
    %2490 = vmatprep.subr.mxu0 %v745
    %2491 = vmatpush2.msra.mxu0 %v744
    %2492 = vmatprep.subr.mxu0 %v737
    %2493 = vmatpush2.msra.mxu0 %v736
    %2494 = vmatprep.subr.mxu0 %v729
    %2495 = vmatpush2.msra.mxu0 %v728
    %2496 = vmatprep.subr.mxu0 %v721
    %2497 = vmatpush2.msra.mxu0 %v720
    %2498 = vmatprep.subr.mxu0 %v713
    %2499 = vmatpush2.msra.mxu0 %v712
    %2500 = vmatprep.subr.mxu0 %v705
    %2501 = vmatpush2.msra.mxu0 %v704
    %2502 = vmatprep.subr.mxu0 %v697
    %2503 = vmatpush2.msra.mxu0 %v696
    %2504 = vmatprep.subr.mxu0 %v689
    %2505 = vmatpush2.msra.mxu0 %v688
    %2506 = vmatprep.subr.mxu0 %v681
    %2507 = vmatpush2.msra.mxu0 %v680
    %2508 = vmatprep.subr.mxu0 %v673
    %2509 = vmatpush2.msra.mxu0 %v672
    %2510 = vmatprep.subr.mxu0 %v665
    %2511 = vmatpush2.msra.mxu0 %v664
    %2512 = vmatprep.subr.mxu0 %v657
    %2513 = vmatpush2.msra.mxu0 %v656
    %2514 = vmatprep.subr.mxu0 %v649
    %2515 = vmatpush2.msra.mxu0 %v648
    %2516 = vmatprep.subr.mxu0 %v641
    %2517 = vmatpush2.msra.mxu0 %v640
    %2518 = vmatprep.mubr.f32.mxu0 %v499
    %2519 = vmatmul.mubr.f32.gmra.mxu0 %v498
    %v2520 = vpop.f32.mrf.mxu0
    %v2521 = vadd.f32 %v1597, %v2520
    %v2522 = vpop.f32.mrf.mxu0
    %v2523 = vadd.f32 %v1601, %v2522
    %2524 = vdwg.mxu0
    %2525 = vmatprep.subr.mxu0 %v889
    %2526 = vmatpush1.msra.mxu0 %v888
    %2527 = vmatprep.subr.mxu0 %v881
    %2528 = vmatpush1.msra.mxu0 %v880
    %2529 = vmatprep.subr.mxu0 %v873
    %2530 = vmatpush1.msra.mxu0 %v872
    %2531 = vmatprep.subr.mxu0 %v865
    %2532 = vmatpush1.msra.mxu0 %v864
    %2533 = vmatprep.subr.mxu0 %v857
    %2534 = vmatpush1.msra.mxu0 %v856
    %2535 = vmatprep.subr.mxu0 %v849
    %2536 = vmatpush1.msra.mxu0 %v848
    %2537 = vmatprep.subr.mxu0 %v841
    %2538 = vmatpush1.msra.mxu0 %v840
    %2539 = vmatprep.subr.mxu0 %v833
    %2540 = vmatpush1.msra.mxu0 %v832
    %2541 = vmatprep.subr.mxu0 %v825
    %2542 = vmatpush1.msra.mxu0 %v824
    %2543 = vmatprep.subr.mxu0 %v817
    %2544 = vmatpush1.msra.mxu0 %v816
    %2545 = vmatprep.subr.mxu0 %v809
    %2546 = vmatpush1.msra.mxu0 %v808
    %2547 = vmatprep.subr.mxu0 %v801
    %2548 = vmatpush1.msra.mxu0 %v800
    %2549 = vmatprep.subr.mxu0 %v793
    %2550 = vmatpush1.msra.mxu0 %v792
    %2551 = vmatprep.subr.mxu0 %v785
    %2552 = vmatpush1.msra.mxu0 %v784
    %2553 = vmatprep.subr.mxu0 %v777
    %2554 = vmatpush1.msra.mxu0 %v776
    %2555 = vmatprep.subr.mxu0 %v769
    %2556 = vmatpush1.msra.mxu0 %v768
    %2557 = vmatprep.subr.mxu0 %v1017
    %2558 = vmatpush2.msra.mxu0 %v1016
    %2559 = vmatprep.subr.mxu0 %v1009
    %2560 = vmatpush2.msra.mxu0 %v1008
    %2561 = vmatprep.subr.mxu0 %v1001
    %2562 = vmatpush2.msra.mxu0 %v1000
    %2563 = vmatprep.subr.mxu0 %v993
    %2564 = vmatpush2.msra.mxu0 %v992
    %2565 = vmatprep.subr.mxu0 %v985
    %2566 = vmatpush2.msra.mxu0 %v984
    %2567 = vmatprep.subr.mxu0 %v977
    %2568 = vmatpush2.msra.mxu0 %v976
    %2569 = vmatprep.subr.mxu0 %v969
    %2570 = vmatpush2.msra.mxu0 %v968
    %2571 = vmatprep.subr.mxu0 %v961
    %2572 = vmatpush2.msra.mxu0 %v960
    %2573 = vmatprep.subr.mxu0 %v953
    %2574 = vmatpush2.msra.mxu0 %v952
    %2575 = vmatprep.subr.mxu0 %v945
    %2576 = vmatpush2.msra.mxu0 %v944
    %2577 = vmatprep.subr.mxu0 %v937
    %2578 = vmatpush2.msra.mxu0 %v936
    %2579 = vmatprep.subr.mxu0 %v929
    %2580 = vmatpush2.msra.mxu0 %v928
    %2581 = vmatprep.subr.mxu0 %v921
    %2582 = vmatpush2.msra.mxu0 %v920
    %2583 = vmatprep.subr.mxu0 %v913
    %2584 = vmatpush2.msra.mxu0 %v912
    %2585 = vmatprep.subr.mxu0 %v905
    %2586 = vmatpush2.msra.mxu0 %v904
    %2587 = vmatprep.subr.mxu0 %v897
    %2588 = vmatpush2.msra.mxu0 %v896
    %2589 = vmatprep.mubr.f32.mxu0 %v501
    %2590 = vmatmul.mubr.f32.gmra.mxu0 %v500
    %v2591 = vpop.f32.mrf.mxu0
    %v2592 = vadd.f32 %v2521, %v2591
    %v2593 = vpop.f32.mrf.mxu0
    %v2594 = vadd.f32 %v2523, %v2593
    %2595 = vdwg.mxu0
    %2596 = vmatprep.subr.mxu0 %v1145
    %2597 = vmatpush1.msra.mxu0 %v1144
    %2598 = vmatprep.subr.mxu0 %v1137
    %2599 = vmatpush1.msra.mxu0 %v1136
    %2600 = vmatprep.subr.mxu0 %v1129
    %2601 = vmatpush1.msra.mxu0 %v1128
    %2602 = vmatprep.subr.mxu0 %v1121
    %2603 = vmatpush1.msra.mxu0 %v1120
    %2604 = vmatprep.subr.mxu0 %v1113
    %2605 = vmatpush1.msra.mxu0 %v1112
    %2606 = vmatprep.subr.mxu0 %v1105
    %2607 = vmatpush1.msra.mxu0 %v1104
    %2608 = vmatprep.subr.mxu0 %v1097
    %2609 = vmatpush1.msra.mxu0 %v1096
    %2610 = vmatprep.subr.mxu0 %v1089
    %2611 = vmatpush1.msra.mxu0 %v1088
    %2612 = vmatprep.subr.mxu0 %v1081
    %2613 = vmatpush1.msra.mxu0 %v1080
    %2614 = vmatprep.subr.mxu0 %v1073
    %2615 = vmatpush1.msra.mxu0 %v1072
    %2616 = vmatprep.subr.mxu0 %v1065
    %2617 = vmatpush1.msra.mxu0 %v1064
    %2618 = vmatprep.subr.mxu0 %v1057
    %2619 = vmatpush1.msra.mxu0 %v1056
    %2620 = vmatprep.subr.mxu0 %v1049
    %2621 = vmatpush1.msra.mxu0 %v1048
    %2622 = vmatprep.subr.mxu0 %v1041
    %2623 = vmatpush1.msra.mxu0 %v1040
    %2624 = vmatprep.subr.mxu0 %v1033
    %2625 = vmatpush1.msra.mxu0 %v1032
    %2626 = vmatprep.subr.mxu0 %v1025
    %2627 = vmatpush1.msra.mxu0 %v1024
    %2628 = vmatprep.subr.mxu0 %v1273
    %2629 = vmatpush2.msra.mxu0 %v1272
    %2630 = vmatprep.subr.mxu0 %v1265
    %2631 = vmatpush2.msra.mxu0 %v1264
    %2632 = vmatprep.subr.mxu0 %v1257
    %2633 = vmatpush2.msra.mxu0 %v1256
    %2634 = vmatprep.subr.mxu0 %v1249
    %2635 = vmatpush2.msra.mxu0 %v1248
    %2636 = vmatprep.subr.mxu0 %v1241
    %2637 = vmatpush2.msra.mxu0 %v1240
    %2638 = vmatprep.subr.mxu0 %v1233
    %2639 = vmatpush2.msra.mxu0 %v1232
    %2640 = vmatprep.subr.mxu0 %v1225
    %2641 = vmatpush2.msra.mxu0 %v1224
    %2642 = vmatprep.subr.mxu0 %v1217
    %2643 = vmatpush2.msra.mxu0 %v1216
    %2644 = vmatprep.subr.mxu0 %v1209
    %2645 = vmatpush2.msra.mxu0 %v1208
    %2646 = vmatprep.subr.mxu0 %v1201
    %2647 = vmatpush2.msra.mxu0 %v1200
    %2648 = vmatprep.subr.mxu0 %v1193
    %2649 = vmatpush2.msra.mxu0 %v1192
    %2650 = vmatprep.subr.mxu0 %v1185
    %2651 = vmatpush2.msra.mxu0 %v1184
    %2652 = vmatprep.subr.mxu0 %v1177
    %2653 = vmatpush2.msra.mxu0 %v1176
    %2654 = vmatprep.subr.mxu0 %v1169
    %2655 = vmatpush2.msra.mxu0 %v1168
    %2656 = vmatprep.subr.mxu0 %v1161
    %2657 = vmatpush2.msra.mxu0 %v1160
    %2658 = vmatprep.subr.mxu0 %v1153
    %2659 = vmatpush2.msra.mxu0 %v1152
    %2660 = vmatprep.mubr.f32.mxu0 %v503
    %2661 = vmatmul.mubr.f32.gmra.mxu0 %v502
    %v2662 = vpop.f32.mrf.mxu0
    %v2663 = vadd.f32 %v2592, %v2662
    %v2664 = vpop.f32.mrf.mxu0
    %v2665 = vadd.f32 %v2594, %v2664
    %2666 = vdwg.mxu0
    %2667 = vmatprep.subr.mxu0 %v1401
    %2668 = vmatpush1.msra.mxu0 %v1400
    %2669 = vmatprep.subr.mxu0 %v1393
    %2670 = vmatpush1.msra.mxu0 %v1392
    %2671 = vmatprep.subr.mxu0 %v1385
    %2672 = vmatpush1.msra.mxu0 %v1384
    %2673 = vmatprep.subr.mxu0 %v1377
    %2674 = vmatpush1.msra.mxu0 %v1376
    %2675 = vmatprep.subr.mxu0 %v1369
    %2676 = vmatpush1.msra.mxu0 %v1368
    %2677 = vmatprep.subr.mxu0 %v1361
    %2678 = vmatpush1.msra.mxu0 %v1360
    %2679 = vmatprep.subr.mxu0 %v1353
    %2680 = vmatpush1.msra.mxu0 %v1352
    %2681 = vmatprep.subr.mxu0 %v1345
    %2682 = vmatpush1.msra.mxu0 %v1344
    %2683 = vmatprep.subr.mxu0 %v1337
    %2684 = vmatpush1.msra.mxu0 %v1336
    %2685 = vmatprep.subr.mxu0 %v1329
    %2686 = vmatpush1.msra.mxu0 %v1328
    %2687 = vmatprep.subr.mxu0 %v1321
    %2688 = vmatpush1.msra.mxu0 %v1320
    %2689 = vmatprep.subr.mxu0 %v1313
    %2690 = vmatpush1.msra.mxu0 %v1312
    %2691 = vmatprep.subr.mxu0 %v1305
    %2692 = vmatpush1.msra.mxu0 %v1304
    %2693 = vmatprep.subr.mxu0 %v1297
    %2694 = vmatpush1.msra.mxu0 %v1296
    %2695 = vmatprep.subr.mxu0 %v1289
    %2696 = vmatpush1.msra.mxu0 %v1288
    %2697 = vmatprep.subr.mxu0 %v1281
    %2698 = vmatpush1.msra.mxu0 %v1280
    %2699 = vmatprep.subr.mxu0 %v1529
    %2700 = vmatpush2.msra.mxu0 %v1528
    %2701 = vmatprep.subr.mxu0 %v1521
    %2702 = vmatpush2.msra.mxu0 %v1520
    %2703 = vmatprep.subr.mxu0 %v1513
    %2704 = vmatpush2.msra.mxu0 %v1512
    %2705 = vmatprep.subr.mxu0 %v1505
    %2706 = vmatpush2.msra.mxu0 %v1504
    %2707 = vmatprep.subr.mxu0 %v1497
    %2708 = vmatpush2.msra.mxu0 %v1496
    %2709 = vmatprep.subr.mxu0 %v1489
    %2710 = vmatpush2.msra.mxu0 %v1488
    %2711 = vmatprep.subr.mxu0 %v1481
    %2712 = vmatpush2.msra.mxu0 %v1480
    %2713 = vmatprep.subr.mxu0 %v1473
    %2714 = vmatpush2.msra.mxu0 %v1472
    %2715 = vmatprep.subr.mxu0 %v1465
    %2716 = vmatpush2.msra.mxu0 %v1464
    %2717 = vmatprep.subr.mxu0 %v1457
    %2718 = vmatpush2.msra.mxu0 %v1456
    %2719 = vmatprep.subr.mxu0 %v1449
    %2720 = vmatpush2.msra.mxu0 %v1448
    %2721 = vmatprep.subr.mxu0 %v1441
    %2722 = vmatpush2.msra.mxu0 %v1440
    %2723 = vmatprep.subr.mxu0 %v1433
    %2724 = vmatpush2.msra.mxu0 %v1432
    %2725 = vmatprep.subr.mxu0 %v1425
    %2726 = vmatpush2.msra.mxu0 %v1424
    %2727 = vmatprep.subr.mxu0 %v1417
    %2728 = vmatpush2.msra.mxu0 %v1416
    %2729 = vmatprep.subr.mxu0 %v1409
    %2730 = vmatpush2.msra.mxu0 %v1408
    %2731 = vmatprep.mubr.f32.mxu0 %v505
    %2732 = vmatmul.mubr.f32.gmra.mxu0 %v504
    %v2733 = vpop.f32.mrf.mxu0
    %v2734 = vadd.f32 %v2663, %v2733
    %v2735 = vpop.f32.mrf.mxu0
    %v2736 = vadd.f32 %v2665, %v2735
    %2737 = vdwg.mxu0
    %vm2738 = vcmp.gt.f32.partialorder %v1882, 0.0
    %vm2739 = vcmp.gt.f32.partialorder %v1884, 0.0
    %vm2740 = vcmp.gt.f32.partialorder %v2166, 0.0
    %vm2741 = vcmp.gt.f32.partialorder %v2168, 0.0
    %vm2742 = vcmp.gt.f32.partialorder %v2450, 0.0
    %vm2743 = vcmp.gt.f32.partialorder %v2452, 0.0
    %vm2744 = vcmp.gt.f32.partialorder %v2734, 0.0
    %vm2745 = vcmp.gt.f32.partialorder %v2736, 0.0
    %v2746 = vmul.f32 %v1882, 0.2
    %v2747 = vmul.f32 %v1884, 0.2
    %v2748 = vmul.f32 %v2166, 0.2
    %v2749 = vmul.f32 %v2168, 0.2
    %v2750 = vmul.f32 %v2450, 0.2
    %v2751 = vmul.f32 %v2452, 0.2
    %v2752 = vmul.f32 %v2734, 0.2
    %v2753 = vmul.f32 %v2736, 0.2
    %v2754 = vsel %vm2738, %v1882, %v2746
    %v2755 = vsel %vm2739, %v1884, %v2747
    %v2756 = vsel %vm2740, %v2166, %v2748
    %v2757 = vsel %vm2741, %v2168, %v2749
    %v2758 = vsel %vm2742, %v2450, %v2750
    %v2759 = vsel %vm2743, %v2452, %v2751
    %v2760 = vsel %vm2744, %v2734, %v2752
    %v2761 = vsel %vm2745, %v2736, %v2753
    %v2762 = vld [vmem:[%s3] sm:$0xff]
    %v2763 = vld [vmem:[%s3 + $0x8] sm:$0xff]
    %v2764 = vld [vmem:[%s3 + $0x10] sm:$0xff]
    %v2765 = vld [vmem:[%s3 + $0x18] sm:$0xff]
    %v2766 = vld [vmem:[%s3 + $0x20] sm:$0xff]
    %v2767 = vld [vmem:[%s3 + $0x28] sm:$0xff]
    %v2768 = vld [vmem:[%s3 + $0x30] sm:$0xff]
    %v2769 = vld [vmem:[%s3 + $0x38] sm:$0xff]
    %v2770 = vld [vmem:[%s3 + $0x40] sm:$0xff]
    %v2771 = vld [vmem:[%s3 + $0x48] sm:$0xff]
    %v2772 = vld [vmem:[%s3 + $0x50] sm:$0xff]
    %v2773 = vld [vmem:[%s3 + $0x58] sm:$0xff]
    %v2774 = vld [vmem:[%s3 + $0x60] sm:$0xff]
    %v2775 = vld [vmem:[%s3 + $0x68] sm:$0xff]
    %v2776 = vld [vmem:[%s3 + $0x70] sm:$0xff]
    %v2777 = vld [vmem:[%s3 + $0x78] sm:$0xff]
    %v2778 = vld [vmem:[%s3 + $0x80] sm:$0xff]
    %v2779 = vld [vmem:[%s3 + $0x88] sm:$0xff]
    %v2780 = vld [vmem:[%s3 + $0x90] sm:$0xff]
    %v2781 = vld [vmem:[%s3 + $0x98] sm:$0xff]
    %v2782 = vld [vmem:[%s3 + $0xa0] sm:$0xff]
    %v2783 = vld [vmem:[%s3 + $0xa8] sm:$0xff]
    %v2784 = vld [vmem:[%s3 + $0xb0] sm:$0xff]
    %v2785 = vld [vmem:[%s3 + $0xb8] sm:$0xff]
    %v2786 = vld [vmem:[%s3 + $0xc0] sm:$0xff]
    %v2787 = vld [vmem:[%s3 + $0xc8] sm:$0xff]
    %v2788 = vld [vmem:[%s3 + $0xd0] sm:$0xff]
    %v2789 = vld [vmem:[%s3 + $0xd8] sm:$0xff]
    %v2790 = vld [vmem:[%s3 + $0xe0] sm:$0xff]
    %v2791 = vld [vmem:[%s3 + $0xe8] sm:$0xff]
    %v2792 = vld [vmem:[%s3 + $0xf0] sm:$0xff]
    %v2793 = vld [vmem:[%s3 + $0xf8] sm:$0xff]
    %v2794 = vld [vmem:[%s3 + $0x100] sm:$0xff]
    %v2795 = vld [vmem:[%s3 + $0x108] sm:$0xff]
    %v2796 = vld [vmem:[%s3 + $0x110] sm:$0xff]
    %v2797 = vld [vmem:[%s3 + $0x118] sm:$0xff]
    %v2798 = vld [vmem:[%s3 + $0x120] sm:$0xff]
    %v2799 = vld [vmem:[%s3 + $0x128] sm:$0xff]
    %v2800 = vld [vmem:[%s3 + $0x130] sm:$0xff]
    %v2801 = vld [vmem:[%s3 + $0x138] sm:$0xff]
    %v2802 = vld [vmem:[%s3 + $0x140] sm:$0xff]
    %v2803 = vld [vmem:[%s3 + $0x148] sm:$0xff]
    %v2804 = vld [vmem:[%s3 + $0x150] sm:$0xff]
    %v2805 = vld [vmem:[%s3 + $0x158] sm:$0xff]
    %v2806 = vld [vmem:[%s3 + $0x160] sm:$0xff]
    %v2807 = vld [vmem:[%s3 + $0x168] sm:$0xff]
    %v2808 = vld [vmem:[%s3 + $0x170] sm:$0xff]
    %v2809 = vld [vmem:[%s3 + $0x178] sm:$0xff]
    %v2810 = vld [vmem:[%s3 + $0x180] sm:$0xff]
    %v2811 = vld [vmem:[%s3 + $0x188] sm:$0xff]
    %v2812 = vld [vmem:[%s3 + $0x190] sm:$0xff]
    %v2813 = vld [vmem:[%s3 + $0x198] sm:$0xff]
    %v2814 = vld [vmem:[%s3 + $0x1a0] sm:$0xff]
    %v2815 = vld [vmem:[%s3 + $0x1a8] sm:$0xff]
    %v2816 = vld [vmem:[%s3 + $0x1b0] sm:$0xff]
    %v2817 = vld [vmem:[%s3 + $0x1b8] sm:$0xff]
    %v2818 = vld [vmem:[%s3 + $0x1c0] sm:$0xff]
    %v2819 = vld [vmem:[%s3 + $0x1c8] sm:$0xff]
    %v2820 = vld [vmem:[%s3 + $0x1d0] sm:$0xff]
    %v2821 = vld [vmem:[%s3 + $0x1d8] sm:$0xff]
    %v2822 = vld [vmem:[%s3 + $0x1e0] sm:$0xff]
    %v2823 = vld [vmem:[%s3 + $0x1e8] sm:$0xff]
    %v2824 = vld [vmem:[%s3 + $0x1f0] sm:$0xff]
    %v2825 = vld [vmem:[%s3 + $0x1f8] sm:$0xff]
    %v2826 = vld [vmem:[%s3 + $0x200] sm:$0xff]
    %v2827 = vld [vmem:[%s3 + $0x208] sm:$0xff]
    %v2828 = vld [vmem:[%s3 + $0x210] sm:$0xff]
    %v2829 = vld [vmem:[%s3 + $0x218] sm:$0xff]
    %v2830 = vld [vmem:[%s3 + $0x220] sm:$0xff]
    %v2831 = vld [vmem:[%s3 + $0x228] sm:$0xff]
    %v2832 = vld [vmem:[%s3 + $0x230] sm:$0xff]
    %v2833 = vld [vmem:[%s3 + $0x238] sm:$0xff]
    %v2834 = vld [vmem:[%s3 + $0x240] sm:$0xff]
    %v2835 = vld [vmem:[%s3 + $0x248] sm:$0xff]
    %v2836 = vld [vmem:[%s3 + $0x250] sm:$0xff]
    %v2837 = vld [vmem:[%s3 + $0x258] sm:$0xff]
    %v2838 = vld [vmem:[%s3 + $0x260] sm:$0xff]
    %v2839 = vld [vmem:[%s3 + $0x268] sm:$0xff]
    %v2840 = vld [vmem:[%s3 + $0x270] sm:$0xff]
    %v2841 = vld [vmem:[%s3 + $0x278] sm:$0xff]
    %v2842 = vld [vmem:[%s3 + $0x280] sm:$0xff]
    %v2843 = vld [vmem:[%s3 + $0x288] sm:$0xff]
    %v2844 = vld [vmem:[%s3 + $0x290] sm:$0xff]
    %v2845 = vld [vmem:[%s3 + $0x298] sm:$0xff]
    %v2846 = vld [vmem:[%s3 + $0x2a0] sm:$0xff]
    %v2847 = vld [vmem:[%s3 + $0x2a8] sm:$0xff]
    %v2848 = vld [vmem:[%s3 + $0x2b0] sm:$0xff]
    %v2849 = vld [vmem:[%s3 + $0x2b8] sm:$0xff]
    %v2850 = vld [vmem:[%s3 + $0x2c0] sm:$0xff]
    %v2851 = vld [vmem:[%s3 + $0x2c8] sm:$0xff]
    %v2852 = vld [vmem:[%s3 + $0x2d0] sm:$0xff]
    %v2853 = vld [vmem:[%s3 + $0x2d8] sm:$0xff]
    %v2854 = vld [vmem:[%s3 + $0x2e0] sm:$0xff]
    %v2855 = vld [vmem:[%s3 + $0x2e8] sm:$0xff]
    %v2856 = vld [vmem:[%s3 + $0x2f0] sm:$0xff]
    %v2857 = vld [vmem:[%s3 + $0x2f8] sm:$0xff]
    %v2858 = vld [vmem:[%s3 + $0x300] sm:$0xff]
    %v2859 = vld [vmem:[%s3 + $0x308] sm:$0xff]
    %v2860 = vld [vmem:[%s3 + $0x310] sm:$0xff]
    %v2861 = vld [vmem:[%s3 + $0x318] sm:$0xff]
    %v2862 = vld [vmem:[%s3 + $0x320] sm:$0xff]
    %v2863 = vld [vmem:[%s3 + $0x328] sm:$0xff]
    %v2864 = vld [vmem:[%s3 + $0x330] sm:$0xff]
    %v2865 = vld [vmem:[%s3 + $0x338] sm:$0xff]
    %v2866 = vld [vmem:[%s3 + $0x340] sm:$0xff]
    %v2867 = vld [vmem:[%s3 + $0x348] sm:$0xff]
    %v2868 = vld [vmem:[%s3 + $0x350] sm:$0xff]
    %v2869 = vld [vmem:[%s3 + $0x358] sm:$0xff]
    %v2870 = vld [vmem:[%s3 + $0x360] sm:$0xff]
    %v2871 = vld [vmem:[%s3 + $0x368] sm:$0xff]
    %v2872 = vld [vmem:[%s3 + $0x370] sm:$0xff]
    %v2873 = vld [vmem:[%s3 + $0x378] sm:$0xff]
    %v2874 = vld [vmem:[%s3 + $0x380] sm:$0xff]
    %v2875 = vld [vmem:[%s3 + $0x388] sm:$0xff]
    %v2876 = vld [vmem:[%s3 + $0x390] sm:$0xff]
    %v2877 = vld [vmem:[%s3 + $0x398] sm:$0xff]
    %v2878 = vld [vmem:[%s3 + $0x3a0] sm:$0xff]
    %v2879 = vld [vmem:[%s3 + $0x3a8] sm:$0xff]
    %v2880 = vld [vmem:[%s3 + $0x3b0] sm:$0xff]
    %v2881 = vld [vmem:[%s3 + $0x3b8] sm:$0xff]
    %v2882 = vld [vmem:[%s3 + $0x3c0] sm:$0xff]
    %v2883 = vld [vmem:[%s3 + $0x3c8] sm:$0xff]
    %v2884 = vld [vmem:[%s3 + $0x3d0] sm:$0xff]
    %v2885 = vld [vmem:[%s3 + $0x3d8] sm:$0xff]
    %v2886 = vld [vmem:[%s3 + $0x3e0] sm:$0xff]
    %v2887 = vld [vmem:[%s3 + $0x3e8] sm:$0xff]
    %v2888 = vld [vmem:[%s3 + $0x3f0] sm:$0xff]
    %v2889 = vld [vmem:[%s3 + $0x3f8] sm:$0xff]
    %v2890 = vlaneseq
    %v2891 = vshrl.u32 %v2890, 7
    %v2892 = vsub.s32 2, %v2891
    %v2893 = vrot.slane %v73, %v2892
    %2894 = vmatprep.subr.mxu0 0.0
    %2895 = vmatpush1.msra.mxu0 %v2777
    %2896 = vmatprep.subr.mxu0 0.0
    %2897 = vmatpush1.msra.mxu0 %v2776
    %2898 = vmatprep.subr.mxu0 0.0
    %2899 = vmatpush1.msra.mxu0 %v2775
    %2900 = vmatprep.subr.mxu0 0.0
    %2901 = vmatpush1.msra.mxu0 %v2774
    %2902 = vmatprep.subr.mxu0 0.0
    %2903 = vmatpush1.msra.mxu0 %v2773
    %2904 = vmatprep.subr.mxu0 0.0
    %2905 = vmatpush1.msra.mxu0 %v2772
    %2906 = vmatprep.subr.mxu0 0.0
    %2907 = vmatpush1.msra.mxu0 %v2771
    %2908 = vmatprep.subr.mxu0 0.0
    %2909 = vmatpush1.msra.mxu0 %v2770
    %2910 = vmatprep.subr.mxu0 0.0
    %2911 = vmatpush1.msra.mxu0 %v2769
    %2912 = vmatprep.subr.mxu0 0.0
    %2913 = vmatpush1.msra.mxu0 %v2768
    %2914 = vmatprep.subr.mxu0 0.0
    %2915 = vmatpush1.msra.mxu0 %v2767
    %2916 = vmatprep.subr.mxu0 0.0
    %2917 = vmatpush1.msra.mxu0 %v2766
    %2918 = vmatprep.subr.mxu0 0.0
    %2919 = vmatpush1.msra.mxu0 %v2765
    %2920 = vmatprep.subr.mxu0 0.0
    %2921 = vmatpush1.msra.mxu0 %v2764
    %2922 = vmatprep.subr.mxu0 0.0
    %2923 = vmatpush1.msra.mxu0 %v2763
    %2924 = vmatprep.subr.mxu0 0.0
    %2925 = vmatpush1.msra.mxu0 %v2762
    %2926 = vmatprep.subr.mxu0 0.0
    %2927 = vmatpush2.msra.mxu0 %v2793
    %2928 = vmatprep.subr.mxu0 0.0
    %2929 = vmatpush2.msra.mxu0 %v2792
    %2930 = vmatprep.subr.mxu0 0.0
    %2931 = vmatpush2.msra.mxu0 %v2791
    %2932 = vmatprep.subr.mxu0 0.0
    %2933 = vmatpush2.msra.mxu0 %v2790
    %2934 = vmatprep.subr.mxu0 0.0
    %2935 = vmatpush2.msra.mxu0 %v2789
    %2936 = vmatprep.subr.mxu0 0.0
    %2937 = vmatpush2.msra.mxu0 %v2788
    %2938 = vmatprep.subr.mxu0 0.0
    %2939 = vmatpush2.msra.mxu0 %v2787
    %2940 = vmatprep.subr.mxu0 0.0
    %2941 = vmatpush2.msra.mxu0 %v2786
    %2942 = vmatprep.subr.mxu0 0.0
    %2943 = vmatpush2.msra.mxu0 %v2785
    %2944 = vmatprep.subr.mxu0 0.0
    %2945 = vmatpush2.msra.mxu0 %v2784
    %2946 = vmatprep.subr.mxu0 0.0
    %2947 = vmatpush2.msra.mxu0 %v2783
    %2948 = vmatprep.subr.mxu0 0.0
    %2949 = vmatpush2.msra.mxu0 %v2782
    %2950 = vmatprep.subr.mxu0 0.0
    %2951 = vmatpush2.msra.mxu0 %v2781
    %2952 = vmatprep.subr.mxu0 0.0
    %2953 = vmatpush2.msra.mxu0 %v2780
    %2954 = vmatprep.subr.mxu0 0.0
    %2955 = vmatpush2.msra.mxu0 %v2779
    %2956 = vmatprep.subr.mxu0 0.0
    %2957 = vmatpush2.msra.mxu0 %v2778
    %2958 = vmatprep.mubr.f32.mxu0 %v2755
    %2959 = vmatmul.mubr.f32.gmra.mxu0 %v2754
    %v2960 = vpop.f32.mrf.mxu0
    %v2961 = vadd.f32 %v2893, %v2960
    %v2962 = vpop.f32.mrf.mxu0
    %2963 = vdwg.mxu0
    %2964 = vmatprep.subr.mxu0 0.0
    %2965 = vmatpush1.msra.mxu0 %v2809
    %2966 = vmatprep.subr.mxu0 0.0
    %2967 = vmatpush1.msra.mxu0 %v2808
    %2968 = vmatprep.subr.mxu0 0.0
    %2969 = vmatpush1.msra.mxu0 %v2807
    %2970 = vmatprep.subr.mxu0 0.0
    %2971 = vmatpush1.msra.mxu0 %v2806
    %2972 = vmatprep.subr.mxu0 0.0
    %2973 = vmatpush1.msra.mxu0 %v2805
    %2974 = vmatprep.subr.mxu0 0.0
    %2975 = vmatpush1.msra.mxu0 %v2804
    %2976 = vmatprep.subr.mxu0 0.0
    %2977 = vmatpush1.msra.mxu0 %v2803
    %2978 = vmatprep.subr.mxu0 0.0
    %2979 = vmatpush1.msra.mxu0 %v2802
    %2980 = vmatprep.subr.mxu0 0.0
    %2981 = vmatpush1.msra.mxu0 %v2801
    %2982 = vmatprep.subr.mxu0 0.0
    %2983 = vmatpush1.msra.mxu0 %v2800
    %2984 = vmatprep.subr.mxu0 0.0
    %2985 = vmatpush1.msra.mxu0 %v2799
    %2986 = vmatprep.subr.mxu0 0.0
    %2987 = vmatpush1.msra.mxu0 %v2798
    %2988 = vmatprep.subr.mxu0 0.0
    %2989 = vmatpush1.msra.mxu0 %v2797
    %2990 = vmatprep.subr.mxu0 0.0
    %2991 = vmatpush1.msra.mxu0 %v2796
    %2992 = vmatprep.subr.mxu0 0.0
    %2993 = vmatpush1.msra.mxu0 %v2795
    %2994 = vmatprep.subr.mxu0 0.0
    %2995 = vmatpush1.msra.mxu0 %v2794
    %2996 = vmatprep.subr.mxu0 0.0
    %2997 = vmatpush2.msra.mxu0 %v2825
    %2998 = vmatprep.subr.mxu0 0.0
    %2999 = vmatpush2.msra.mxu0 %v2824
    %3000 = vmatprep.subr.mxu0 0.0
    %3001 = vmatpush2.msra.mxu0 %v2823
    %3002 = vmatprep.subr.mxu0 0.0
    %3003 = vmatpush2.msra.mxu0 %v2822
    %3004 = vmatprep.subr.mxu0 0.0
    %3005 = vmatpush2.msra.mxu0 %v2821
    %3006 = vmatprep.subr.mxu0 0.0
    %3007 = vmatpush2.msra.mxu0 %v2820
    %3008 = vmatprep.subr.mxu0 0.0
    %3009 = vmatpush2.msra.mxu0 %v2819
    %3010 = vmatprep.subr.mxu0 0.0
    %3011 = vmatpush2.msra.mxu0 %v2818
    %3012 = vmatprep.subr.mxu0 0.0
    %3013 = vmatpush2.msra.mxu0 %v2817
    %3014 = vmatprep.subr.mxu0 0.0
    %3015 = vmatpush2.msra.mxu0 %v2816
    %3016 = vmatprep.subr.mxu0 0.0
    %3017 = vmatpush2.msra.mxu0 %v2815
    %3018 = vmatprep.subr.mxu0 0.0
    %3019 = vmatpush2.msra.mxu0 %v2814
    %3020 = vmatprep.subr.mxu0 0.0
    %3021 = vmatpush2.msra.mxu0 %v2813
    %3022 = vmatprep.subr.mxu0 0.0
    %3023 = vmatpush2.msra.mxu0 %v2812
    %3024 = vmatprep.subr.mxu0 0.0
    %3025 = vmatpush2.msra.mxu0 %v2811
    %3026 = vmatprep.subr.mxu0 0.0
    %3027 = vmatpush2.msra.mxu0 %v2810
    %3028 = vmatprep.mubr.f32.mxu0 %v2757
    %3029 = vmatmul.mubr.f32.gmra.mxu0 %v2756
    %v3030 = vpop.f32.mrf.mxu0
    %v3031 = vadd.f32 %v2961, %v3030
    %v3032 = vpop.f32.mrf.mxu0
    %3033 = vdwg.mxu0
    %3034 = vmatprep.subr.mxu0 0.0
    %3035 = vmatpush1.msra.mxu0 %v2841
    %3036 = vmatprep.subr.mxu0 0.0
    %3037 = vmatpush1.msra.mxu0 %v2840
    %3038 = vmatprep.subr.mxu0 0.0
    %3039 = vmatpush1.msra.mxu0 %v2839
    %3040 = vmatprep.subr.mxu0 0.0
    %3041 = vmatpush1.msra.mxu0 %v2838
    %3042 = vmatprep.subr.mxu0 0.0
    %3043 = vmatpush1.msra.mxu0 %v2837
    %3044 = vmatprep.subr.mxu0 0.0
    %3045 = vmatpush1.msra.mxu0 %v2836
    %3046 = vmatprep.subr.mxu0 0.0
    %3047 = vmatpush1.msra.mxu0 %v2835
    %3048 = vmatprep.subr.mxu0 0.0
    %3049 = vmatpush1.msra.mxu0 %v2834
    %3050 = vmatprep.subr.mxu0 0.0
    %3051 = vmatpush1.msra.mxu0 %v2833
    %3052 = vmatprep.subr.mxu0 0.0
    %3053 = vmatpush1.msra.mxu0 %v2832
    %3054 = vmatprep.subr.mxu0 0.0
    %3055 = vmatpush1.msra.mxu0 %v2831
    %3056 = vmatprep.subr.mxu0 0.0
    %3057 = vmatpush1.msra.mxu0 %v2830
    %3058 = vmatprep.subr.mxu0 0.0
    %3059 = vmatpush1.msra.mxu0 %v2829
    %3060 = vmatprep.subr.mxu0 0.0
    %3061 = vmatpush1.msra.mxu0 %v2828
    %3062 = vmatprep.subr.mxu0 0.0
    %3063 = vmatpush1.msra.mxu0 %v2827
    %3064 = vmatprep.subr.mxu0 0.0
    %3065 = vmatpush1.msra.mxu0 %v2826
    %3066 = vmatprep.subr.mxu0 0.0
    %3067 = vmatpush2.msra.mxu0 %v2857
    %3068 = vmatprep.subr.mxu0 0.0
    %3069 = vmatpush2.msra.mxu0 %v2856
    %3070 = vmatprep.subr.mxu0 0.0
    %3071 = vmatpush2.msra.mxu0 %v2855
    %3072 = vmatprep.subr.mxu0 0.0
    %3073 = vmatpush2.msra.mxu0 %v2854
    %3074 = vmatprep.subr.mxu0 0.0
    %3075 = vmatpush2.msra.mxu0 %v2853
    %3076 = vmatprep.subr.mxu0 0.0
    %3077 = vmatpush2.msra.mxu0 %v2852
    %3078 = vmatprep.subr.mxu0 0.0
    %3079 = vmatpush2.msra.mxu0 %v2851
    %3080 = vmatprep.subr.mxu0 0.0
    %3081 = vmatpush2.msra.mxu0 %v2850
    %3082 = vmatprep.subr.mxu0 0.0
    %3083 = vmatpush2.msra.mxu0 %v2849
    %3084 = vmatprep.subr.mxu0 0.0
    %3085 = vmatpush2.msra.mxu0 %v2848
    %3086 = vmatprep.subr.mxu0 0.0
    %3087 = vmatpush2.msra.mxu0 %v2847
    %3088 = vmatprep.subr.mxu0 0.0
    %3089 = vmatpush2.msra.mxu0 %v2846
    %3090 = vmatprep.subr.mxu0 0.0
    %3091 = vmatpush2.msra.mxu0 %v2845
    %3092 = vmatprep.subr.mxu0 0.0
    %3093 = vmatpush2.msra.mxu0 %v2844
    %3094 = vmatprep.subr.mxu0 0.0
    %3095 = vmatpush2.msra.mxu0 %v2843
    %3096 = vmatprep.subr.mxu0 0.0
    %3097 = vmatpush2.msra.mxu0 %v2842
    %3098 = vmatprep.mubr.f32.mxu0 %v2759
    %3099 = vmatmul.mubr.f32.gmra.mxu0 %v2758
    %v3100 = vpop.f32.mrf.mxu0
    %v3101 = vadd.f32 %v3031, %v3100
    %v3102 = vpop.f32.mrf.mxu0
    %3103 = vdwg.mxu0
    %3104 = vmatprep.subr.mxu0 0.0
    %3105 = vmatpush1.msra.mxu0 %v2873
    %3106 = vmatprep.subr.mxu0 0.0
    %3107 = vmatpush1.msra.mxu0 %v2872
    %3108 = vmatprep.subr.mxu0 0.0
    %3109 = vmatpush1.msra.mxu0 %v2871
    %3110 = vmatprep.subr.mxu0 0.0
    %3111 = vmatpush1.msra.mxu0 %v2870
    %3112 = vmatprep.subr.mxu0 0.0
    %3113 = vmatpush1.msra.mxu0 %v2869
    %3114 = vmatprep.subr.mxu0 0.0
    %3115 = vmatpush1.msra.mxu0 %v2868
    %3116 = vmatprep.subr.mxu0 0.0
    %3117 = vmatpush1.msra.mxu0 %v2867
    %3118 = vmatprep.subr.mxu0 0.0
    %3119 = vmatpush1.msra.mxu0 %v2866
    %3120 = vmatprep.subr.mxu0 0.0
    %3121 = vmatpush1.msra.mxu0 %v2865
    %3122 = vmatprep.subr.mxu0 0.0
    %3123 = vmatpush1.msra.mxu0 %v2864
    %3124 = vmatprep.subr.mxu0 0.0
    %3125 = vmatpush1.msra.mxu0 %v2863
    %3126 = vmatprep.subr.mxu0 0.0
    %3127 = vmatpush1.msra.mxu0 %v2862
    %3128 = vmatprep.subr.mxu0 0.0
    %3129 = vmatpush1.msra.mxu0 %v2861
    %3130 = vmatprep.subr.mxu0 0.0
    %3131 = vmatpush1.msra.mxu0 %v2860
    %3132 = vmatprep.subr.mxu0 0.0
    %3133 = vmatpush1.msra.mxu0 %v2859
    %3134 = vmatprep.subr.mxu0 0.0
    %3135 = vmatpush1.msra.mxu0 %v2858
    %3136 = vmatprep.subr.mxu0 0.0
    %3137 = vmatpush2.msra.mxu0 %v2889
    %3138 = vmatprep.subr.mxu0 0.0
    %3139 = vmatpush2.msra.mxu0 %v2888
    %3140 = vmatprep.subr.mxu0 0.0
    %3141 = vmatpush2.msra.mxu0 %v2887
    %3142 = vmatprep.subr.mxu0 0.0
    %3143 = vmatpush2.msra.mxu0 %v2886
    %3144 = vmatprep.subr.mxu0 0.0
    %3145 = vmatpush2.msra.mxu0 %v2885
    %3146 = vmatprep.subr.mxu0 0.0
    %3147 = vmatpush2.msra.mxu0 %v2884
    %3148 = vmatprep.subr.mxu0 0.0
    %3149 = vmatpush2.msra.mxu0 %v2883
    %3150 = vmatprep.subr.mxu0 0.0
    %3151 = vmatpush2.msra.mxu0 %v2882
    %3152 = vmatprep.subr.mxu0 0.0
    %3153 = vmatpush2.msra.mxu0 %v2881
    %3154 = vmatprep.subr.mxu0 0.0
    %3155 = vmatpush2.msra.mxu0 %v2880
    %3156 = vmatprep.subr.mxu0 0.0
    %3157 = vmatpush2.msra.mxu0 %v2879
    %3158 = vmatprep.subr.mxu0 0.0
    %3159 = vmatpush2.msra.mxu0 %v2878
    %3160 = vmatprep.subr.mxu0 0.0
    %3161 = vmatpush2.msra.mxu0 %v2877
    %3162 = vmatprep.subr.mxu0 0.0
    %3163 = vmatpush2.msra.mxu0 %v2876
    %3164 = vmatprep.subr.mxu0 0.0
    %3165 = vmatpush2.msra.mxu0 %v2875
    %3166 = vmatprep.subr.mxu0 0.0
    %3167 = vmatpush2.msra.mxu0 %v2874
    %3168 = vmatprep.mubr.f32.mxu0 %v2761
    %3169 = vmatmul.mubr.f32.gmra.mxu0 %v2760
    %v3170 = vpop.f32.mrf.mxu0
    %v3171 = vadd.f32 %v3101, %v3170
    %v3172 = vpop.f32.mrf.mxu0
    %3173 = vdwg.mxu0
    %vm3174 = vcmask 386048
    %3175 = vst.msk [vmem:[#allocation10] sm:$0x3] %vm3174, %v3171
    // Predicated region
    $region38: #{tpu_custom_call.1} parent=1 // pred_check
      _
    $region39: #{tpu_custom_call.1} parent=1 // pred_check_branch
      %3177 = sbr.rel (0) target = $region41
    $region40: #{tpu_custom_call.1} parent=1 // pred_region
      %s3179 = ssub.s32 32, 32
      %3180 = vsyncadd [#allocation4], %s3179
      %s3182 = sshll.u32 [#allocation10], 4
      %s3183 = int_to_ptr.vmem [resolvable:$true] %s3182
      %3185 = dma.vmem_to_hbm [thread:$0]  %s3183, 32, %s5, [#allocation4]
    $region41: #{tpu_custom_call.1} parent=1 // pred_fallthru
      _
    // Predicated region
    $region42: #{tpu_custom_call.1} parent=1 // pred_check
      _
    $region43: #{tpu_custom_call.1} parent=1 // pred_check_branch
      %3187 = sbr.rel (0) target = $region45
    $region44: #{tpu_custom_call.1} parent=1 // pred_region
      %3188 = dma.done [#allocation4], 32
    $region45: #{tpu_custom_call.1} parent=1 // pred_fallthru
      _
    %3189 = vsyncpa [#allocation3], 1
    %3190 = vsyncpa [#allocation6], 1
    %3191 = vsyncpa [#allocation9], 1
    %3192 = vsyncpa [#allocation4], 1

</llo_original>
